<compile_context>
chip_gen: v7x
topology: tpu7x:2x2x1
jax: 0.10.0
libtpu: 0.0.40
codegen_flags: <defaults>
</compile_context>

<pallas_src>
import jax
import jax.numpy as jnp
from jax.experimental import pallas as pl
from jax.experimental.pallas import tpu as pltpu

INPUT_SIZE = 28 * 28          # 784 (divisible by 8 -> fine as a sublane dim for w1)
HIDDEN1 = 1024
HIDDEN2 = 512
OUTPUT_SIZE = 10

OUT_PAD = 128                 # lane-dense output slab (sliced back to 10 in the wrapper)

DEFAULT_BATCH_TILE = 512      # rows per grid step; ~15 MB live VMEM incl. double buffers


def _round_up(n, m):
    return ((n + m - 1) // m) * m


def _mlp_kernel(x_ref, w1_ref, b1_ref, w2_ref, b2_ref, w3_ref, b3_ref, o_ref):
    # fc1 + ReLU: cast activations to bf16 in VMEM (fused; no wrapper pad/cast),
    # f32 accumulation, f32 bias add, bf16 hand-off to the next layer.
    xb = x_ref[...].astype(jnp.bfloat16)
    z1 = jnp.dot(xb, w1_ref[...], preferred_element_type=jnp.float32)
    z1 = jnp.maximum(z1 + b1_ref[...], 0.0).astype(jnp.bfloat16)
    # fc2 + ReLU
    z2 = jnp.dot(z1, w2_ref[...], preferred_element_type=jnp.float32)
    z2 = jnp.maximum(z2 + b2_ref[...], 0.0).astype(jnp.bfloat16)
    # fc3 (logits, no activation); output slab is lane-padded to OUT_PAD
    y = jnp.dot(z2, w3_ref[...], preferred_element_type=jnp.float32)
    o_ref[...] = (y + b3_ref[...]).astype(o_ref.dtype)


def prepare_params(w1, b1, w2, b2, w3, b3):
    """One-time weight prep (pad + bf16 cast). Call once, reuse across forwards."""
    w1_b = w1.astype(jnp.bfloat16)                                    # [784, 1024]
    w2_b = w2.astype(jnp.bfloat16)                                    # [1024, 512]
    w3_b = jnp.pad(w3, ((0, 0), (0, OUT_PAD - OUTPUT_SIZE))).astype(jnp.bfloat16)
    b3_p = jnp.pad(b3, ((0, 0), (0, OUT_PAD - OUTPUT_SIZE)))          # stays f32
    return (w1_b, b1, w2_b, b2, w3_b, b3_p)


def net_forward(x, prepared, *, batch_tile=DEFAULT_BATCH_TILE):
    """x: [B, 784] f32.  prepared: output of prepare_params.  Returns [B, 10] f32."""
    w1_b, b1, w2_b, b2, w3_b, b3_p = prepared
    B, din = x.shape
    assert din == INPUT_SIZE

    # --- adaptive batch tiling: keep tiles <= batch_tile while minimizing padded rows ---
    if B <= batch_tile:
        num_tiles = 1
        tb = _round_up(B, 8)
    else:
        num_tiles = pl.cdiv(B, batch_tile)
        tb = _round_up(pl.cdiv(B, num_tiles), 8)
    b_pad = num_tiles * tb
    if b_pad != B:
        x = jnp.pad(x, ((0, b_pad - B), (0, 0)))

    # Weights/biases use a constant index_map -> VMEM-resident across grid steps.
    resident = lambda shape: pl.BlockSpec(shape, lambda i: (0, 0))

    out = pl.pallas_call(
        _mlp_kernel,
        out_shape=jax.ShapeDtypeStruct((b_pad, OUT_PAD), jnp.float32),
        grid=(num_tiles,),
        in_specs=[
            pl.BlockSpec((tb, INPUT_SIZE), lambda i: (i, 0)),  # x tile marches over batch
            resident((INPUT_SIZE, HIDDEN1)), resident((1, HIDDEN1)),
            resident((HIDDEN1, HIDDEN2)),    resident((1, HIDDEN2)),
            resident((HIDDEN2, OUT_PAD)),    resident((1, OUT_PAD)),
        ],
        out_specs=pl.BlockSpec((tb, OUT_PAD), lambda i: (i, 0)),
        compiler_params=pltpu.CompilerParams(
            # batch tiles are independent -> megacore sharding on v7x, pipelined everywhere
            dimension_semantics=("parallel",),
            # large tiles need more than v5e's 16 MiB scoped default; 32 MiB fits all gens
            vmem_limit_bytes=32 * 1024 * 1024,
        ),
    )(x, w1_b, b1, w2_b, b2, w3_b, b3_p)

    return out[:B, :OUTPUT_SIZE]


def init_params(key):
    # Deterministic synthetic init (roughly matching nn.Linear's uniform fan-in init).
    ks = jax.random.split(key, 6)

    def lin(kw, kb, fan_in, fan_out):
        bound = 1.0 / jnp.sqrt(fan_in)
        w = jax.random.uniform(kw, (fan_in, fan_out), jnp.float32, -bound, bound)
        b = jax.random.uniform(kb, (1, fan_out), jnp.float32, -bound, bound)
        return w, b

    w1, b1 = lin(ks[0], ks[1], INPUT_SIZE, HIDDEN1)
    w2, b2 = lin(ks[2], ks[3], HIDDEN1, HIDDEN2)
    w3, b3 = lin(ks[4], ks[5], HIDDEN2, OUTPUT_SIZE)
    return w1, b1, w2, b2, w3, b3


def reference_forward(x, w1, b1, w2, b2, w3, b3):
    # Mirrors the kernel numerics: bf16 matmul inputs, f32 accumulation, f32 bias add.
    bf, f32 = jnp.bfloat16, jnp.float32
    z1 = jnp.dot(x.astype(bf), w1.astype(bf), preferred_element_type=f32) + b1
    z1 = jnp.maximum(z1, 0.0).astype(bf)
    z2 = jnp.dot(z1, w2.astype(bf), preferred_element_type=f32) + b2
    z2 = jnp.maximum(z2, 0.0).astype(bf)
    return jnp.dot(z2, w3.astype(bf), preferred_element_type=f32) + b3


if __name__ == "__main__":
    key = jax.random.PRNGKey(0)
    k_x, k_x2, k_p = jax.random.split(key, 3)
    params = init_params(k_p)
    prepared = prepare_params(*params)   # one-time pad/cast, reused below

    # Small batch (single grid step, tb rounded up to 8).
    batch = 8
    x = jax.random.normal(k_x, (batch, INPUT_SIZE), jnp.float32)
    y = jax.block_until_ready(net_forward(x, prepared))
    y_ref = reference_forward(x, *params)
    assert y.shape == (batch, OUTPUT_SIZE)
    assert jnp.allclose(y, y_ref, atol=2e-2, rtol=2e-2), float(jnp.max(jnp.abs(y - y_ref)))

    # Larger, non-tile-multiple batch to exercise the multi-tile adaptive-padding path.
    batch2 = 700   # -> 2 tiles of 352 rows (704 padded), not 1024
    x2 = jax.random.normal(k_x2, (batch2, INPUT_SIZE), jnp.float32)
    y2 = jax.block_until_ready(net_forward(x2, prepared))
    y2_ref = reference_forward(x2, *params)
    assert y2.shape == (batch2, OUTPUT_SIZE)
    assert jnp.allclose(y2, y2_ref, atol=2e-2, rtol=2e-2), float(jnp.max(jnp.abs(y2 - y2_ref)))

    print("KERNEL_OK")
</pallas_src>

<mosaic_0001>
module attributes {stable_mosaic.version = 11 : i64} {
  func.func @_mlp_kernel(%arg0: i32, %arg1: memref<8x784xf32, #tpu.memory_space<vmem>>, %arg2: memref<784x1024xbf16, #tpu.memory_space<vmem>>, %arg3: memref<1x1024xf32, #tpu.memory_space<vmem>>, %arg4: memref<1024x512xbf16, #tpu.memory_space<vmem>>, %arg5: memref<1x512xf32, #tpu.memory_space<vmem>>, %arg6: memref<512x128xbf16, #tpu.memory_space<vmem>>, %arg7: memref<1x128xf32, #tpu.memory_space<vmem>>, %arg8: memref<8x128xf32, #tpu.memory_space<vmem>>) attributes {dimension_semantics = [#tpu.dimension_semantics<parallel>], iteration_bounds = array<i64: 1>, scalar_prefetch = 0 : i64, scratch_operands = 0 : i64, tpu.core_type = #tpu.core_type<tc>, window_params = [{transform_indices = @transform_0, window_bounds = array<i64: 8, 784>}, {pipeline_mode = #tpu.pipeline_mode<synchronous>, transform_indices = @transform_1, window_bounds = array<i64: 784, 1024>}, {pipeline_mode = #tpu.pipeline_mode<synchronous>, transform_indices = @transform_2, window_bounds = array<i64: 1, 1024>}, {pipeline_mode = #tpu.pipeline_mode<synchronous>, transform_indices = @transform_3, window_bounds = array<i64: 1024, 512>}, {pipeline_mode = #tpu.pipeline_mode<synchronous>, transform_indices = @transform_4, window_bounds = array<i64: 1, 512>}, {pipeline_mode = #tpu.pipeline_mode<synchronous>, transform_indices = @transform_5, window_bounds = array<i64: 512, 128>}, {pipeline_mode = #tpu.pipeline_mode<synchronous>, transform_indices = @transform_6, window_bounds = array<i64: 1, 128>}, {transform_indices = @transform_7, window_bounds = array<i64: 8, 128>}]} {
    %c0 = arith.constant 0 : index
    %c0_0 = arith.constant 0 : index
    %0 = vector.load %arg1[%c0, %c0_0] : memref<8x784xf32, #tpu.memory_space<vmem>>, vector<8x784xf32>
    %1 = arith.truncf %0 : vector<8x784xf32> to vector<8x784xbf16>
    %c0_1 = arith.constant 0 : index
    %c0_2 = arith.constant 0 : index
    %2 = vector.load %arg2[%c0_1, %c0_2] : memref<784x1024xbf16, #tpu.memory_space<vmem>>, vector<784x1024xbf16>
    %cst = arith.constant dense<0.000000e+00> : vector<8x1024xf32>
    %3 = tpu.matmul %1, %2, %cst {dimension_numbers = #tpu.dot_dimension_numbers<[1], [0], [0], [1], [0, 0, 1, 1], [], []>} : vector<8x784xbf16>, vector<784x1024xbf16>, vector<8x1024xf32> -> vector<8x1024xf32>
    %c0_3 = arith.constant 0 : index
    %c0_4 = arith.constant 0 : index
    %4 = vector.load %arg3[%c0_3, %c0_4] : memref<1x1024xf32, #tpu.memory_space<vmem>>, vector<1x1024xf32>
    %5 = vector.broadcast %4 : vector<1x1024xf32> to vector<8x1024xf32>
    %6 = arith.addf %3, %5 : vector<8x1024xf32>
    %cst_5 = arith.constant 0.000000e+00 : f32
    %7 = vector.broadcast %cst_5 : f32 to vector<8x1024xf32>
    %8 = arith.maximumf %6, %7 : vector<8x1024xf32>
    %9 = arith.truncf %8 : vector<8x1024xf32> to vector<8x1024xbf16>
    %c0_6 = arith.constant 0 : index
    %c0_7 = arith.constant 0 : index
    %10 = vector.load %arg4[%c0_6, %c0_7] : memref<1024x512xbf16, #tpu.memory_space<vmem>>, vector<1024x512xbf16>
    %cst_8 = arith.constant dense<0.000000e+00> : vector<8x512xf32>
    %11 = tpu.matmul %9, %10, %cst_8 {dimension_numbers = #tpu.dot_dimension_numbers<[1], [0], [0], [1], [0, 0, 1, 1], [], []>} : vector<8x1024xbf16>, vector<1024x512xbf16>, vector<8x512xf32> -> vector<8x512xf32>
    %c0_9 = arith.constant 0 : index
    %c0_10 = arith.constant 0 : index
    %12 = vector.load %arg5[%c0_9, %c0_10] : memref<1x512xf32, #tpu.memory_space<vmem>>, vector<1x512xf32>
    %13 = vector.broadcast %12 : vector<1x512xf32> to vector<8x512xf32>
    %14 = arith.addf %11, %13 : vector<8x512xf32>
    %cst_11 = arith.constant 0.000000e+00 : f32
    %15 = vector.broadcast %cst_11 : f32 to vector<8x512xf32>
    %16 = arith.maximumf %14, %15 : vector<8x512xf32>
    %17 = arith.truncf %16 : vector<8x512xf32> to vector<8x512xbf16>
    %c0_12 = arith.constant 0 : index
    %c0_13 = arith.constant 0 : index
    %18 = vector.load %arg6[%c0_12, %c0_13] : memref<512x128xbf16, #tpu.memory_space<vmem>>, vector<512x128xbf16>
    %cst_14 = arith.constant dense<0.000000e+00> : vector<8x128xf32>
    %19 = tpu.matmul %17, %18, %cst_14 {dimension_numbers = #tpu.dot_dimension_numbers<[1], [0], [0], [1], [0, 0, 1, 1], [], []>} : vector<8x512xbf16>, vector<512x128xbf16>, vector<8x128xf32> -> vector<8x128xf32>
    %c0_15 = arith.constant 0 : index
    %c0_16 = arith.constant 0 : index
    %20 = vector.load %arg7[%c0_15, %c0_16] : memref<1x128xf32, #tpu.memory_space<vmem>>, vector<1x128xf32>
    %21 = vector.broadcast %20 : vector<1x128xf32> to vector<8x128xf32>
    %22 = arith.addf %19, %21 : vector<8x128xf32>
    %c0_17 = arith.constant 0 : index
    %c0_18 = arith.constant 0 : index
    %23 = vector.load %arg8[%c0_17, %c0_18] : memref<8x128xf32, #tpu.memory_space<vmem>>, vector<8x128xf32>
    tpu.vector_store %arg8[%c0_17, %c0_18], %22 {strides = array<i32>} : memref<8x128xf32, #tpu.memory_space<vmem>>, vector<8x128xf32>,
    return
  }
  func.func @transform_0(%arg0: i32) -> (i32, i32) {
    %c0_i32 = arith.constant 0 : i32
    %c0_i32_0 = arith.constant 0 : i32
    return %arg0, %c0_i32 : i32, i32
  }
  func.func @transform_1(%arg0: i32) -> (i32, i32) {
    %c0_i32 = arith.constant 0 : i32
    %c0_i32_0 = arith.constant 0 : i32
    %c0_i32_1 = arith.constant 0 : i32
    return %c0_i32, %c0_i32_0 : i32, i32
  }
  func.func @transform_2(%arg0: i32) -> (i32, i32) {
    %c0_i32 = arith.constant 0 : i32
    %c0_i32_0 = arith.constant 0 : i32
    %c0_i32_1 = arith.constant 0 : i32
    return %c0_i32, %c0_i32_0 : i32, i32
  }
  func.func @transform_3(%arg0: i32) -> (i32, i32) {
    %c0_i32 = arith.constant 0 : i32
    %c0_i32_0 = arith.constant 0 : i32
    %c0_i32_1 = arith.constant 0 : i32
    return %c0_i32, %c0_i32_0 : i32, i32
  }
  func.func @transform_4(%arg0: i32) -> (i32, i32) {
    %c0_i32 = arith.constant 0 : i32
    %c0_i32_0 = arith.constant 0 : i32
    %c0_i32_1 = arith.constant 0 : i32
    return %c0_i32, %c0_i32_0 : i32, i32
  }
  func.func @transform_5(%arg0: i32) -> (i32, i32) {
    %c0_i32 = arith.constant 0 : i32
    %c0_i32_0 = arith.constant 0 : i32
    %c0_i32_1 = arith.constant 0 : i32
    return %c0_i32, %c0_i32_0 : i32, i32
  }
  func.func @transform_6(%arg0: i32) -> (i32, i32) {
    %c0_i32 = arith.constant 0 : i32
    %c0_i32_0 = arith.constant 0 : i32
    %c0_i32_1 = arith.constant 0 : i32
    return %c0_i32, %c0_i32_0 : i32, i32
  }
  func.func @transform_7(%arg0: i32) -> (i32, i32) {
    %c0_i32 = arith.constant 0 : i32
    %c0_i32_0 = arith.constant 0 : i32
    return %arg0, %c0_i32 : i32, i32
  }
}

</mosaic_0001>

<llo_original>
// kernel: tpu_custom_call.1
$region0: #{tpu_custom_call.1}
  #allocation0 [shape = 'u32[]', space=smem, size = 0x4, offset = 0x4, fixed_abs, tag = 'smem constant byte address 0x4 - core index']
  #allocation1 [shape = 'u32[144,128]{1,0:T(1,128)}', space=vmem, size = 0x12000, scoped, tag = 'internal scratch']
  %s0 = inlined_call_operand.hbm [shape: f32[8,784], index: 0, kind: input, shape index: {}]
  %s1 = inlined_call_operand.hbm [shape: bf16[784,1024], index: 1, kind: input, shape index: {}]
  %s2 = inlined_call_operand.hbm [shape: f32[1,1024], index: 2, kind: input, shape index: {}]
  %s3 = inlined_call_operand.hbm [shape: bf16[1024,512], index: 3, kind: input, shape index: {}]
  %s4 = inlined_call_operand.hbm [shape: f32[1,512], index: 4, kind: input, shape index: {}]
  %s5 = inlined_call_operand.hbm [shape: bf16[512,128], index: 5, kind: input, shape index: {}]
  %s6 = inlined_call_operand.hbm [shape: f32[1,128], index: 6, kind: input, shape index: {}]
  %s7 = inlined_call_operand.hbm [shape: f32[8,128], index: 7, kind: output, shape index: {}]
  %s8 = sld [smem:[#allocation0]]
  $region66: #{tpu_custom_call.1} parent=0
    _
  %s10 = ssub.s32 1, %s8
  %s11 = scalar_select 0, %s10, %s8
  $region1: #{tpu_custom_call.1} parent=0
    #allocation2 [shape = 'u8[28672]{0}', space=vmem, size = 0x7000, scoped, tag = 'input window, operand 0, single buffered']
    #allocation3 [shape = 's32[1]{0}', space=sflag, size = 0x4, scoped, tag = 'scoped memory for tpu_custom_call.1']
    #allocation4 [shape = 's32[1]{0}', space=sflag, size = 0x4, scoped, tag = 'scoped memory for tpu_custom_call.1']
    #allocation5 [shape = 'u8[1605632]{0}', space=vmem, size = 0x188000, scoped, tag = 'input window, operand 1, single buffered']
    #allocation6 [shape = 's32[1]{0}', space=sflag, size = 0x4, scoped, tag = 'scoped memory for tpu_custom_call.1']
    #allocation7 [shape = 'u8[4096]{0}', space=vmem, size = 0x1000, scoped, tag = 'input window, operand 2, single buffered']
    #allocation8 [shape = 'u8[1048576]{0}', space=vmem, size = 0x100000, scoped, tag = 'input window, operand 3, single buffered']
    #allocation9 [shape = 's32[1]{0}', space=sflag, size = 0x4, scoped, tag = 'scoped memory for tpu_custom_call.1']
    #allocation10 [shape = 'u8[2048]{0}', space=vmem, size = 0x800, scoped, tag = 'input window, operand 4, single buffered']
    #allocation11 [shape = 'u8[131072]{0}', space=vmem, size = 0x20000, scoped, tag = 'input window, operand 5, single buffered']
    #allocation12 [shape = 's32[1]{0}', space=sflag, size = 0x4, scoped, tag = 'scoped memory for tpu_custom_call.1']
    #allocation13 [shape = 'u8[512]{0}', space=vmem, size = 0x400, scoped, tag = 'input window, operand 6, single buffered']
    #allocation14 [shape = 'u8[4096]{0}', space=vmem, size = 0x1000, scoped, tag = 'output window, operand 0, single buffered']
    %12 = vsyncpa [#allocation3], 0
    %13 = vsyncpa [#allocation6], 0
    %14 = vsyncpa [#allocation9], 0
    %15 = vsyncpa [#allocation12], 0
    %16 = vsyncpa [#allocation4], 0
    // Predicated region
    $region2: #{tpu_custom_call.1} parent=1 // pred_check
      _
    $region3: #{tpu_custom_call.1} parent=1 // pred_check_branch
      %18 = sbr.rel (0) target = $region5
    $region4: #{tpu_custom_call.1} parent=1 // pred_region
      %s20 = ssub.s32 896, 896
      %21 = vsyncadd [#allocation3], %s20
      %s23 = sshll.u32 [#allocation2], 4
      %s24 = int_to_ptr.vmem [resolvable:$true] %s23
      %26 = dma.hbm_to_vmem [thread:$0]  %s0, 896, %s24, [#allocation3]
    $region5: #{tpu_custom_call.1} parent=1 // pred_fallthru
      _
    // Predicated region
    $region6: #{tpu_custom_call.1} parent=1 // pred_check
      _
    $region7: #{tpu_custom_call.1} parent=1 // pred_check_branch
      %28 = sbr.rel (0) target = $region9
    $region8: #{tpu_custom_call.1} parent=1 // pred_region
      %s30 = ssub.s32 50176, 50176
      %31 = vsyncadd [#allocation6], %s30
      %s32 = sshll.u32 [#allocation5], 4
      %s33 = int_to_ptr.vmem [resolvable:$true] %s32
      %38 = dma.hbm_to_vmem [thread:$0]  %s1, 50176, %s33, [#allocation6], 512, 512, 32
    $region9: #{tpu_custom_call.1} parent=1 // pred_fallthru
      _
    // Predicated region
    $region10: #{tpu_custom_call.1} parent=1 // pred_check
      _
    $region11: #{tpu_custom_call.1} parent=1 // pred_check_branch
      %40 = sbr.rel (0) target = $region13
    $region12: #{tpu_custom_call.1} parent=1 // pred_region
      %s42 = ssub.s32 128, 128
      %43 = vsyncadd [#allocation6], %s42
      %s45 = sshll.u32 [#allocation7], 4
      %s46 = int_to_ptr.vmem [resolvable:$true] %s45
      %48 = dma.hbm_to_vmem [thread:$0]  %s2, 128, %s46, [#allocation6]
    $region13: #{tpu_custom_call.1} parent=1 // pred_fallthru
      _
    // Predicated region
    $region14: #{tpu_custom_call.1} parent=1 // pred_check
      _
    $region15: #{tpu_custom_call.1} parent=1 // pred_check_branch
      %50 = sbr.rel (0) target = $region17
    $region16: #{tpu_custom_call.1} parent=1 // pred_region
      %s52 = ssub.s32 32768, 32768
      %53 = vsyncadd [#allocation9], %s52
      %s54 = sshll.u32 [#allocation8], 4
      %s55 = int_to_ptr.vmem [resolvable:$true] %s54
      %60 = dma.hbm_to_vmem [thread:$0]  %s3, 32768, %s55, [#allocation9], 256, 256, 16
    $region17: #{tpu_custom_call.1} parent=1 // pred_fallthru
      _
    // Predicated region
    $region18: #{tpu_custom_call.1} parent=1 // pred_check
      _
    $region19: #{tpu_custom_call.1} parent=1 // pred_check_branch
      %62 = sbr.rel (0) target = $region21
    $region20: #{tpu_custom_call.1} parent=1 // pred_region
      %s64 = ssub.s32 64, 64
      %65 = vsyncadd [#allocation9], %s64
      %s67 = sshll.u32 [#allocation10], 4
      %s68 = int_to_ptr.vmem [resolvable:$true] %s67
      %70 = dma.hbm_to_vmem [thread:$0]  %s4, 64, %s68, [#allocation9]
    $region21: #{tpu_custom_call.1} parent=1 // pred_fallthru
      _
    // Predicated region
    $region22: #{tpu_custom_call.1} parent=1 // pred_check
      _
    $region23: #{tpu_custom_call.1} parent=1 // pred_check_branch
      %72 = sbr.rel (0) target = $region25
    $region24: #{tpu_custom_call.1} parent=1 // pred_region
      %s74 = ssub.s32 4096, 4096
      %75 = vsyncadd [#allocation12], %s74
      %s76 = sshll.u32 [#allocation11], 4
      %s77 = int_to_ptr.vmem [resolvable:$true] %s76
      %82 = dma.hbm_to_vmem [thread:$0]  %s5, 4096, %s77, [#allocation12], 64, 64, 4
    $region25: #{tpu_custom_call.1} parent=1 // pred_fallthru
      _
    // Predicated region
    $region26: #{tpu_custom_call.1} parent=1 // pred_check
      _
    $region27: #{tpu_custom_call.1} parent=1 // pred_check_branch
      %84 = sbr.rel (0) target = $region29
    $region28: #{tpu_custom_call.1} parent=1 // pred_region
      %s86 = ssub.s32 16, 16
      %87 = vsyncadd [#allocation12], %s86
      %s89 = sshll.u32 [#allocation13], 4
      %s90 = int_to_ptr.vmem [resolvable:$true] %s89
      %92 = dma.hbm_to_vmem [thread:$0]  %s6, 16, %s90, [#allocation12]
    $region29: #{tpu_custom_call.1} parent=1 // pred_fallthru
      _
    // Predicated region
    $region30: #{tpu_custom_call.1} parent=1 // pred_check
      _
    $region31: #{tpu_custom_call.1} parent=1 // pred_check_branch
      %94 = sbr.rel (0) target = $region33
    $region32: #{tpu_custom_call.1} parent=1 // pred_region
      %95 = dma.done [#allocation3], 896
    $region33: #{tpu_custom_call.1} parent=1 // pred_fallthru
      _
    // Predicated region
    $region34: #{tpu_custom_call.1} parent=1 // pred_check
      _
    $region35: #{tpu_custom_call.1} parent=1 // pred_check_branch
      %97 = sbr.rel (0) target = $region37
    $region36: #{tpu_custom_call.1} parent=1 // pred_region
      %98 = dma.done [#allocation6], 50176
    $region37: #{tpu_custom_call.1} parent=1 // pred_fallthru
      _
    // Predicated region
    $region38: #{tpu_custom_call.1} parent=1 // pred_check
      _
    $region39: #{tpu_custom_call.1} parent=1 // pred_check_branch
      %100 = sbr.rel (0) target = $region41
    $region40: #{tpu_custom_call.1} parent=1 // pred_region
      %101 = dma.done [#allocation6], 128
    $region41: #{tpu_custom_call.1} parent=1 // pred_fallthru
      _
    // Predicated region
    $region42: #{tpu_custom_call.1} parent=1 // pred_check
      _
    $region43: #{tpu_custom_call.1} parent=1 // pred_check_branch
      %103 = sbr.rel (0) target = $region45
    $region44: #{tpu_custom_call.1} parent=1 // pred_region
      %104 = dma.done [#allocation9], 32768
    $region45: #{tpu_custom_call.1} parent=1 // pred_fallthru
      _
    // Predicated region
    $region46: #{tpu_custom_call.1} parent=1 // pred_check
      _
    $region47: #{tpu_custom_call.1} parent=1 // pred_check_branch
      %106 = sbr.rel (0) target = $region49
    $region48: #{tpu_custom_call.1} parent=1 // pred_region
      %107 = dma.done [#allocation9], 64
    $region49: #{tpu_custom_call.1} parent=1 // pred_fallthru
      _
    // Predicated region
    $region50: #{tpu_custom_call.1} parent=1 // pred_check
      _
    $region51: #{tpu_custom_call.1} parent=1 // pred_check_branch
      %109 = sbr.rel (0) target = $region53
    $region52: #{tpu_custom_call.1} parent=1 // pred_region
      %110 = dma.done [#allocation12], 4096
    $region53: #{tpu_custom_call.1} parent=1 // pred_fallthru
      _
    // Predicated region
    $region54: #{tpu_custom_call.1} parent=1 // pred_check
      _
    $region55: #{tpu_custom_call.1} parent=1 // pred_check_branch
      %112 = sbr.rel (0) target = $region57
    $region56: #{tpu_custom_call.1} parent=1 // pred_region
      %113 = dma.done [#allocation12], 16
    $region57: #{tpu_custom_call.1} parent=1 // pred_fallthru
      _
    %v115 = vld [vmem:[#allocation2] sm:$0xff]
    %v116 = vld [vmem:[#allocation2 + $0x8] sm:$0xff]
    %v117 = vld [vmem:[#allocation2 + $0x10] sm:$0xff]
    %v118 = vld [vmem:[#allocation2 + $0x18] sm:$0xff]
    %v119 = vld [vmem:[#allocation2 + $0x20] sm:$0xff]
    %v120 = vld [vmem:[#allocation2 + $0x28] sm:$0xff]
    %v121 = vld [vmem:[#allocation2 + $0x30] sm:$0xff]
    %v122 = vpack.c.bf16 %v115, %v115
    %v123 = vpack.c.bf16 %v116, %v116
    %v124 = vpack.c.bf16 %v117, %v117
    %v125 = vpack.c.bf16 %v118, %v118
    %v126 = vpack.c.bf16 %v119, %v119
    %v127 = vpack.c.bf16 %v120, %v120
    %v128 = vpack.c.bf16 %v121, %v121
    %v129 = vld [vmem:[#allocation5] sm:$0xff]
    %v130 = vld [vmem:[#allocation5 + $0x8] sm:$0xff]
    %v131 = vld [vmem:[#allocation5 + $0x10] sm:$0xff]
    %v132 = vld [vmem:[#allocation5 + $0x18] sm:$0xff]
    %v133 = vld [vmem:[#allocation5 + $0x20] sm:$0xff]
    %v134 = vld [vmem:[#allocation5 + $0x28] sm:$0xff]
    %v135 = vld [vmem:[#allocation5 + $0x30] sm:$0xff]
    %v136 = vld [vmem:[#allocation5 + $0x38] sm:$0xff]
    %v137 = vld [vmem:[#allocation5 + $0x40] sm:$0xff]
    %v138 = vld [vmem:[#allocation5 + $0x48] sm:$0xff]
    %v139 = vld [vmem:[#allocation5 + $0x50] sm:$0xff]
    %v140 = vld [vmem:[#allocation5 + $0x58] sm:$0xff]
    %v141 = vld [vmem:[#allocation5 + $0x60] sm:$0xff]
    %v142 = vld [vmem:[#allocation5 + $0x68] sm:$0xff]
    %v143 = vld [vmem:[#allocation5 + $0x70] sm:$0xff]
    %v144 = vld [vmem:[#allocation5 + $0x78] sm:$0xff]
    %v145 = vld [vmem:[#allocation5 + $0x80] sm:$0xff]
    %v146 = vld [vmem:[#allocation5 + $0x88] sm:$0xff]
    %v147 = vld [vmem:[#allocation5 + $0x90] sm:$0xff]
    %v148 = vld [vmem:[#allocation5 + $0x98] sm:$0xff]
    %v149 = vld [vmem:[#allocation5 + $0xa0] sm:$0xff]
    %v150 = vld [vmem:[#allocation5 + $0xa8] sm:$0xff]
    %v151 = vld [vmem:[#allocation5 + $0xb0] sm:$0xff]
    %v152 = vld [vmem:[#allocation5 + $0xb8] sm:$0xff]
    %v153 = vld [vmem:[#allocation5 + $0xc0] sm:$0xff]
    %v154 = vld [vmem:[#allocation5 + $0xc8] sm:$0xff]
    %v155 = vld [vmem:[#allocation5 + $0xd0] sm:$0xff]
    %v156 = vld [vmem:[#allocation5 + $0xd8] sm:$0xff]
    %v157 = vld [vmem:[#allocation5 + $0xe0] sm:$0xff]
    %v158 = vld [vmem:[#allocation5 + $0xe8] sm:$0xff]
    %v159 = vld [vmem:[#allocation5 + $0xf0] sm:$0xff]
    %v160 = vld [vmem:[#allocation5 + $0xf8] sm:$0xff]
    %v161 = vld [vmem:[#allocation5 + $0x100] sm:$0xff]
    %v162 = vld [vmem:[#allocation5 + $0x108] sm:$0xff]
    %v163 = vld [vmem:[#allocation5 + $0x110] sm:$0xff]
    %v164 = vld [vmem:[#allocation5 + $0x118] sm:$0xff]
    %v165 = vld [vmem:[#allocation5 + $0x120] sm:$0xff]
    %v166 = vld [vmem:[#allocation5 + $0x128] sm:$0xff]
    %v167 = vld [vmem:[#allocation5 + $0x130] sm:$0xff]
    %v168 = vld [vmem:[#allocation5 + $0x138] sm:$0xff]
    %v169 = vld [vmem:[#allocation5 + $0x140] sm:$0xff]
    %v170 = vld [vmem:[#allocation5 + $0x148] sm:$0xff]
    %v171 = vld [vmem:[#allocation5 + $0x150] sm:$0xff]
    %v172 = vld [vmem:[#allocation5 + $0x158] sm:$0xff]
    %v173 = vld [vmem:[#allocation5 + $0x160] sm:$0xff]
    %v174 = vld [vmem:[#allocation5 + $0x168] sm:$0xff]
    %v175 = vld [vmem:[#allocation5 + $0x170] sm:$0xff]
    %v176 = vld [vmem:[#allocation5 + $0x178] sm:$0xff]
    %v177 = vld [vmem:[#allocation5 + $0x180] sm:$0xff]
    %v178 = vld [vmem:[#allocation5 + $0x188] sm:$0xff]
    %v179 = vld [vmem:[#allocation5 + $0x190] sm:$0xff]
    %v180 = vld [vmem:[#allocation5 + $0x198] sm:$0xff]
    %v181 = vld [vmem:[#allocation5 + $0x1a0] sm:$0xff]
    %v182 = vld [vmem:[#allocation5 + $0x1a8] sm:$0xff]
    %v183 = vld [vmem:[#allocation5 + $0x1b0] sm:$0xff]
    %v184 = vld [vmem:[#allocation5 + $0x1b8] sm:$0xff]
    %v185 = vld [vmem:[#allocation5 + $0x1c0] sm:$0xff]
    %v186 = vld [vmem:[#allocation5 + $0x1c8] sm:$0xff]
    %v187 = vld [vmem:[#allocation5 + $0x1d0] sm:$0xff]
    %v188 = vld [vmem:[#allocation5 + $0x1d8] sm:$0xff]
    %v189 = vld [vmem:[#allocation5 + $0x1e0] sm:$0xff]
    %v190 = vld [vmem:[#allocation5 + $0x1e8] sm:$0xff]
    %v191 = vld [vmem:[#allocation5 + $0x1f0] sm:$0xff]
    %v192 = vld [vmem:[#allocation5 + $0x1f8] sm:$0xff]
    %v193 = vld [vmem:[#allocation5 + $0x200] sm:$0xff]
    %v194 = vld [vmem:[#allocation5 + $0x208] sm:$0xff]
    %v195 = vld [vmem:[#allocation5 + $0x210] sm:$0xff]
    %v196 = vld [vmem:[#allocation5 + $0x218] sm:$0xff]
    %v197 = vld [vmem:[#allocation5 + $0x220] sm:$0xff]
    %v198 = vld [vmem:[#allocation5 + $0x228] sm:$0xff]
    %v199 = vld [vmem:[#allocation5 + $0x230] sm:$0xff]
    %v200 = vld [vmem:[#allocation5 + $0x238] sm:$0xff]
    %v201 = vld [vmem:[#allocation5 + $0x240] sm:$0xff]
    %v202 = vld [vmem:[#allocation5 + $0x248] sm:$0xff]
    %v203 = vld [vmem:[#allocation5 + $0x250] sm:$0xff]
    %v204 = vld [vmem:[#allocation5 + $0x258] sm:$0xff]
    %v205 = vld [vmem:[#allocation5 + $0x260] sm:$0xff]
    %v206 = vld [vmem:[#allocation5 + $0x268] sm:$0xff]
    %v207 = vld [vmem:[#allocation5 + $0x270] sm:$0xff]
    %v208 = vld [vmem:[#allocation5 + $0x278] sm:$0xff]
    %v209 = vld [vmem:[#allocation5 + $0x280] sm:$0xff]
    %v210 = vld [vmem:[#allocation5 + $0x288] sm:$0xff]
    %v211 = vld [vmem:[#allocation5 + $0x290] sm:$0xff]
    %v212 = vld [vmem:[#allocation5 + $0x298] sm:$0xff]
    %v213 = vld [vmem:[#allocation5 + $0x2a0] sm:$0xff]
    %v214 = vld [vmem:[#allocation5 + $0x2a8] sm:$0xff]
    %v215 = vld [vmem:[#allocation5 + $0x2b0] sm:$0xff]
    %v216 = vld [vmem:[#allocation5 + $0x2b8] sm:$0xff]
    %v217 = vld [vmem:[#allocation5 + $0x2c0] sm:$0xff]
    %v218 = vld [vmem:[#allocation5 + $0x2c8] sm:$0xff]
    %v219 = vld [vmem:[#allocation5 + $0x2d0] sm:$0xff]
    %v220 = vld [vmem:[#allocation5 + $0x2d8] sm:$0xff]
    %v221 = vld [vmem:[#allocation5 + $0x2e0] sm:$0xff]
    %v222 = vld [vmem:[#allocation5 + $0x2e8] sm:$0xff]
    %v223 = vld [vmem:[#allocation5 + $0x2f0] sm:$0xff]
    %v224 = vld [vmem:[#allocation5 + $0x2f8] sm:$0xff]
    %v225 = vld [vmem:[#allocation5 + $0x300] sm:$0xff]
    %v226 = vld [vmem:[#allocation5 + $0x308] sm:$0xff]
    %v227 = vld [vmem:[#allocation5 + $0x310] sm:$0xff]
    %v228 = vld [vmem:[#allocation5 + $0x318] sm:$0xff]
    %v229 = vld [vmem:[#allocation5 + $0x320] sm:$0xff]
    %v230 = vld [vmem:[#allocation5 + $0x328] sm:$0xff]
    %v231 = vld [vmem:[#allocation5 + $0x330] sm:$0xff]
    %v232 = vld [vmem:[#allocation5 + $0x338] sm:$0xff]
    %v233 = vld [vmem:[#allocation5 + $0x340] sm:$0xff]
    %v234 = vld [vmem:[#allocation5 + $0x348] sm:$0xff]
    %v235 = vld [vmem:[#allocation5 + $0x350] sm:$0xff]
    %v236 = vld [vmem:[#allocation5 + $0x358] sm:$0xff]
    %v237 = vld [vmem:[#allocation5 + $0x360] sm:$0xff]
    %v238 = vld [vmem:[#allocation5 + $0x368] sm:$0xff]
    %v239 = vld [vmem:[#allocation5 + $0x370] sm:$0xff]
    %v240 = vld [vmem:[#allocation5 + $0x378] sm:$0xff]
    %v241 = vld [vmem:[#allocation5 + $0x380] sm:$0xff]
    %v242 = vld [vmem:[#allocation5 + $0x388] sm:$0xff]
    %v243 = vld [vmem:[#allocation5 + $0x390] sm:$0xff]
    %v244 = vld [vmem:[#allocation5 + $0x398] sm:$0xff]
    %v245 = vld [vmem:[#allocation5 + $0x3a0] sm:$0xff]
    %v246 = vld [vmem:[#allocation5 + $0x3a8] sm:$0xff]
    %v247 = vld [vmem:[#allocation5 + $0x3b0] sm:$0xff]
    %v248 = vld [vmem:[#allocation5 + $0x3b8] sm:$0xff]
    %v249 = vld [vmem:[#allocation5 + $0x3c0] sm:$0xff]
    %v250 = vld [vmem:[#allocation5 + $0x3c8] sm:$0xff]
    %v251 = vld [vmem:[#allocation5 + $0x3d0] sm:$0xff]
    %v252 = vld [vmem:[#allocation5 + $0x3d8] sm:$0xff]
    %v253 = vld [vmem:[#allocation5 + $0x3e0] sm:$0xff]
    %v254 = vld [vmem:[#allocation5 + $0x3e8] sm:$0xff]
    %v255 = vld [vmem:[#allocation5 + $0x3f0] sm:$0xff]
    %v256 = vld [vmem:[#allocation5 + $0x3f8] sm:$0xff]
    %v257 = vld [vmem:[#allocation5 + $0x400] sm:$0xff]
    %v258 = vld [vmem:[#allocation5 + $0x408] sm:$0xff]
    %v259 = vld [vmem:[#allocation5 + $0x410] sm:$0xff]
    %v260 = vld [vmem:[#allocation5 + $0x418] sm:$0xff]
    %v261 = vld [vmem:[#allocation5 + $0x420] sm:$0xff]
    %v262 = vld [vmem:[#allocation5 + $0x428] sm:$0xff]
    %v263 = vld [vmem:[#allocation5 + $0x430] sm:$0xff]
    %v264 = vld [vmem:[#allocation5 + $0x438] sm:$0xff]
    %v265 = vld [vmem:[#allocation5 + $0x440] sm:$0xff]
    %v266 = vld [vmem:[#allocation5 + $0x448] sm:$0xff]
    %v267 = vld [vmem:[#allocation5 + $0x450] sm:$0xff]
    %v268 = vld [vmem:[#allocation5 + $0x458] sm:$0xff]
    %v269 = vld [vmem:[#allocation5 + $0x460] sm:$0xff]
    %v270 = vld [vmem:[#allocation5 + $0x468] sm:$0xff]
    %v271 = vld [vmem:[#allocation5 + $0x470] sm:$0xff]
    %v272 = vld [vmem:[#allocation5 + $0x478] sm:$0xff]
    %v273 = vld [vmem:[#allocation5 + $0x480] sm:$0xff]
    %v274 = vld [vmem:[#allocation5 + $0x488] sm:$0xff]
    %v275 = vld [vmem:[#allocation5 + $0x490] sm:$0xff]
    %v276 = vld [vmem:[#allocation5 + $0x498] sm:$0xff]
    %v277 = vld [vmem:[#allocation5 + $0x4a0] sm:$0xff]
    %v278 = vld [vmem:[#allocation5 + $0x4a8] sm:$0xff]
    %v279 = vld [vmem:[#allocation5 + $0x4b0] sm:$0xff]
    %v280 = vld [vmem:[#allocation5 + $0x4b8] sm:$0xff]
    %v281 = vld [vmem:[#allocation5 + $0x4c0] sm:$0xff]
    %v282 = vld [vmem:[#allocation5 + $0x4c8] sm:$0xff]
    %v283 = vld [vmem:[#allocation5 + $0x4d0] sm:$0xff]
    %v284 = vld [vmem:[#allocation5 + $0x4d8] sm:$0xff]
    %v285 = vld [vmem:[#allocation5 + $0x4e0] sm:$0xff]
    %v286 = vld [vmem:[#allocation5 + $0x4e8] sm:$0xff]
    %v287 = vld [vmem:[#allocation5 + $0x4f0] sm:$0xff]
    %v288 = vld [vmem:[#allocation5 + $0x4f8] sm:$0xff]
    %v289 = vld [vmem:[#allocation5 + $0x500] sm:$0xff]
    %v290 = vld [vmem:[#allocation5 + $0x508] sm:$0xff]
    %v291 = vld [vmem:[#allocation5 + $0x510] sm:$0xff]
    %v292 = vld [vmem:[#allocation5 + $0x518] sm:$0xff]
    %v293 = vld [vmem:[#allocation5 + $0x520] sm:$0xff]
    %v294 = vld [vmem:[#allocation5 + $0x528] sm:$0xff]
    %v295 = vld [vmem:[#allocation5 + $0x530] sm:$0xff]
    %v296 = vld [vmem:[#allocation5 + $0x538] sm:$0xff]
    %v297 = vld [vmem:[#allocation5 + $0x540] sm:$0xff]
    %v298 = vld [vmem:[#allocation5 + $0x548] sm:$0xff]
    %v299 = vld [vmem:[#allocation5 + $0x550] sm:$0xff]
    %v300 = vld [vmem:[#allocation5 + $0x558] sm:$0xff]
    %v301 = vld [vmem:[#allocation5 + $0x560] sm:$0xff]
    %v302 = vld [vmem:[#allocation5 + $0x568] sm:$0xff]
    %v303 = vld [vmem:[#allocation5 + $0x570] sm:$0xff]
    %v304 = vld [vmem:[#allocation5 + $0x578] sm:$0xff]
    %v305 = vld [vmem:[#allocation5 + $0x580] sm:$0xff]
    %v306 = vld [vmem:[#allocation5 + $0x588] sm:$0xff]
    %v307 = vld [vmem:[#allocation5 + $0x590] sm:$0xff]
    %v308 = vld [vmem:[#allocation5 + $0x598] sm:$0xff]
    %v309 = vld [vmem:[#allocation5 + $0x5a0] sm:$0xff]
    %v310 = vld [vmem:[#allocation5 + $0x5a8] sm:$0xff]
    %v311 = vld [vmem:[#allocation5 + $0x5b0] sm:$0xff]
    %v312 = vld [vmem:[#allocation5 + $0x5b8] sm:$0xff]
    %v313 = vld [vmem:[#allocation5 + $0x5c0] sm:$0xff]
    %v314 = vld [vmem:[#allocation5 + $0x5c8] sm:$0xff]
    %v315 = vld [vmem:[#allocation5 + $0x5d0] sm:$0xff]
    %v316 = vld [vmem:[#allocation5 + $0x5d8] sm:$0xff]
    %v317 = vld [vmem:[#allocation5 + $0x5e0] sm:$0xff]
    %v318 = vld [vmem:[#allocation5 + $0x5e8] sm:$0xff]
    %v319 = vld [vmem:[#allocation5 + $0x5f0] sm:$0xff]
    %v320 = vld [vmem:[#allocation5 + $0x5f8] sm:$0xff]
    %v321 = vld [vmem:[#allocation5 + $0x600] sm:$0xff]
    %v322 = vld [vmem:[#allocation5 + $0x608] sm:$0xff]
    %v323 = vld [vmem:[#allocation5 + $0x610] sm:$0xff]
    %v324 = vld [vmem:[#allocation5 + $0x618] sm:$0xff]
    %v325 = vld [vmem:[#allocation5 + $0x620] sm:$0xff]
    %v326 = vld [vmem:[#allocation5 + $0x628] sm:$0xff]
    %v327 = vld [vmem:[#allocation5 + $0x630] sm:$0xff]
    %v328 = vld [vmem:[#allocation5 + $0x638] sm:$0xff]
    %v329 = vld [vmem:[#allocation5 + $0x640] sm:$0xff]
    %v330 = vld [vmem:[#allocation5 + $0x648] sm:$0xff]
    %v331 = vld [vmem:[#allocation5 + $0x650] sm:$0xff]
    %v332 = vld [vmem:[#allocation5 + $0x658] sm:$0xff]
    %v333 = vld [vmem:[#allocation5 + $0x660] sm:$0xff]
    %v334 = vld [vmem:[#allocation5 + $0x668] sm:$0xff]
    %v335 = vld [vmem:[#allocation5 + $0x670] sm:$0xff]
    %v336 = vld [vmem:[#allocation5 + $0x678] sm:$0xff]
    %v337 = vld [vmem:[#allocation5 + $0x680] sm:$0xff]
    %v338 = vld [vmem:[#allocation5 + $0x688] sm:$0xff]
    %v339 = vld [vmem:[#allocation5 + $0x690] sm:$0xff]
    %v340 = vld [vmem:[#allocation5 + $0x698] sm:$0xff]
    %v341 = vld [vmem:[#allocation5 + $0x6a0] sm:$0xff]
    %v342 = vld [vmem:[#allocation5 + $0x6a8] sm:$0xff]
    %v343 = vld [vmem:[#allocation5 + $0x6b0] sm:$0xff]
    %v344 = vld [vmem:[#allocation5 + $0x6b8] sm:$0xff]
    %v345 = vld [vmem:[#allocation5 + $0x6c0] sm:$0xff]
    %v346 = vld [vmem:[#allocation5 + $0x6c8] sm:$0xff]
    %v347 = vld [vmem:[#allocation5 + $0x6d0] sm:$0xff]
    %v348 = vld [vmem:[#allocation5 + $0x6d8] sm:$0xff]
    %v349 = vld [vmem:[#allocation5 + $0x6e0] sm:$0xff]
    %v350 = vld [vmem:[#allocation5 + $0x6e8] sm:$0xff]
    %v351 = vld [vmem:[#allocation5 + $0x6f0] sm:$0xff]
    %v352 = vld [vmem:[#allocation5 + $0x6f8] sm:$0xff]
    %v353 = vld [vmem:[#allocation5 + $0x700] sm:$0xff]
    %v354 = vld [vmem:[#allocation5 + $0x708] sm:$0xff]
    %v355 = vld [vmem:[#allocation5 + $0x710] sm:$0xff]
    %v356 = vld [vmem:[#allocation5 + $0x718] sm:$0xff]
    %v357 = vld [vmem:[#allocation5 + $0x720] sm:$0xff]
    %v358 = vld [vmem:[#allocation5 + $0x728] sm:$0xff]
    %v359 = vld [vmem:[#allocation5 + $0x730] sm:$0xff]
    %v360 = vld [vmem:[#allocation5 + $0x738] sm:$0xff]
    %v361 = vld [vmem:[#allocation5 + $0x740] sm:$0xff]
    %v362 = vld [vmem:[#allocation5 + $0x748] sm:$0xff]
    %v363 = vld [vmem:[#allocation5 + $0x750] sm:$0xff]
    %v364 = vld [vmem:[#allocation5 + $0x758] sm:$0xff]
    %v365 = vld [vmem:[#allocation5 + $0x760] sm:$0xff]
    %v366 = vld [vmem:[#allocation5 + $0x768] sm:$0xff]
    %v367 = vld [vmem:[#allocation5 + $0x770] sm:$0xff]
    %v368 = vld [vmem:[#allocation5 + $0x778] sm:$0xff]
    %v369 = vld [vmem:[#allocation5 + $0x780] sm:$0xff]
    %v370 = vld [vmem:[#allocation5 + $0x788] sm:$0xff]
    %v371 = vld [vmem:[#allocation5 + $0x790] sm:$0xff]
    %v372 = vld [vmem:[#allocation5 + $0x798] sm:$0xff]
    %v373 = vld [vmem:[#allocation5 + $0x7a0] sm:$0xff]
    %v374 = vld [vmem:[#allocation5 + $0x7a8] sm:$0xff]
    %v375 = vld [vmem:[#allocation5 + $0x7b0] sm:$0xff]
    %v376 = vld [vmem:[#allocation5 + $0x7b8] sm:$0xff]
    %v377 = vld [vmem:[#allocation5 + $0x7c0] sm:$0xff]
    %v378 = vld [vmem:[#allocation5 + $0x7c8] sm:$0xff]
    %v379 = vld [vmem:[#allocation5 + $0x7d0] sm:$0xff]
    %v380 = vld [vmem:[#allocation5 + $0x7d8] sm:$0xff]
    %v381 = vld [vmem:[#allocation5 + $0x7e0] sm:$0xff]
    %v382 = vld [vmem:[#allocation5 + $0x7e8] sm:$0xff]
    %v383 = vld [vmem:[#allocation5 + $0x7f0] sm:$0xff]
    %v384 = vld [vmem:[#allocation5 + $0x7f8] sm:$0xff]
    %v385 = vld [vmem:[#allocation5 + $0x800] sm:$0xff]
    %v386 = vld [vmem:[#allocation5 + $0x808] sm:$0xff]
    %v387 = vld [vmem:[#allocation5 + $0x810] sm:$0xff]
    %v388 = vld [vmem:[#allocation5 + $0x818] sm:$0xff]
    %v389 = vld [vmem:[#allocation5 + $0x820] sm:$0xff]
    %v390 = vld [vmem:[#allocation5 + $0x828] sm:$0xff]
    %v391 = vld [vmem:[#allocation5 + $0x830] sm:$0xff]
    %v392 = vld [vmem:[#allocation5 + $0x838] sm:$0xff]
    %v393 = vld [vmem:[#allocation5 + $0x840] sm:$0xff]
    %v394 = vld [vmem:[#allocation5 + $0x848] sm:$0xff]
    %v395 = vld [vmem:[#allocation5 + $0x850] sm:$0xff]
    %v396 = vld [vmem:[#allocation5 + $0x858] sm:$0xff]
    %v397 = vld [vmem:[#allocation5 + $0x860] sm:$0xff]
    %v398 = vld [vmem:[#allocation5 + $0x868] sm:$0xff]
    %v399 = vld [vmem:[#allocation5 + $0x870] sm:$0xff]
    %v400 = vld [vmem:[#allocation5 + $0x878] sm:$0xff]
    %v401 = vld [vmem:[#allocation5 + $0x880] sm:$0xff]
    %v402 = vld [vmem:[#allocation5 + $0x888] sm:$0xff]
    %v403 = vld [vmem:[#allocation5 + $0x890] sm:$0xff]
    %v404 = vld [vmem:[#allocation5 + $0x898] sm:$0xff]
    %v405 = vld [vmem:[#allocation5 + $0x8a0] sm:$0xff]
    %v406 = vld [vmem:[#allocation5 + $0x8a8] sm:$0xff]
    %v407 = vld [vmem:[#allocation5 + $0x8b0] sm:$0xff]
    %v408 = vld [vmem:[#allocation5 + $0x8b8] sm:$0xff]
    %v409 = vld [vmem:[#allocation5 + $0x8c0] sm:$0xff]
    %v410 = vld [vmem:[#allocation5 + $0x8c8] sm:$0xff]
    %v411 = vld [vmem:[#allocation5 + $0x8d0] sm:$0xff]
    %v412 = vld [vmem:[#allocation5 + $0x8d8] sm:$0xff]
    %v413 = vld [vmem:[#allocation5 + $0x8e0] sm:$0xff]
    %v414 = vld [vmem:[#allocation5 + $0x8e8] sm:$0xff]
    %v415 = vld [vmem:[#allocation5 + $0x8f0] sm:$0xff]
    %v416 = vld [vmem:[#allocation5 + $0x8f8] sm:$0xff]
    %v417 = vld [vmem:[#allocation5 + $0x900] sm:$0xff]
    %v418 = vld [vmem:[#allocation5 + $0x908] sm:$0xff]
    %v419 = vld [vmem:[#allocation5 + $0x910] sm:$0xff]
    %v420 = vld [vmem:[#allocation5 + $0x918] sm:$0xff]
    %v421 = vld [vmem:[#allocation5 + $0x920] sm:$0xff]
    %v422 = vld [vmem:[#allocation5 + $0x928] sm:$0xff]
    %v423 = vld [vmem:[#allocation5 + $0x930] sm:$0xff]
    %v424 = vld [vmem:[#allocation5 + $0x938] sm:$0xff]
    %v425 = vld [vmem:[#allocation5 + $0x940] sm:$0xff]
    %v426 = vld [vmem:[#allocation5 + $0x948] sm:$0xff]
    %v427 = vld [vmem:[#allocation5 + $0x950] sm:$0xff]
    %v428 = vld [vmem:[#allocation5 + $0x958] sm:$0xff]
    %v429 = vld [vmem:[#allocation5 + $0x960] sm:$0xff]
    %v430 = vld [vmem:[#allocation5 + $0x968] sm:$0xff]
    %v431 = vld [vmem:[#allocation5 + $0x970] sm:$0xff]
    %v432 = vld [vmem:[#allocation5 + $0x978] sm:$0xff]
    %v433 = vld [vmem:[#allocation5 + $0x980] sm:$0xff]
    %v434 = vld [vmem:[#allocation5 + $0x988] sm:$0xff]
    %v435 = vld [vmem:[#allocation5 + $0x990] sm:$0xff]
    %v436 = vld [vmem:[#allocation5 + $0x998] sm:$0xff]
    %v437 = vld [vmem:[#allocation5 + $0x9a0] sm:$0xff]
    %v438 = vld [vmem:[#allocation5 + $0x9a8] sm:$0xff]
    %v439 = vld [vmem:[#allocation5 + $0x9b0] sm:$0xff]
    %v440 = vld [vmem:[#allocation5 + $0x9b8] sm:$0xff]
    %v441 = vld [vmem:[#allocation5 + $0x9c0] sm:$0xff]
    %v442 = vld [vmem:[#allocation5 + $0x9c8] sm:$0xff]
    %v443 = vld [vmem:[#allocation5 + $0x9d0] sm:$0xff]
    %v444 = vld [vmem:[#allocation5 + $0x9d8] sm:$0xff]
    %v445 = vld [vmem:[#allocation5 + $0x9e0] sm:$0xff]
    %v446 = vld [vmem:[#allocation5 + $0x9e8] sm:$0xff]
    %v447 = vld [vmem:[#allocation5 + $0x9f0] sm:$0xff]
    %v448 = vld [vmem:[#allocation5 + $0x9f8] sm:$0xff]
    %v449 = vld [vmem:[#allocation5 + $0xa00] sm:$0xff]
    %v450 = vld [vmem:[#allocation5 + $0xa08] sm:$0xff]
    %v451 = vld [vmem:[#allocation5 + $0xa10] sm:$0xff]
    %v452 = vld [vmem:[#allocation5 + $0xa18] sm:$0xff]
    %v453 = vld [vmem:[#allocation5 + $0xa20] sm:$0xff]
    %v454 = vld [vmem:[#allocation5 + $0xa28] sm:$0xff]
    %v455 = vld [vmem:[#allocation5 + $0xa30] sm:$0xff]
    %v456 = vld [vmem:[#allocation5 + $0xa38] sm:$0xff]
    %v457 = vld [vmem:[#allocation5 + $0xa40] sm:$0xff]
    %v458 = vld [vmem:[#allocation5 + $0xa48] sm:$0xff]
    %v459 = vld [vmem:[#allocation5 + $0xa50] sm:$0xff]
    %v460 = vld [vmem:[#allocation5 + $0xa58] sm:$0xff]
    %v461 = vld [vmem:[#allocation5 + $0xa60] sm:$0xff]
    %v462 = vld [vmem:[#allocation5 + $0xa68] sm:$0xff]
    %v463 = vld [vmem:[#allocation5 + $0xa70] sm:$0xff]
    %v464 = vld [vmem:[#allocation5 + $0xa78] sm:$0xff]
    %v465 = vld [vmem:[#allocation5 + $0xa80] sm:$0xff]
    %v466 = vld [vmem:[#allocation5 + $0xa88] sm:$0xff]
    %v467 = vld [vmem:[#allocation5 + $0xa90] sm:$0xff]
    %v468 = vld [vmem:[#allocation5 + $0xa98] sm:$0xff]
    %v469 = vld [vmem:[#allocation5 + $0xaa0] sm:$0xff]
    %v470 = vld [vmem:[#allocation5 + $0xaa8] sm:$0xff]
    %v471 = vld [vmem:[#allocation5 + $0xab0] sm:$0xff]
    %v472 = vld [vmem:[#allocation5 + $0xab8] sm:$0xff]
    %v473 = vld [vmem:[#allocation5 + $0xac0] sm:$0xff]
    %v474 = vld [vmem:[#allocation5 + $0xac8] sm:$0xff]
    %v475 = vld [vmem:[#allocation5 + $0xad0] sm:$0xff]
    %v476 = vld [vmem:[#allocation5 + $0xad8] sm:$0xff]
    %v477 = vld [vmem:[#allocation5 + $0xae0] sm:$0xff]
    %v478 = vld [vmem:[#allocation5 + $0xae8] sm:$0xff]
    %v479 = vld [vmem:[#allocation5 + $0xaf0] sm:$0xff]
    %v480 = vld [vmem:[#allocation5 + $0xaf8] sm:$0xff]
    %v481 = vld [vmem:[#allocation5 + $0xb00] sm:$0xff]
    %v482 = vld [vmem:[#allocation5 + $0xb08] sm:$0xff]
    %v483 = vld [vmem:[#allocation5 + $0xb10] sm:$0xff]
    %v484 = vld [vmem:[#allocation5 + $0xb18] sm:$0xff]
    %v485 = vld [vmem:[#allocation5 + $0xb20] sm:$0xff]
    %v486 = vld [vmem:[#allocation5 + $0xb28] sm:$0xff]
    %v487 = vld [vmem:[#allocation5 + $0xb30] sm:$0xff]
    %v488 = vld [vmem:[#allocation5 + $0xb38] sm:$0xff]
    %v489 = vld [vmem:[#allocation5 + $0xb40] sm:$0xff]
    %v490 = vld [vmem:[#allocation5 + $0xb48] sm:$0xff]
    %v491 = vld [vmem:[#allocation5 + $0xb50] sm:$0xff]
    %v492 = vld [vmem:[#allocation5 + $0xb58] sm:$0xff]
    %v493 = vld [vmem:[#allocation5 + $0xb60] sm:$0xff]
    %v494 = vld [vmem:[#allocation5 + $0xb68] sm:$0xff]
    %v495 = vld [vmem:[#allocation5 + $0xb70] sm:$0xff]
    %v496 = vld [vmem:[#allocation5 + $0xb78] sm:$0xff]
    %v497 = vld [vmem:[#allocation5 + $0xb80] sm:$0xff]
    %v498 = vld [vmem:[#allocation5 + $0xb88] sm:$0xff]
    %v499 = vld [vmem:[#allocation5 + $0xb90] sm:$0xff]
    %v500 = vld [vmem:[#allocation5 + $0xb98] sm:$0xff]
    %v501 = vld [vmem:[#allocation5 + $0xba0] sm:$0xff]
    %v502 = vld [vmem:[#allocation5 + $0xba8] sm:$0xff]
    %v503 = vld [vmem:[#allocation5 + $0xbb0] sm:$0xff]
    %v504 = vld [vmem:[#allocation5 + $0xbb8] sm:$0xff]
    %v505 = vld [vmem:[#allocation5 + $0xbc0] sm:$0xff]
    %v506 = vld [vmem:[#allocation5 + $0xbc8] sm:$0xff]
    %v507 = vld [vmem:[#allocation5 + $0xbd0] sm:$0xff]
    %v508 = vld [vmem:[#allocation5 + $0xbd8] sm:$0xff]
    %v509 = vld [vmem:[#allocation5 + $0xbe0] sm:$0xff]
    %v510 = vld [vmem:[#allocation5 + $0xbe8] sm:$0xff]
    %v511 = vld [vmem:[#allocation5 + $0xbf0] sm:$0xff]
    %v512 = vld [vmem:[#allocation5 + $0xbf8] sm:$0xff]
    %v513 = vld [vmem:[#allocation5 + $0xc00] sm:$0xff]
    %v514 = vld [vmem:[#allocation5 + $0xc08] sm:$0xff]
    %v515 = vld [vmem:[#allocation5 + $0xc10] sm:$0xff]
    %v516 = vld [vmem:[#allocation5 + $0xc18] sm:$0xff]
    %v517 = vld [vmem:[#allocation5 + $0xc20] sm:$0xff]
    %v518 = vld [vmem:[#allocation5 + $0xc28] sm:$0xff]
    %v519 = vld [vmem:[#allocation5 + $0xc30] sm:$0xff]
    %v520 = vld [vmem:[#allocation5 + $0xc38] sm:$0xff]
    %v521 = vld [vmem:[#allocation7] sm:$0xff]
    %v523 = vlaneseq
    %v524 = vshrl.u32 %v523, 7
    %v525 = vsub.s32 0, %v524
    %v526 = vrot.slane %v521, %v525
    %v527 = vlaneseq
    %v528 = vshrl.u32 %v527, 7
    %v529 = vsub.s32 1, %v528
    %v530 = vrot.slane %v521, %v529
    %v531 = vlaneseq
    %v532 = vshrl.u32 %v531, 7
    %v533 = vsub.s32 2, %v532
    %v534 = vrot.slane %v521, %v533
    %v535 = vlaneseq
    %v536 = vshrl.u32 %v535, 7
    %v537 = vsub.s32 3, %v536
    %v538 = vrot.slane %v521, %v537
    %v539 = vlaneseq
    %v540 = vshrl.u32 %v539, 7
    %v541 = vsub.s32 4, %v540
    %v542 = vrot.slane %v521, %v541
    %v543 = vlaneseq
    %v544 = vshrl.u32 %v543, 7
    %v545 = vsub.s32 5, %v544
    %v546 = vrot.slane %v521, %v545
    %v547 = vlaneseq
    %v548 = vshrl.u32 %v547, 7
    %v549 = vsub.s32 6, %v548
    %v550 = vrot.slane %v521, %v549
    %v551 = vlaneseq
    %v552 = vshrl.u32 %v551, 7
    %v553 = vsub.s32 7, %v552
    %v554 = vrot.slane %v521, %v553
    %v955 = vunpack.c.l.b16 %v129
    %v956 = vunpack.c.h.b16 %v129
    %v957 = vunpack.c.l.b16 %v130
    %v958 = vunpack.c.h.b16 %v130
    %v959 = vunpack.c.l.b16 %v131
    %v960 = vunpack.c.h.b16 %v131
    %v961 = vunpack.c.l.b16 %v132
    %v962 = vunpack.c.h.b16 %v132
    %v963 = vunpack.c.l.b16 %v133
    %v964 = vunpack.c.h.b16 %v133
    %v965 = vunpack.c.l.b16 %v134
    %v966 = vunpack.c.h.b16 %v134
    %v967 = vunpack.c.l.b16 %v135
    %v968 = vunpack.c.h.b16 %v135
    %v969 = vunpack.c.l.b16 %v136
    %v970 = vunpack.c.h.b16 %v136
    %v971 = vunpack.c.l.b16 %v137
    %v972 = vunpack.c.h.b16 %v137
    %v973 = vunpack.c.l.b16 %v138
    %v974 = vunpack.c.h.b16 %v138
    %v975 = vunpack.c.l.b16 %v139
    %v976 = vunpack.c.h.b16 %v139
    %v977 = vunpack.c.l.b16 %v140
    %v978 = vunpack.c.h.b16 %v140
    %v979 = vunpack.c.l.b16 %v141
    %v980 = vunpack.c.h.b16 %v141
    %v981 = vunpack.c.l.b16 %v142
    %v982 = vunpack.c.h.b16 %v142
    %v983 = vunpack.c.l.b16 %v143
    %v984 = vunpack.c.h.b16 %v143
    %v985 = vunpack.c.l.b16 %v144
    %v986 = vunpack.c.h.b16 %v144
    %v987 = vunpack.c.l.b16 %v145
    %v988 = vunpack.c.h.b16 %v145
    %v989 = vunpack.c.l.b16 %v146
    %v990 = vunpack.c.h.b16 %v146
    %v991 = vunpack.c.l.b16 %v147
    %v992 = vunpack.c.h.b16 %v147
    %v993 = vunpack.c.l.b16 %v148
    %v994 = vunpack.c.h.b16 %v148
    %v995 = vunpack.c.l.b16 %v149
    %v996 = vunpack.c.h.b16 %v149
    %v997 = vunpack.c.l.b16 %v150
    %v998 = vunpack.c.h.b16 %v150
    %v999 = vunpack.c.l.b16 %v151
    %v1000 = vunpack.c.h.b16 %v151
    %v1001 = vunpack.c.l.b16 %v152
    %v1002 = vunpack.c.h.b16 %v152
    %v1003 = vunpack.c.l.b16 %v153
    %v1004 = vunpack.c.h.b16 %v153
    %v1005 = vunpack.c.l.b16 %v154
    %v1006 = vunpack.c.h.b16 %v154
    %v1007 = vunpack.c.l.b16 %v155
    %v1008 = vunpack.c.h.b16 %v155
    %v1009 = vunpack.c.l.b16 %v156
    %v1010 = vunpack.c.h.b16 %v156
    %v1011 = vunpack.c.l.b16 %v157
    %v1012 = vunpack.c.h.b16 %v157
    %v1013 = vunpack.c.l.b16 %v158
    %v1014 = vunpack.c.h.b16 %v158
    %v1015 = vunpack.c.l.b16 %v159
    %v1016 = vunpack.c.h.b16 %v159
    %v1017 = vunpack.c.l.b16 %v160
    %v1018 = vunpack.c.h.b16 %v160
    %v1019 = vunpack.c.l.b16 %v161
    %v1020 = vunpack.c.h.b16 %v161
    %v1021 = vunpack.c.l.b16 %v162
    %v1022 = vunpack.c.h.b16 %v162
    %v1023 = vunpack.c.l.b16 %v163
    %v1024 = vunpack.c.h.b16 %v163
    %v1025 = vunpack.c.l.b16 %v164
    %v1026 = vunpack.c.h.b16 %v164
    %v1027 = vunpack.c.l.b16 %v165
    %v1028 = vunpack.c.h.b16 %v165
    %v1029 = vunpack.c.l.b16 %v166
    %v1030 = vunpack.c.h.b16 %v166
    %v1031 = vunpack.c.l.b16 %v167
    %v1032 = vunpack.c.h.b16 %v167
    %v1033 = vunpack.c.l.b16 %v168
    %v1034 = vunpack.c.h.b16 %v168
    %v1035 = vunpack.c.l.b16 %v169
    %v1036 = vunpack.c.h.b16 %v169
    %v1037 = vunpack.c.l.b16 %v170
    %v1038 = vunpack.c.h.b16 %v170
    %v1039 = vunpack.c.l.b16 %v171
    %v1040 = vunpack.c.h.b16 %v171
    %v1041 = vunpack.c.l.b16 %v172
    %v1042 = vunpack.c.h.b16 %v172
    %v1043 = vunpack.c.l.b16 %v173
    %v1044 = vunpack.c.h.b16 %v173
    %v1045 = vunpack.c.l.b16 %v174
    %v1046 = vunpack.c.h.b16 %v174
    %v1047 = vunpack.c.l.b16 %v175
    %v1048 = vunpack.c.h.b16 %v175
    %v1049 = vunpack.c.l.b16 %v176
    %v1050 = vunpack.c.h.b16 %v176
    %v1051 = vunpack.c.l.b16 %v177
    %v1052 = vunpack.c.h.b16 %v177
    %v1053 = vunpack.c.l.b16 %v178
    %v1054 = vunpack.c.h.b16 %v178
    %v1055 = vunpack.c.l.b16 %v179
    %v1056 = vunpack.c.h.b16 %v179
    %v1057 = vunpack.c.l.b16 %v180
    %v1058 = vunpack.c.h.b16 %v180
    %v1059 = vunpack.c.l.b16 %v181
    %v1060 = vunpack.c.h.b16 %v181
    %v1061 = vunpack.c.l.b16 %v182
    %v1062 = vunpack.c.h.b16 %v182
    %v1063 = vunpack.c.l.b16 %v183
    %v1064 = vunpack.c.h.b16 %v183
    %v1065 = vunpack.c.l.b16 %v184
    %v1066 = vunpack.c.h.b16 %v184
    %v1067 = vunpack.c.l.b16 %v185
    %v1068 = vunpack.c.h.b16 %v185
    %v1069 = vunpack.c.l.b16 %v186
    %v1070 = vunpack.c.h.b16 %v186
    %v1071 = vunpack.c.l.b16 %v187
    %v1072 = vunpack.c.h.b16 %v187
    %v1073 = vunpack.c.l.b16 %v188
    %v1074 = vunpack.c.h.b16 %v188
    %v1075 = vunpack.c.l.b16 %v189
    %v1076 = vunpack.c.h.b16 %v189
    %v1077 = vunpack.c.l.b16 %v190
    %v1078 = vunpack.c.h.b16 %v190
    %v1079 = vunpack.c.l.b16 %v191
    %v1080 = vunpack.c.h.b16 %v191
    %v1081 = vunpack.c.l.b16 %v192
    %v1082 = vunpack.c.h.b16 %v192
    %v1083 = vunpack.c.l.b16 %v193
    %v1084 = vunpack.c.h.b16 %v193
    %v1085 = vunpack.c.l.b16 %v194
    %v1086 = vunpack.c.h.b16 %v194
    %v1087 = vunpack.c.l.b16 %v195
    %v1088 = vunpack.c.h.b16 %v195
    %v1089 = vunpack.c.l.b16 %v196
    %v1090 = vunpack.c.h.b16 %v196
    %v1091 = vunpack.c.l.b16 %v197
    %v1092 = vunpack.c.h.b16 %v197
    %v1093 = vunpack.c.l.b16 %v198
    %v1094 = vunpack.c.h.b16 %v198
    %v1095 = vunpack.c.l.b16 %v199
    %v1096 = vunpack.c.h.b16 %v199
    %v1097 = vunpack.c.l.b16 %v200
    %v1098 = vunpack.c.h.b16 %v200
    %v1099 = vunpack.c.l.b16 %v201
    %v1100 = vunpack.c.h.b16 %v201
    %v1101 = vunpack.c.l.b16 %v202
    %v1102 = vunpack.c.h.b16 %v202
    %v1103 = vunpack.c.l.b16 %v203
    %v1104 = vunpack.c.h.b16 %v203
    %v1105 = vunpack.c.l.b16 %v204
    %v1106 = vunpack.c.h.b16 %v204
    %v1107 = vunpack.c.l.b16 %v205
    %v1108 = vunpack.c.h.b16 %v205
    %v1109 = vunpack.c.l.b16 %v206
    %v1110 = vunpack.c.h.b16 %v206
    %v1111 = vunpack.c.l.b16 %v207
    %v1112 = vunpack.c.h.b16 %v207
    %v1113 = vunpack.c.l.b16 %v208
    %v1114 = vunpack.c.h.b16 %v208
    %v1115 = vunpack.c.l.b16 %v209
    %v1116 = vunpack.c.h.b16 %v209
    %v1117 = vunpack.c.l.b16 %v210
    %v1118 = vunpack.c.h.b16 %v210
    %v1119 = vunpack.c.l.b16 %v211
    %v1120 = vunpack.c.h.b16 %v211
    %v1121 = vunpack.c.l.b16 %v212
    %v1122 = vunpack.c.h.b16 %v212
    %v1123 = vunpack.c.l.b16 %v213
    %v1124 = vunpack.c.h.b16 %v213
    %v1125 = vunpack.c.l.b16 %v214
    %v1126 = vunpack.c.h.b16 %v214
    %v1127 = vunpack.c.l.b16 %v215
    %v1128 = vunpack.c.h.b16 %v215
    %v1129 = vunpack.c.l.b16 %v216
    %v1130 = vunpack.c.h.b16 %v216
    %v1131 = vunpack.c.l.b16 %v217
    %v1132 = vunpack.c.h.b16 %v217
    %v1133 = vunpack.c.l.b16 %v218
    %v1134 = vunpack.c.h.b16 %v218
    %v1135 = vunpack.c.l.b16 %v219
    %v1136 = vunpack.c.h.b16 %v219
    %v1137 = vunpack.c.l.b16 %v220
    %v1138 = vunpack.c.h.b16 %v220
    %v1139 = vunpack.c.l.b16 %v221
    %v1140 = vunpack.c.h.b16 %v221
    %v1141 = vunpack.c.l.b16 %v222
    %v1142 = vunpack.c.h.b16 %v222
    %v1143 = vunpack.c.l.b16 %v223
    %v1144 = vunpack.c.h.b16 %v223
    %v1145 = vunpack.c.l.b16 %v224
    %v1146 = vunpack.c.h.b16 %v224
    %v1147 = vunpack.c.l.b16 %v225
    %v1148 = vunpack.c.h.b16 %v225
    %v1149 = vunpack.c.l.b16 %v226
    %v1150 = vunpack.c.h.b16 %v226
    %v1151 = vunpack.c.l.b16 %v227
    %v1152 = vunpack.c.h.b16 %v227
    %v1153 = vunpack.c.l.b16 %v228
    %v1154 = vunpack.c.h.b16 %v228
    %v1155 = vunpack.c.l.b16 %v229
    %v1156 = vunpack.c.h.b16 %v229
    %v1157 = vunpack.c.l.b16 %v230
    %v1158 = vunpack.c.h.b16 %v230
    %v1159 = vunpack.c.l.b16 %v231
    %v1160 = vunpack.c.h.b16 %v231
    %v1161 = vunpack.c.l.b16 %v232
    %v1162 = vunpack.c.h.b16 %v232
    %v1163 = vunpack.c.l.b16 %v233
    %v1164 = vunpack.c.h.b16 %v233
    %v1165 = vunpack.c.l.b16 %v234
    %v1166 = vunpack.c.h.b16 %v234
    %v1167 = vunpack.c.l.b16 %v235
    %v1168 = vunpack.c.h.b16 %v235
    %v1169 = vunpack.c.l.b16 %v236
    %v1170 = vunpack.c.h.b16 %v236
    %v1171 = vunpack.c.l.b16 %v237
    %v1172 = vunpack.c.h.b16 %v237
    %v1173 = vunpack.c.l.b16 %v238
    %v1174 = vunpack.c.h.b16 %v238
    %v1175 = vunpack.c.l.b16 %v239
    %v1176 = vunpack.c.h.b16 %v239
    %v1177 = vunpack.c.l.b16 %v240
    %v1178 = vunpack.c.h.b16 %v240
    %v1179 = vunpack.c.l.b16 %v241
    %v1180 = vunpack.c.h.b16 %v241
    %v1181 = vunpack.c.l.b16 %v242
    %v1182 = vunpack.c.h.b16 %v242
    %v1183 = vunpack.c.l.b16 %v243
    %v1184 = vunpack.c.h.b16 %v243
    %v1185 = vunpack.c.l.b16 %v244
    %v1186 = vunpack.c.h.b16 %v244
    %v1187 = vunpack.c.l.b16 %v245
    %v1188 = vunpack.c.h.b16 %v245
    %v1189 = vunpack.c.l.b16 %v246
    %v1190 = vunpack.c.h.b16 %v246
    %v1191 = vunpack.c.l.b16 %v247
    %v1192 = vunpack.c.h.b16 %v247
    %v1193 = vunpack.c.l.b16 %v248
    %v1194 = vunpack.c.h.b16 %v248
    %v1195 = vunpack.c.l.b16 %v249
    %v1196 = vunpack.c.h.b16 %v249
    %v1197 = vunpack.c.l.b16 %v250
    %v1198 = vunpack.c.h.b16 %v250
    %v1199 = vunpack.c.l.b16 %v251
    %v1200 = vunpack.c.h.b16 %v251
    %v1201 = vunpack.c.l.b16 %v252
    %v1202 = vunpack.c.h.b16 %v252
    %v1203 = vunpack.c.l.b16 %v253
    %v1204 = vunpack.c.h.b16 %v253
    %v1205 = vunpack.c.l.b16 %v254
    %v1206 = vunpack.c.h.b16 %v254
    %v1207 = vunpack.c.l.b16 %v255
    %v1208 = vunpack.c.h.b16 %v255
    %v1209 = vunpack.c.l.b16 %v256
    %v1210 = vunpack.c.h.b16 %v256
    %v1211 = vunpack.c.l.b16 %v257
    %v1212 = vunpack.c.h.b16 %v257
    %v1213 = vunpack.c.l.b16 %v258
    %v1214 = vunpack.c.h.b16 %v258
    %v1215 = vunpack.c.l.b16 %v259
    %v1216 = vunpack.c.h.b16 %v259
    %v1217 = vunpack.c.l.b16 %v260
    %v1218 = vunpack.c.h.b16 %v260
    %v1219 = vunpack.c.l.b16 %v261
    %v1220 = vunpack.c.h.b16 %v261
    %v1221 = vunpack.c.l.b16 %v262
    %v1222 = vunpack.c.h.b16 %v262
    %v1223 = vunpack.c.l.b16 %v263
    %v1224 = vunpack.c.h.b16 %v263
    %v1225 = vunpack.c.l.b16 %v264
    %v1226 = vunpack.c.h.b16 %v264
    %v1227 = vunpack.c.l.b16 %v265
    %v1228 = vunpack.c.h.b16 %v265
    %v1229 = vunpack.c.l.b16 %v266
    %v1230 = vunpack.c.h.b16 %v266
    %v1231 = vunpack.c.l.b16 %v267
    %v1232 = vunpack.c.h.b16 %v267
    %v1233 = vunpack.c.l.b16 %v268
    %v1234 = vunpack.c.h.b16 %v268
    %v1235 = vunpack.c.l.b16 %v269
    %v1236 = vunpack.c.h.b16 %v269
    %v1237 = vunpack.c.l.b16 %v270
    %v1238 = vunpack.c.h.b16 %v270
    %v1239 = vunpack.c.l.b16 %v271
    %v1240 = vunpack.c.h.b16 %v271
    %v1241 = vunpack.c.l.b16 %v272
    %v1242 = vunpack.c.h.b16 %v272
    %v1243 = vunpack.c.l.b16 %v273
    %v1244 = vunpack.c.h.b16 %v273
    %v1245 = vunpack.c.l.b16 %v274
    %v1246 = vunpack.c.h.b16 %v274
    %v1247 = vunpack.c.l.b16 %v275
    %v1248 = vunpack.c.h.b16 %v275
    %v1249 = vunpack.c.l.b16 %v276
    %v1250 = vunpack.c.h.b16 %v276
    %v1251 = vunpack.c.l.b16 %v277
    %v1252 = vunpack.c.h.b16 %v277
    %v1253 = vunpack.c.l.b16 %v278
    %v1254 = vunpack.c.h.b16 %v278
    %v1255 = vunpack.c.l.b16 %v279
    %v1256 = vunpack.c.h.b16 %v279
    %v1257 = vunpack.c.l.b16 %v280
    %v1258 = vunpack.c.h.b16 %v280
    %v1259 = vunpack.c.l.b16 %v281
    %v1260 = vunpack.c.h.b16 %v281
    %v1261 = vunpack.c.l.b16 %v282
    %v1262 = vunpack.c.h.b16 %v282
    %v1263 = vunpack.c.l.b16 %v283
    %v1264 = vunpack.c.h.b16 %v283
    %v1265 = vunpack.c.l.b16 %v284
    %v1266 = vunpack.c.h.b16 %v284
    %v1267 = vunpack.c.l.b16 %v285
    %v1268 = vunpack.c.h.b16 %v285
    %v1269 = vunpack.c.l.b16 %v286
    %v1270 = vunpack.c.h.b16 %v286
    %v1271 = vunpack.c.l.b16 %v287
    %v1272 = vunpack.c.h.b16 %v287
    %v1273 = vunpack.c.l.b16 %v288
    %v1274 = vunpack.c.h.b16 %v288
    %v1275 = vunpack.c.l.b16 %v289
    %v1276 = vunpack.c.h.b16 %v289
    %v1277 = vunpack.c.l.b16 %v290
    %v1278 = vunpack.c.h.b16 %v290
    %v1279 = vunpack.c.l.b16 %v291
    %v1280 = vunpack.c.h.b16 %v291
    %v1281 = vunpack.c.l.b16 %v292
    %v1282 = vunpack.c.h.b16 %v292
    %v1283 = vunpack.c.l.b16 %v293
    %v1284 = vunpack.c.h.b16 %v293
    %v1285 = vunpack.c.l.b16 %v294
    %v1286 = vunpack.c.h.b16 %v294
    %v1287 = vunpack.c.l.b16 %v295
    %v1288 = vunpack.c.h.b16 %v295
    %v1289 = vunpack.c.l.b16 %v296
    %v1290 = vunpack.c.h.b16 %v296
    %v1291 = vunpack.c.l.b16 %v297
    %v1292 = vunpack.c.h.b16 %v297
    %v1293 = vunpack.c.l.b16 %v298
    %v1294 = vunpack.c.h.b16 %v298
    %v1295 = vunpack.c.l.b16 %v299
    %v1296 = vunpack.c.h.b16 %v299
    %v1297 = vunpack.c.l.b16 %v300
    %v1298 = vunpack.c.h.b16 %v300
    %v1299 = vunpack.c.l.b16 %v301
    %v1300 = vunpack.c.h.b16 %v301
    %v1301 = vunpack.c.l.b16 %v302
    %v1302 = vunpack.c.h.b16 %v302
    %v1303 = vunpack.c.l.b16 %v303
    %v1304 = vunpack.c.h.b16 %v303
    %v1305 = vunpack.c.l.b16 %v304
    %v1306 = vunpack.c.h.b16 %v304
    %v1307 = vunpack.c.l.b16 %v305
    %v1308 = vunpack.c.h.b16 %v305
    %v1309 = vunpack.c.l.b16 %v306
    %v1310 = vunpack.c.h.b16 %v306
    %v1311 = vunpack.c.l.b16 %v307
    %v1312 = vunpack.c.h.b16 %v307
    %v1313 = vunpack.c.l.b16 %v308
    %v1314 = vunpack.c.h.b16 %v308
    %v1315 = vunpack.c.l.b16 %v309
    %v1316 = vunpack.c.h.b16 %v309
    %v1317 = vunpack.c.l.b16 %v310
    %v1318 = vunpack.c.h.b16 %v310
    %v1319 = vunpack.c.l.b16 %v311
    %v1320 = vunpack.c.h.b16 %v311
    %v1321 = vunpack.c.l.b16 %v312
    %v1322 = vunpack.c.h.b16 %v312
    %v1323 = vunpack.c.l.b16 %v313
    %v1324 = vunpack.c.h.b16 %v313
    %v1325 = vunpack.c.l.b16 %v314
    %v1326 = vunpack.c.h.b16 %v314
    %v1327 = vunpack.c.l.b16 %v315
    %v1328 = vunpack.c.h.b16 %v315
    %v1329 = vunpack.c.l.b16 %v316
    %v1330 = vunpack.c.h.b16 %v316
    %v1331 = vunpack.c.l.b16 %v317
    %v1332 = vunpack.c.h.b16 %v317
    %v1333 = vunpack.c.l.b16 %v318
    %v1334 = vunpack.c.h.b16 %v318
    %v1335 = vunpack.c.l.b16 %v319
    %v1336 = vunpack.c.h.b16 %v319
    %v1337 = vunpack.c.l.b16 %v320
    %v1338 = vunpack.c.h.b16 %v320
    %v1339 = vunpack.c.l.b16 %v321
    %v1340 = vunpack.c.h.b16 %v321
    %v1341 = vunpack.c.l.b16 %v322
    %v1342 = vunpack.c.h.b16 %v322
    %v1343 = vunpack.c.l.b16 %v323
    %v1344 = vunpack.c.h.b16 %v323
    %v1345 = vunpack.c.l.b16 %v324
    %v1346 = vunpack.c.h.b16 %v324
    %v1347 = vunpack.c.l.b16 %v325
    %v1348 = vunpack.c.h.b16 %v325
    %v1349 = vunpack.c.l.b16 %v326
    %v1350 = vunpack.c.h.b16 %v326
    %v1351 = vunpack.c.l.b16 %v327
    %v1352 = vunpack.c.h.b16 %v327
    %v1353 = vunpack.c.l.b16 %v328
    %v1354 = vunpack.c.h.b16 %v328
    %v1355 = vunpack.c.l.b16 %v329
    %v1356 = vunpack.c.h.b16 %v329
    %v1357 = vunpack.c.l.b16 %v330
    %v1358 = vunpack.c.h.b16 %v330
    %v1359 = vunpack.c.l.b16 %v331
    %v1360 = vunpack.c.h.b16 %v331
    %v1361 = vunpack.c.l.b16 %v332
    %v1362 = vunpack.c.h.b16 %v332
    %v1363 = vunpack.c.l.b16 %v333
    %v1364 = vunpack.c.h.b16 %v333
    %v1365 = vunpack.c.l.b16 %v334
    %v1366 = vunpack.c.h.b16 %v334
    %v1367 = vunpack.c.l.b16 %v335
    %v1368 = vunpack.c.h.b16 %v335
    %v1369 = vunpack.c.l.b16 %v336
    %v1370 = vunpack.c.h.b16 %v336
    %v1371 = vunpack.c.l.b16 %v337
    %v1372 = vunpack.c.h.b16 %v337
    %v1373 = vunpack.c.l.b16 %v338
    %v1374 = vunpack.c.h.b16 %v338
    %v1375 = vunpack.c.l.b16 %v339
    %v1376 = vunpack.c.h.b16 %v339
    %v1377 = vunpack.c.l.b16 %v340
    %v1378 = vunpack.c.h.b16 %v340
    %v1379 = vunpack.c.l.b16 %v341
    %v1380 = vunpack.c.h.b16 %v341
    %v1381 = vunpack.c.l.b16 %v342
    %v1382 = vunpack.c.h.b16 %v342
    %v1383 = vunpack.c.l.b16 %v343
    %v1384 = vunpack.c.h.b16 %v343
    %v1385 = vunpack.c.l.b16 %v344
    %v1386 = vunpack.c.h.b16 %v344
    %v1387 = vunpack.c.l.b16 %v345
    %v1388 = vunpack.c.h.b16 %v345
    %v1389 = vunpack.c.l.b16 %v346
    %v1390 = vunpack.c.h.b16 %v346
    %v1391 = vunpack.c.l.b16 %v347
    %v1392 = vunpack.c.h.b16 %v347
    %v1393 = vunpack.c.l.b16 %v348
    %v1394 = vunpack.c.h.b16 %v348
    %v1395 = vunpack.c.l.b16 %v349
    %v1396 = vunpack.c.h.b16 %v349
    %v1397 = vunpack.c.l.b16 %v350
    %v1398 = vunpack.c.h.b16 %v350
    %v1399 = vunpack.c.l.b16 %v351
    %v1400 = vunpack.c.h.b16 %v351
    %v1401 = vunpack.c.l.b16 %v352
    %v1402 = vunpack.c.h.b16 %v352
    %v1403 = vunpack.c.l.b16 %v353
    %v1404 = vunpack.c.h.b16 %v353
    %v1405 = vunpack.c.l.b16 %v354
    %v1406 = vunpack.c.h.b16 %v354
    %v1407 = vunpack.c.l.b16 %v355
    %v1408 = vunpack.c.h.b16 %v355
    %v1409 = vunpack.c.l.b16 %v356
    %v1410 = vunpack.c.h.b16 %v356
    %v1411 = vunpack.c.l.b16 %v357
    %v1412 = vunpack.c.h.b16 %v357
    %v1413 = vunpack.c.l.b16 %v358
    %v1414 = vunpack.c.h.b16 %v358
    %v1415 = vunpack.c.l.b16 %v359
    %v1416 = vunpack.c.h.b16 %v359
    %v1417 = vunpack.c.l.b16 %v360
    %v1418 = vunpack.c.h.b16 %v360
    %v1419 = vunpack.c.l.b16 %v361
    %v1420 = vunpack.c.h.b16 %v361
    %v1421 = vunpack.c.l.b16 %v362
    %v1422 = vunpack.c.h.b16 %v362
    %v1423 = vunpack.c.l.b16 %v363
    %v1424 = vunpack.c.h.b16 %v363
    %v1425 = vunpack.c.l.b16 %v364
    %v1426 = vunpack.c.h.b16 %v364
    %v1427 = vunpack.c.l.b16 %v365
    %v1428 = vunpack.c.h.b16 %v365
    %v1429 = vunpack.c.l.b16 %v366
    %v1430 = vunpack.c.h.b16 %v366
    %v1431 = vunpack.c.l.b16 %v367
    %v1432 = vunpack.c.h.b16 %v367
    %v1433 = vunpack.c.l.b16 %v368
    %v1434 = vunpack.c.h.b16 %v368
    %v1435 = vunpack.c.l.b16 %v369
    %v1436 = vunpack.c.h.b16 %v369
    %v1437 = vunpack.c.l.b16 %v370
    %v1438 = vunpack.c.h.b16 %v370
    %v1439 = vunpack.c.l.b16 %v371
    %v1440 = vunpack.c.h.b16 %v371
    %v1441 = vunpack.c.l.b16 %v372
    %v1442 = vunpack.c.h.b16 %v372
    %v1443 = vunpack.c.l.b16 %v373
    %v1444 = vunpack.c.h.b16 %v373
    %v1445 = vunpack.c.l.b16 %v374
    %v1446 = vunpack.c.h.b16 %v374
    %v1447 = vunpack.c.l.b16 %v375
    %v1448 = vunpack.c.h.b16 %v375
    %v1449 = vunpack.c.l.b16 %v376
    %v1450 = vunpack.c.h.b16 %v376
    %v1451 = vunpack.c.l.b16 %v377
    %v1452 = vunpack.c.h.b16 %v377
    %v1453 = vunpack.c.l.b16 %v378
    %v1454 = vunpack.c.h.b16 %v378
    %v1455 = vunpack.c.l.b16 %v379
    %v1456 = vunpack.c.h.b16 %v379
    %v1457 = vunpack.c.l.b16 %v380
    %v1458 = vunpack.c.h.b16 %v380
    %v1459 = vunpack.c.l.b16 %v381
    %v1460 = vunpack.c.h.b16 %v381
    %v1461 = vunpack.c.l.b16 %v382
    %v1462 = vunpack.c.h.b16 %v382
    %v1463 = vunpack.c.l.b16 %v383
    %v1464 = vunpack.c.h.b16 %v383
    %v1465 = vunpack.c.l.b16 %v384
    %v1466 = vunpack.c.h.b16 %v384
    %v1467 = vunpack.c.l.b16 %v385
    %v1468 = vunpack.c.h.b16 %v385
    %v1469 = vunpack.c.l.b16 %v386
    %v1470 = vunpack.c.h.b16 %v386
    %v1471 = vunpack.c.l.b16 %v387
    %v1472 = vunpack.c.h.b16 %v387
    %v1473 = vunpack.c.l.b16 %v388
    %v1474 = vunpack.c.h.b16 %v388
    %v1475 = vunpack.c.l.b16 %v389
    %v1476 = vunpack.c.h.b16 %v389
    %v1477 = vunpack.c.l.b16 %v390
    %v1478 = vunpack.c.h.b16 %v390
    %v1479 = vunpack.c.l.b16 %v391
    %v1480 = vunpack.c.h.b16 %v391
    %v1481 = vunpack.c.l.b16 %v392
    %v1482 = vunpack.c.h.b16 %v392
    %v1483 = vunpack.c.l.b16 %v393
    %v1484 = vunpack.c.h.b16 %v393
    %v1485 = vunpack.c.l.b16 %v394
    %v1486 = vunpack.c.h.b16 %v394
    %v1487 = vunpack.c.l.b16 %v395
    %v1488 = vunpack.c.h.b16 %v395
    %v1489 = vunpack.c.l.b16 %v396
    %v1490 = vunpack.c.h.b16 %v396
    %v1491 = vunpack.c.l.b16 %v397
    %v1492 = vunpack.c.h.b16 %v397
    %v1493 = vunpack.c.l.b16 %v398
    %v1494 = vunpack.c.h.b16 %v398
    %v1495 = vunpack.c.l.b16 %v399
    %v1496 = vunpack.c.h.b16 %v399
    %v1497 = vunpack.c.l.b16 %v400
    %v1498 = vunpack.c.h.b16 %v400
    %v1499 = vunpack.c.l.b16 %v401
    %v1500 = vunpack.c.h.b16 %v401
    %v1501 = vunpack.c.l.b16 %v402
    %v1502 = vunpack.c.h.b16 %v402
    %v1503 = vunpack.c.l.b16 %v403
    %v1504 = vunpack.c.h.b16 %v403
    %v1505 = vunpack.c.l.b16 %v404
    %v1506 = vunpack.c.h.b16 %v404
    %v1507 = vunpack.c.l.b16 %v405
    %v1508 = vunpack.c.h.b16 %v405
    %v1509 = vunpack.c.l.b16 %v406
    %v1510 = vunpack.c.h.b16 %v406
    %v1511 = vunpack.c.l.b16 %v407
    %v1512 = vunpack.c.h.b16 %v407
    %v1513 = vunpack.c.l.b16 %v408
    %v1514 = vunpack.c.h.b16 %v408
    %v1515 = vunpack.c.l.b16 %v409
    %v1516 = vunpack.c.h.b16 %v409
    %v1517 = vunpack.c.l.b16 %v410
    %v1518 = vunpack.c.h.b16 %v410
    %v1519 = vunpack.c.l.b16 %v411
    %v1520 = vunpack.c.h.b16 %v411
    %v1521 = vunpack.c.l.b16 %v412
    %v1522 = vunpack.c.h.b16 %v412
    %v1523 = vunpack.c.l.b16 %v413
    %v1524 = vunpack.c.h.b16 %v413
    %v1525 = vunpack.c.l.b16 %v414
    %v1526 = vunpack.c.h.b16 %v414
    %v1527 = vunpack.c.l.b16 %v415
    %v1528 = vunpack.c.h.b16 %v415
    %v1529 = vunpack.c.l.b16 %v416
    %v1530 = vunpack.c.h.b16 %v416
    %v1531 = vunpack.c.l.b16 %v417
    %v1532 = vunpack.c.h.b16 %v417
    %v1533 = vunpack.c.l.b16 %v418
    %v1534 = vunpack.c.h.b16 %v418
    %v1535 = vunpack.c.l.b16 %v419
    %v1536 = vunpack.c.h.b16 %v419
    %v1537 = vunpack.c.l.b16 %v420
    %v1538 = vunpack.c.h.b16 %v420
    %v1539 = vunpack.c.l.b16 %v421
    %v1540 = vunpack.c.h.b16 %v421
    %v1541 = vunpack.c.l.b16 %v422
    %v1542 = vunpack.c.h.b16 %v422
    %v1543 = vunpack.c.l.b16 %v423
    %v1544 = vunpack.c.h.b16 %v423
    %v1545 = vunpack.c.l.b16 %v424
    %v1546 = vunpack.c.h.b16 %v424
    %v1547 = vunpack.c.l.b16 %v425
    %v1548 = vunpack.c.h.b16 %v425
    %v1549 = vunpack.c.l.b16 %v426
    %v1550 = vunpack.c.h.b16 %v426
    %v1551 = vunpack.c.l.b16 %v427
    %v1552 = vunpack.c.h.b16 %v427
    %v1553 = vunpack.c.l.b16 %v428
    %v1554 = vunpack.c.h.b16 %v428
    %v1555 = vunpack.c.l.b16 %v429
    %v1556 = vunpack.c.h.b16 %v429
    %v1557 = vunpack.c.l.b16 %v430
    %v1558 = vunpack.c.h.b16 %v430
    %v1559 = vunpack.c.l.b16 %v431
    %v1560 = vunpack.c.h.b16 %v431
    %v1561 = vunpack.c.l.b16 %v432
    %v1562 = vunpack.c.h.b16 %v432
    %v1563 = vunpack.c.l.b16 %v433
    %v1564 = vunpack.c.h.b16 %v433
    %v1565 = vunpack.c.l.b16 %v434
    %v1566 = vunpack.c.h.b16 %v434
    %v1567 = vunpack.c.l.b16 %v435
    %v1568 = vunpack.c.h.b16 %v435
    %v1569 = vunpack.c.l.b16 %v436
    %v1570 = vunpack.c.h.b16 %v436
    %v1571 = vunpack.c.l.b16 %v437
    %v1572 = vunpack.c.h.b16 %v437
    %v1573 = vunpack.c.l.b16 %v438
    %v1574 = vunpack.c.h.b16 %v438
    %v1575 = vunpack.c.l.b16 %v439
    %v1576 = vunpack.c.h.b16 %v439
    %v1577 = vunpack.c.l.b16 %v440
    %v1578 = vunpack.c.h.b16 %v440
    %v1579 = vunpack.c.l.b16 %v441
    %v1580 = vunpack.c.h.b16 %v441
    %v1581 = vunpack.c.l.b16 %v442
    %v1582 = vunpack.c.h.b16 %v442
    %v1583 = vunpack.c.l.b16 %v443
    %v1584 = vunpack.c.h.b16 %v443
    %v1585 = vunpack.c.l.b16 %v444
    %v1586 = vunpack.c.h.b16 %v444
    %v1587 = vunpack.c.l.b16 %v445
    %v1588 = vunpack.c.h.b16 %v445
    %v1589 = vunpack.c.l.b16 %v446
    %v1590 = vunpack.c.h.b16 %v446
    %v1591 = vunpack.c.l.b16 %v447
    %v1592 = vunpack.c.h.b16 %v447
    %v1593 = vunpack.c.l.b16 %v448
    %v1594 = vunpack.c.h.b16 %v448
    %v1595 = vunpack.c.l.b16 %v449
    %v1596 = vunpack.c.h.b16 %v449
    %v1597 = vunpack.c.l.b16 %v450
    %v1598 = vunpack.c.h.b16 %v450
    %v1599 = vunpack.c.l.b16 %v451
    %v1600 = vunpack.c.h.b16 %v451
    %v1601 = vunpack.c.l.b16 %v452
    %v1602 = vunpack.c.h.b16 %v452
    %v1603 = vunpack.c.l.b16 %v453
    %v1604 = vunpack.c.h.b16 %v453
    %v1605 = vunpack.c.l.b16 %v454
    %v1606 = vunpack.c.h.b16 %v454
    %v1607 = vunpack.c.l.b16 %v455
    %v1608 = vunpack.c.h.b16 %v455
    %v1609 = vunpack.c.l.b16 %v456
    %v1610 = vunpack.c.h.b16 %v456
    %v1611 = vunpack.c.l.b16 %v457
    %v1612 = vunpack.c.h.b16 %v457
    %v1613 = vunpack.c.l.b16 %v458
    %v1614 = vunpack.c.h.b16 %v458
    %v1615 = vunpack.c.l.b16 %v459
    %v1616 = vunpack.c.h.b16 %v459
    %v1617 = vunpack.c.l.b16 %v460
    %v1618 = vunpack.c.h.b16 %v460
    %v1619 = vunpack.c.l.b16 %v461
    %v1620 = vunpack.c.h.b16 %v461
    %v1621 = vunpack.c.l.b16 %v462
    %v1622 = vunpack.c.h.b16 %v462
    %v1623 = vunpack.c.l.b16 %v463
    %v1624 = vunpack.c.h.b16 %v463
    %v1625 = vunpack.c.l.b16 %v464
    %v1626 = vunpack.c.h.b16 %v464
    %v1627 = vunpack.c.l.b16 %v465
    %v1628 = vunpack.c.h.b16 %v465
    %v1629 = vunpack.c.l.b16 %v466
    %v1630 = vunpack.c.h.b16 %v466
    %v1631 = vunpack.c.l.b16 %v467
    %v1632 = vunpack.c.h.b16 %v467
    %v1633 = vunpack.c.l.b16 %v468
    %v1634 = vunpack.c.h.b16 %v468
    %v1635 = vunpack.c.l.b16 %v469
    %v1636 = vunpack.c.h.b16 %v469
    %v1637 = vunpack.c.l.b16 %v470
    %v1638 = vunpack.c.h.b16 %v470
    %v1639 = vunpack.c.l.b16 %v471
    %v1640 = vunpack.c.h.b16 %v471
    %v1641 = vunpack.c.l.b16 %v472
    %v1642 = vunpack.c.h.b16 %v472
    %v1643 = vunpack.c.l.b16 %v473
    %v1644 = vunpack.c.h.b16 %v473
    %v1645 = vunpack.c.l.b16 %v474
    %v1646 = vunpack.c.h.b16 %v474
    %v1647 = vunpack.c.l.b16 %v475
    %v1648 = vunpack.c.h.b16 %v475
    %v1649 = vunpack.c.l.b16 %v476
    %v1650 = vunpack.c.h.b16 %v476
    %v1651 = vunpack.c.l.b16 %v477
    %v1652 = vunpack.c.h.b16 %v477
    %v1653 = vunpack.c.l.b16 %v478
    %v1654 = vunpack.c.h.b16 %v478
    %v1655 = vunpack.c.l.b16 %v479
    %v1656 = vunpack.c.h.b16 %v479
    %v1657 = vunpack.c.l.b16 %v480
    %v1658 = vunpack.c.h.b16 %v480
    %v1659 = vunpack.c.l.b16 %v481
    %v1660 = vunpack.c.h.b16 %v481
    %v1661 = vunpack.c.l.b16 %v482
    %v1662 = vunpack.c.h.b16 %v482
    %v1663 = vunpack.c.l.b16 %v483
    %v1664 = vunpack.c.h.b16 %v483
    %v1665 = vunpack.c.l.b16 %v484
    %v1666 = vunpack.c.h.b16 %v484
    %v1667 = vunpack.c.l.b16 %v485
    %v1668 = vunpack.c.h.b16 %v485
    %v1669 = vunpack.c.l.b16 %v486
    %v1670 = vunpack.c.h.b16 %v486
    %v1671 = vunpack.c.l.b16 %v487
    %v1672 = vunpack.c.h.b16 %v487
    %v1673 = vunpack.c.l.b16 %v488
    %v1674 = vunpack.c.h.b16 %v488
    %v1675 = vunpack.c.l.b16 %v489
    %v1676 = vunpack.c.h.b16 %v489
    %v1677 = vunpack.c.l.b16 %v490
    %v1678 = vunpack.c.h.b16 %v490
    %v1679 = vunpack.c.l.b16 %v491
    %v1680 = vunpack.c.h.b16 %v491
    %v1681 = vunpack.c.l.b16 %v492
    %v1682 = vunpack.c.h.b16 %v492
    %v1683 = vunpack.c.l.b16 %v493
    %v1684 = vunpack.c.h.b16 %v493
    %v1685 = vunpack.c.l.b16 %v494
    %v1686 = vunpack.c.h.b16 %v494
    %v1687 = vunpack.c.l.b16 %v495
    %v1688 = vunpack.c.h.b16 %v495
    %v1689 = vunpack.c.l.b16 %v496
    %v1690 = vunpack.c.h.b16 %v496
    %v1691 = vunpack.c.l.b16 %v497
    %v1692 = vunpack.c.h.b16 %v497
    %v1693 = vunpack.c.l.b16 %v498
    %v1694 = vunpack.c.h.b16 %v498
    %v1695 = vunpack.c.l.b16 %v499
    %v1696 = vunpack.c.h.b16 %v499
    %v1697 = vunpack.c.l.b16 %v500
    %v1698 = vunpack.c.h.b16 %v500
    %v1699 = vunpack.c.l.b16 %v501
    %v1700 = vunpack.c.h.b16 %v501
    %v1701 = vunpack.c.l.b16 %v502
    %v1702 = vunpack.c.h.b16 %v502
    %v1703 = vunpack.c.l.b16 %v503
    %v1704 = vunpack.c.h.b16 %v503
    %v1705 = vunpack.c.l.b16 %v504
    %v1706 = vunpack.c.h.b16 %v504
    %v1707 = vunpack.c.l.b16 %v505
    %v1708 = vunpack.c.h.b16 %v505
    %v1709 = vunpack.c.l.b16 %v506
    %v1710 = vunpack.c.h.b16 %v506
    %v1711 = vunpack.c.l.b16 %v507
    %v1712 = vunpack.c.h.b16 %v507
    %v1713 = vunpack.c.l.b16 %v508
    %v1714 = vunpack.c.h.b16 %v508
    %v1715 = vunpack.c.l.b16 %v509
    %v1716 = vunpack.c.h.b16 %v509
    %v1717 = vunpack.c.l.b16 %v510
    %v1718 = vunpack.c.h.b16 %v510
    %v1719 = vunpack.c.l.b16 %v511
    %v1720 = vunpack.c.h.b16 %v511
    %v1721 = vunpack.c.l.b16 %v512
    %v1722 = vunpack.c.h.b16 %v512
    %v1723 = vunpack.c.l.b16 %v513
    %v1724 = vunpack.c.h.b16 %v513
    %v1725 = vunpack.c.l.b16 %v514
    %v1726 = vunpack.c.h.b16 %v514
    %v1727 = vunpack.c.l.b16 %v515
    %v1728 = vunpack.c.h.b16 %v515
    %v1729 = vunpack.c.l.b16 %v516
    %v1730 = vunpack.c.h.b16 %v516
    %v1731 = vunpack.c.l.b16 %v517
    %v1732 = vunpack.c.h.b16 %v517
    %v1733 = vunpack.c.l.b16 %v518
    %v1734 = vunpack.c.h.b16 %v518
    %v1735 = vunpack.c.l.b16 %v519
    %v1736 = vunpack.c.h.b16 %v519
    %v1737 = vunpack.c.l.b16 %v520
    %v1738 = vunpack.c.h.b16 %v520
    %v1739 = vpack.c.b16 %v963, %v955
    %v1740 = vpack.c.b16 %v964, %v956
    %v1741 = vpack.c.b16 %v965, %v957
    %v1742 = vpack.c.b16 %v966, %v958
    %v1743 = vpack.c.b16 %v967, %v959
    %v1744 = vpack.c.b16 %v968, %v960
    %v1745 = vpack.c.b16 %v969, %v961
    %v1746 = vpack.c.b16 %v970, %v962
    %v1747 = vpack.c.b16 %v979, %v971
    %v1748 = vpack.c.b16 %v980, %v972
    %v1749 = vpack.c.b16 %v981, %v973
    %v1750 = vpack.c.b16 %v982, %v974
    %v1751 = vpack.c.b16 %v983, %v975
    %v1752 = vpack.c.b16 %v984, %v976
    %v1753 = vpack.c.b16 %v985, %v977
    %v1754 = vpack.c.b16 %v986, %v978
    %v1755 = vpack.c.b16 %v995, %v987
    %v1756 = vpack.c.b16 %v996, %v988
    %v1757 = vpack.c.b16 %v997, %v989
    %v1758 = vpack.c.b16 %v998, %v990
    %v1759 = vpack.c.b16 %v999, %v991
    %v1760 = vpack.c.b16 %v1000, %v992
    %v1761 = vpack.c.b16 %v1001, %v993
    %v1762 = vpack.c.b16 %v1002, %v994
    %v1763 = vpack.c.b16 %v1011, %v1003
    %v1764 = vpack.c.b16 %v1012, %v1004
    %v1765 = vpack.c.b16 %v1013, %v1005
    %v1766 = vpack.c.b16 %v1014, %v1006
    %v1767 = vpack.c.b16 %v1015, %v1007
    %v1768 = vpack.c.b16 %v1016, %v1008
    %v1769 = vpack.c.b16 %v1017, %v1009
    %v1770 = vpack.c.b16 %v1018, %v1010
    %v1771 = vpack.c.b16 %v1027, %v1019
    %v1772 = vpack.c.b16 %v1028, %v1020
    %v1773 = vpack.c.b16 %v1029, %v1021
    %v1774 = vpack.c.b16 %v1030, %v1022
    %v1775 = vpack.c.b16 %v1031, %v1023
    %v1776 = vpack.c.b16 %v1032, %v1024
    %v1777 = vpack.c.b16 %v1033, %v1025
    %v1778 = vpack.c.b16 %v1034, %v1026
    %v1779 = vpack.c.b16 %v1043, %v1035
    %v1780 = vpack.c.b16 %v1044, %v1036
    %v1781 = vpack.c.b16 %v1045, %v1037
    %v1782 = vpack.c.b16 %v1046, %v1038
    %v1783 = vpack.c.b16 %v1047, %v1039
    %v1784 = vpack.c.b16 %v1048, %v1040
    %v1785 = vpack.c.b16 %v1049, %v1041
    %v1786 = vpack.c.b16 %v1050, %v1042
    %v1787 = vpack.c.b16 %v1059, %v1051
    %v1788 = vpack.c.b16 %v1060, %v1052
    %v1789 = vpack.c.b16 %v1061, %v1053
    %v1790 = vpack.c.b16 %v1062, %v1054
    %v1791 = vpack.c.b16 %v1063, %v1055
    %v1792 = vpack.c.b16 %v1064, %v1056
    %v1793 = vpack.c.b16 %v1065, %v1057
    %v1794 = vpack.c.b16 %v1066, %v1058
    %v1795 = vpack.c.b16 %v1075, %v1067
    %v1796 = vpack.c.b16 %v1076, %v1068
    %v1797 = vpack.c.b16 %v1077, %v1069
    %v1798 = vpack.c.b16 %v1078, %v1070
    %v1799 = vpack.c.b16 %v1079, %v1071
    %v1800 = vpack.c.b16 %v1080, %v1072
    %v1801 = vpack.c.b16 %v1081, %v1073
    %v1802 = vpack.c.b16 %v1082, %v1074
    %v1803 = vpack.c.b16 %v1091, %v1083
    %v1804 = vpack.c.b16 %v1092, %v1084
    %v1805 = vpack.c.b16 %v1093, %v1085
    %v1806 = vpack.c.b16 %v1094, %v1086
    %v1807 = vpack.c.b16 %v1095, %v1087
    %v1808 = vpack.c.b16 %v1096, %v1088
    %v1809 = vpack.c.b16 %v1097, %v1089
    %v1810 = vpack.c.b16 %v1098, %v1090
    %v1811 = vpack.c.b16 %v1107, %v1099
    %v1812 = vpack.c.b16 %v1108, %v1100
    %v1813 = vpack.c.b16 %v1109, %v1101
    %v1814 = vpack.c.b16 %v1110, %v1102
    %v1815 = vpack.c.b16 %v1111, %v1103
    %v1816 = vpack.c.b16 %v1112, %v1104
    %v1817 = vpack.c.b16 %v1113, %v1105
    %v1818 = vpack.c.b16 %v1114, %v1106
    %v1819 = vpack.c.b16 %v1123, %v1115
    %v1820 = vpack.c.b16 %v1124, %v1116
    %v1821 = vpack.c.b16 %v1125, %v1117
    %v1822 = vpack.c.b16 %v1126, %v1118
    %v1823 = vpack.c.b16 %v1127, %v1119
    %v1824 = vpack.c.b16 %v1128, %v1120
    %v1825 = vpack.c.b16 %v1129, %v1121
    %v1826 = vpack.c.b16 %v1130, %v1122
    %v1827 = vpack.c.b16 %v1139, %v1131
    %v1828 = vpack.c.b16 %v1140, %v1132
    %v1829 = vpack.c.b16 %v1141, %v1133
    %v1830 = vpack.c.b16 %v1142, %v1134
    %v1831 = vpack.c.b16 %v1143, %v1135
    %v1832 = vpack.c.b16 %v1144, %v1136
    %v1833 = vpack.c.b16 %v1145, %v1137
    %v1834 = vpack.c.b16 %v1146, %v1138
    %v1835 = vpack.c.b16 %v1155, %v1147
    %v1836 = vpack.c.b16 %v1156, %v1148
    %v1837 = vpack.c.b16 %v1157, %v1149
    %v1838 = vpack.c.b16 %v1158, %v1150
    %v1839 = vpack.c.b16 %v1159, %v1151
    %v1840 = vpack.c.b16 %v1160, %v1152
    %v1841 = vpack.c.b16 %v1161, %v1153
    %v1842 = vpack.c.b16 %v1162, %v1154
    %v1843 = vpack.c.b16 %v1171, %v1163
    %v1844 = vpack.c.b16 %v1172, %v1164
    %v1845 = vpack.c.b16 %v1173, %v1165
    %v1846 = vpack.c.b16 %v1174, %v1166
    %v1847 = vpack.c.b16 %v1175, %v1167
    %v1848 = vpack.c.b16 %v1176, %v1168
    %v1849 = vpack.c.b16 %v1177, %v1169
    %v1850 = vpack.c.b16 %v1178, %v1170
    %v1851 = vpack.c.b16 %v1187, %v1179
    %v1852 = vpack.c.b16 %v1188, %v1180
    %v1853 = vpack.c.b16 %v1189, %v1181
    %v1854 = vpack.c.b16 %v1190, %v1182
    %v1855 = vpack.c.b16 %v1191, %v1183
    %v1856 = vpack.c.b16 %v1192, %v1184
    %v1857 = vpack.c.b16 %v1193, %v1185
    %v1858 = vpack.c.b16 %v1194, %v1186
    %v1859 = vpack.c.b16 %v1203, %v1195
    %v1860 = vpack.c.b16 %v1204, %v1196
    %v1861 = vpack.c.b16 %v1205, %v1197
    %v1862 = vpack.c.b16 %v1206, %v1198
    %v1863 = vpack.c.b16 %v1207, %v1199
    %v1864 = vpack.c.b16 %v1208, %v1200
    %v1865 = vpack.c.b16 %v1209, %v1201
    %v1866 = vpack.c.b16 %v1210, %v1202
    %v1867 = vpack.c.b16 %v1219, %v1211
    %v1868 = vpack.c.b16 %v1220, %v1212
    %v1869 = vpack.c.b16 %v1221, %v1213
    %v1870 = vpack.c.b16 %v1222, %v1214
    %v1871 = vpack.c.b16 %v1223, %v1215
    %v1872 = vpack.c.b16 %v1224, %v1216
    %v1873 = vpack.c.b16 %v1225, %v1217
    %v1874 = vpack.c.b16 %v1226, %v1218
    %v1875 = vpack.c.b16 %v1235, %v1227
    %v1876 = vpack.c.b16 %v1236, %v1228
    %v1877 = vpack.c.b16 %v1237, %v1229
    %v1878 = vpack.c.b16 %v1238, %v1230
    %v1879 = vpack.c.b16 %v1239, %v1231
    %v1880 = vpack.c.b16 %v1240, %v1232
    %v1881 = vpack.c.b16 %v1241, %v1233
    %v1882 = vpack.c.b16 %v1242, %v1234
    %v1883 = vpack.c.b16 %v1251, %v1243
    %v1884 = vpack.c.b16 %v1252, %v1244
    %v1885 = vpack.c.b16 %v1253, %v1245
    %v1886 = vpack.c.b16 %v1254, %v1246
    %v1887 = vpack.c.b16 %v1255, %v1247
    %v1888 = vpack.c.b16 %v1256, %v1248
    %v1889 = vpack.c.b16 %v1257, %v1249
    %v1890 = vpack.c.b16 %v1258, %v1250
    %v1891 = vpack.c.b16 %v1267, %v1259
    %v1892 = vpack.c.b16 %v1268, %v1260
    %v1893 = vpack.c.b16 %v1269, %v1261
    %v1894 = vpack.c.b16 %v1270, %v1262
    %v1895 = vpack.c.b16 %v1271, %v1263
    %v1896 = vpack.c.b16 %v1272, %v1264
    %v1897 = vpack.c.b16 %v1273, %v1265
    %v1898 = vpack.c.b16 %v1274, %v1266
    %v1899 = vpack.c.b16 %v1283, %v1275
    %v1900 = vpack.c.b16 %v1284, %v1276
    %v1901 = vpack.c.b16 %v1285, %v1277
    %v1902 = vpack.c.b16 %v1286, %v1278
    %v1903 = vpack.c.b16 %v1287, %v1279
    %v1904 = vpack.c.b16 %v1288, %v1280
    %v1905 = vpack.c.b16 %v1289, %v1281
    %v1906 = vpack.c.b16 %v1290, %v1282
    %v1907 = vpack.c.b16 %v1299, %v1291
    %v1908 = vpack.c.b16 %v1300, %v1292
    %v1909 = vpack.c.b16 %v1301, %v1293
    %v1910 = vpack.c.b16 %v1302, %v1294
    %v1911 = vpack.c.b16 %v1303, %v1295
    %v1912 = vpack.c.b16 %v1304, %v1296
    %v1913 = vpack.c.b16 %v1305, %v1297
    %v1914 = vpack.c.b16 %v1306, %v1298
    %v1915 = vpack.c.b16 %v1315, %v1307
    %v1916 = vpack.c.b16 %v1316, %v1308
    %v1917 = vpack.c.b16 %v1317, %v1309
    %v1918 = vpack.c.b16 %v1318, %v1310
    %v1919 = vpack.c.b16 %v1319, %v1311
    %v1920 = vpack.c.b16 %v1320, %v1312
    %v1921 = vpack.c.b16 %v1321, %v1313
    %v1922 = vpack.c.b16 %v1322, %v1314
    %v1923 = vpack.c.b16 %v1331, %v1323
    %v1924 = vpack.c.b16 %v1332, %v1324
    %v1925 = vpack.c.b16 %v1333, %v1325
    %v1926 = vpack.c.b16 %v1334, %v1326
    %v1927 = vpack.c.b16 %v1335, %v1327
    %v1928 = vpack.c.b16 %v1336, %v1328
    %v1929 = vpack.c.b16 %v1337, %v1329
    %v1930 = vpack.c.b16 %v1338, %v1330
    %v1931 = vpack.c.b16 %v1347, %v1339
    %v1932 = vpack.c.b16 %v1348, %v1340
    %v1933 = vpack.c.b16 %v1349, %v1341
    %v1934 = vpack.c.b16 %v1350, %v1342
    %v1935 = vpack.c.b16 %v1351, %v1343
    %v1936 = vpack.c.b16 %v1352, %v1344
    %v1937 = vpack.c.b16 %v1353, %v1345
    %v1938 = vpack.c.b16 %v1354, %v1346
    %v1939 = vpack.c.b16 %v1363, %v1355
    %v1940 = vpack.c.b16 %v1364, %v1356
    %v1941 = vpack.c.b16 %v1365, %v1357
    %v1942 = vpack.c.b16 %v1366, %v1358
    %v1943 = vpack.c.b16 %v1367, %v1359
    %v1944 = vpack.c.b16 %v1368, %v1360
    %v1945 = vpack.c.b16 %v1369, %v1361
    %v1946 = vpack.c.b16 %v1370, %v1362
    %v1947 = vpack.c.b16 %v1379, %v1371
    %v1948 = vpack.c.b16 %v1380, %v1372
    %v1949 = vpack.c.b16 %v1381, %v1373
    %v1950 = vpack.c.b16 %v1382, %v1374
    %v1951 = vpack.c.b16 %v1383, %v1375
    %v1952 = vpack.c.b16 %v1384, %v1376
    %v1953 = vpack.c.b16 %v1385, %v1377
    %v1954 = vpack.c.b16 %v1386, %v1378
    %v1955 = vpack.c.b16 %v1395, %v1387
    %v1956 = vpack.c.b16 %v1396, %v1388
    %v1957 = vpack.c.b16 %v1397, %v1389
    %v1958 = vpack.c.b16 %v1398, %v1390
    %v1959 = vpack.c.b16 %v1399, %v1391
    %v1960 = vpack.c.b16 %v1400, %v1392
    %v1961 = vpack.c.b16 %v1401, %v1393
    %v1962 = vpack.c.b16 %v1402, %v1394
    %v1963 = vpack.c.b16 %v1411, %v1403
    %v1964 = vpack.c.b16 %v1412, %v1404
    %v1965 = vpack.c.b16 %v1413, %v1405
    %v1966 = vpack.c.b16 %v1414, %v1406
    %v1967 = vpack.c.b16 %v1415, %v1407
    %v1968 = vpack.c.b16 %v1416, %v1408
    %v1969 = vpack.c.b16 %v1417, %v1409
    %v1970 = vpack.c.b16 %v1418, %v1410
    %v1971 = vpack.c.b16 %v1427, %v1419
    %v1972 = vpack.c.b16 %v1428, %v1420
    %v1973 = vpack.c.b16 %v1429, %v1421
    %v1974 = vpack.c.b16 %v1430, %v1422
    %v1975 = vpack.c.b16 %v1431, %v1423
    %v1976 = vpack.c.b16 %v1432, %v1424
    %v1977 = vpack.c.b16 %v1433, %v1425
    %v1978 = vpack.c.b16 %v1434, %v1426
    %v1979 = vpack.c.b16 %v1443, %v1435
    %v1980 = vpack.c.b16 %v1444, %v1436
    %v1981 = vpack.c.b16 %v1445, %v1437
    %v1982 = vpack.c.b16 %v1446, %v1438
    %v1983 = vpack.c.b16 %v1447, %v1439
    %v1984 = vpack.c.b16 %v1448, %v1440
    %v1985 = vpack.c.b16 %v1449, %v1441
    %v1986 = vpack.c.b16 %v1450, %v1442
    %v1987 = vpack.c.b16 %v1459, %v1451
    %v1988 = vpack.c.b16 %v1460, %v1452
    %v1989 = vpack.c.b16 %v1461, %v1453
    %v1990 = vpack.c.b16 %v1462, %v1454
    %v1991 = vpack.c.b16 %v1463, %v1455
    %v1992 = vpack.c.b16 %v1464, %v1456
    %v1993 = vpack.c.b16 %v1465, %v1457
    %v1994 = vpack.c.b16 %v1466, %v1458
    %v1995 = vpack.c.b16 %v1475, %v1467
    %v1996 = vpack.c.b16 %v1476, %v1468
    %v1997 = vpack.c.b16 %v1477, %v1469
    %v1998 = vpack.c.b16 %v1478, %v1470
    %v1999 = vpack.c.b16 %v1479, %v1471
    %v2000 = vpack.c.b16 %v1480, %v1472
    %v2001 = vpack.c.b16 %v1481, %v1473
    %v2002 = vpack.c.b16 %v1482, %v1474
    %v2003 = vpack.c.b16 %v1491, %v1483
    %v2004 = vpack.c.b16 %v1492, %v1484
    %v2005 = vpack.c.b16 %v1493, %v1485
    %v2006 = vpack.c.b16 %v1494, %v1486
    %v2007 = vpack.c.b16 %v1495, %v1487
    %v2008 = vpack.c.b16 %v1496, %v1488
    %v2009 = vpack.c.b16 %v1497, %v1489
    %v2010 = vpack.c.b16 %v1498, %v1490
    %v2011 = vpack.c.b16 %v1507, %v1499
    %v2012 = vpack.c.b16 %v1508, %v1500
    %v2013 = vpack.c.b16 %v1509, %v1501
    %v2014 = vpack.c.b16 %v1510, %v1502
    %v2015 = vpack.c.b16 %v1511, %v1503
    %v2016 = vpack.c.b16 %v1512, %v1504
    %v2017 = vpack.c.b16 %v1513, %v1505
    %v2018 = vpack.c.b16 %v1514, %v1506
    %v2019 = vpack.c.b16 %v1523, %v1515
    %v2020 = vpack.c.b16 %v1524, %v1516
    %v2021 = vpack.c.b16 %v1525, %v1517
    %v2022 = vpack.c.b16 %v1526, %v1518
    %v2023 = vpack.c.b16 %v1527, %v1519
    %v2024 = vpack.c.b16 %v1528, %v1520
    %v2025 = vpack.c.b16 %v1529, %v1521
    %v2026 = vpack.c.b16 %v1530, %v1522
    %v2027 = vpack.c.b16 %v1539, %v1531
    %v2028 = vpack.c.b16 %v1540, %v1532
    %v2029 = vpack.c.b16 %v1541, %v1533
    %v2030 = vpack.c.b16 %v1542, %v1534
    %v2031 = vpack.c.b16 %v1543, %v1535
    %v2032 = vpack.c.b16 %v1544, %v1536
    %v2033 = vpack.c.b16 %v1545, %v1537
    %v2034 = vpack.c.b16 %v1546, %v1538
    %v2035 = vpack.c.b16 %v1555, %v1547
    %v2036 = vpack.c.b16 %v1556, %v1548
    %v2037 = vpack.c.b16 %v1557, %v1549
    %v2038 = vpack.c.b16 %v1558, %v1550
    %v2039 = vpack.c.b16 %v1559, %v1551
    %v2040 = vpack.c.b16 %v1560, %v1552
    %v2041 = vpack.c.b16 %v1561, %v1553
    %v2042 = vpack.c.b16 %v1562, %v1554
    %v2043 = vpack.c.b16 %v1571, %v1563
    %v2044 = vpack.c.b16 %v1572, %v1564
    %v2045 = vpack.c.b16 %v1573, %v1565
    %v2046 = vpack.c.b16 %v1574, %v1566
    %v2047 = vpack.c.b16 %v1575, %v1567
    %v2048 = vpack.c.b16 %v1576, %v1568
    %v2049 = vpack.c.b16 %v1577, %v1569
    %v2050 = vpack.c.b16 %v1578, %v1570
    %v2051 = vpack.c.b16 %v1587, %v1579
    %v2052 = vpack.c.b16 %v1588, %v1580
    %v2053 = vpack.c.b16 %v1589, %v1581
    %v2054 = vpack.c.b16 %v1590, %v1582
    %v2055 = vpack.c.b16 %v1591, %v1583
    %v2056 = vpack.c.b16 %v1592, %v1584
    %v2057 = vpack.c.b16 %v1593, %v1585
    %v2058 = vpack.c.b16 %v1594, %v1586
    %v2059 = vpack.c.b16 %v1603, %v1595
    %v2060 = vpack.c.b16 %v1604, %v1596
    %v2061 = vpack.c.b16 %v1605, %v1597
    %v2062 = vpack.c.b16 %v1606, %v1598
    %v2063 = vpack.c.b16 %v1607, %v1599
    %v2064 = vpack.c.b16 %v1608, %v1600
    %v2065 = vpack.c.b16 %v1609, %v1601
    %v2066 = vpack.c.b16 %v1610, %v1602
    %v2067 = vpack.c.b16 %v1619, %v1611
    %v2068 = vpack.c.b16 %v1620, %v1612
    %v2069 = vpack.c.b16 %v1621, %v1613
    %v2070 = vpack.c.b16 %v1622, %v1614
    %v2071 = vpack.c.b16 %v1623, %v1615
    %v2072 = vpack.c.b16 %v1624, %v1616
    %v2073 = vpack.c.b16 %v1625, %v1617
    %v2074 = vpack.c.b16 %v1626, %v1618
    %v2075 = vpack.c.b16 %v1635, %v1627
    %v2076 = vpack.c.b16 %v1636, %v1628
    %v2077 = vpack.c.b16 %v1637, %v1629
    %v2078 = vpack.c.b16 %v1638, %v1630
    %v2079 = vpack.c.b16 %v1639, %v1631
    %v2080 = vpack.c.b16 %v1640, %v1632
    %v2081 = vpack.c.b16 %v1641, %v1633
    %v2082 = vpack.c.b16 %v1642, %v1634
    %v2083 = vpack.c.b16 %v1651, %v1643
    %v2084 = vpack.c.b16 %v1652, %v1644
    %v2085 = vpack.c.b16 %v1653, %v1645
    %v2086 = vpack.c.b16 %v1654, %v1646
    %v2087 = vpack.c.b16 %v1655, %v1647
    %v2088 = vpack.c.b16 %v1656, %v1648
    %v2089 = vpack.c.b16 %v1657, %v1649
    %v2090 = vpack.c.b16 %v1658, %v1650
    %v2091 = vpack.c.b16 %v1667, %v1659
    %v2092 = vpack.c.b16 %v1668, %v1660
    %v2093 = vpack.c.b16 %v1669, %v1661
    %v2094 = vpack.c.b16 %v1670, %v1662
    %v2095 = vpack.c.b16 %v1671, %v1663
    %v2096 = vpack.c.b16 %v1672, %v1664
    %v2097 = vpack.c.b16 %v1673, %v1665
    %v2098 = vpack.c.b16 %v1674, %v1666
    %v2099 = vpack.c.b16 %v1683, %v1675
    %v2100 = vpack.c.b16 %v1684, %v1676
    %v2101 = vpack.c.b16 %v1685, %v1677
    %v2102 = vpack.c.b16 %v1686, %v1678
    %v2103 = vpack.c.b16 %v1687, %v1679
    %v2104 = vpack.c.b16 %v1688, %v1680
    %v2105 = vpack.c.b16 %v1689, %v1681
    %v2106 = vpack.c.b16 %v1690, %v1682
    %v2107 = vpack.c.b16 %v1699, %v1691
    %v2108 = vpack.c.b16 %v1700, %v1692
    %v2109 = vpack.c.b16 %v1701, %v1693
    %v2110 = vpack.c.b16 %v1702, %v1694
    %v2111 = vpack.c.b16 %v1703, %v1695
    %v2112 = vpack.c.b16 %v1704, %v1696
    %v2113 = vpack.c.b16 %v1705, %v1697
    %v2114 = vpack.c.b16 %v1706, %v1698
    %v2115 = vpack.c.b16 %v1715, %v1707
    %v2116 = vpack.c.b16 %v1716, %v1708
    %v2117 = vpack.c.b16 %v1717, %v1709
    %v2118 = vpack.c.b16 %v1718, %v1710
    %v2119 = vpack.c.b16 %v1719, %v1711
    %v2120 = vpack.c.b16 %v1720, %v1712
    %v2121 = vpack.c.b16 %v1721, %v1713
    %v2122 = vpack.c.b16 %v1722, %v1714
    %v2123 = vpack.c.b16 %v1731, %v1723
    %v2124 = vpack.c.b16 %v1732, %v1724
    %v2125 = vpack.c.b16 %v1733, %v1725
    %v2126 = vpack.c.b16 %v1734, %v1726
    %v2127 = vpack.c.b16 %v1735, %v1727
    %v2128 = vpack.c.b16 %v1736, %v1728
    %v2129 = vpack.c.b16 %v1737, %v1729
    %v2130 = vpack.c.b16 %v1738, %v1730
    %vm2523 = vcmask 130048
    %v2525 = vsel %vm2523, %v128, 0
    %2527 = vmatprep.subr.bf16.mxu0 %v1740
    %2528 = vmatpush1.bf16.msra.mxu0 %v1739
    %2529 = vmatprep.subr.bf16.mxu0 %v1748
    %2530 = vmatpush1.bf16.msra.mxu0 %v1747
    %2531 = vmatprep.subr.bf16.mxu0 %v1756
    %2532 = vmatpush1.bf16.msra.mxu0 %v1755
    %2533 = vmatprep.subr.bf16.mxu0 %v1764
    %2534 = vmatpush1.bf16.msra.mxu0 %v1763
    %2535 = vmatprep.subr.bf16.mxu0 %v1772
    %2536 = vmatpush1.bf16.msra.mxu0 %v1771
    %2537 = vmatprep.subr.bf16.mxu0 %v1780
    %2538 = vmatpush1.bf16.msra.mxu0 %v1779
    %2539 = vmatprep.subr.bf16.mxu0 %v1788
    %2540 = vmatpush1.bf16.msra.mxu0 %v1787
    %2541 = vmatprep.subr.bf16.mxu0 %v1796
    %2542 = vmatpush1.bf16.msra.mxu0 %v1795
    %2543 = vmatprep.subr.bf16.mxu0 %v1804
    %2544 = vmatpush1.bf16.msra.mxu0 %v1803
    %2545 = vmatprep.subr.bf16.mxu0 %v1812
    %2546 = vmatpush1.bf16.msra.mxu0 %v1811
    %2547 = vmatprep.subr.bf16.mxu0 %v1820
    %2548 = vmatpush1.bf16.msra.mxu0 %v1819
    %2549 = vmatprep.subr.bf16.mxu0 %v1828
    %2550 = vmatpush1.bf16.msra.mxu0 %v1827
    %2551 = vmatprep.subr.bf16.mxu0 %v1836
    %2552 = vmatpush1.bf16.msra.mxu0 %v1835
    %2553 = vmatprep.subr.bf16.mxu0 %v1844
    %2554 = vmatpush1.bf16.msra.mxu0 %v1843
    %2555 = vmatprep.subr.bf16.mxu0 %v1852
    %2556 = vmatpush1.bf16.msra.mxu0 %v1851
    %2557 = vmatprep.subr.bf16.mxu0 %v1860
    %2558 = vmatpush1.bf16.msra.mxu0 %v1859
    %2559 = vmatprep.mubr.bf16.mxu0 %v123
    %2560 = vmatmul.mubr.bf16.gmra.mrb[0].mxu0 %v122
    %v2561 = vpop.f32.mrb[0].mxu0
    %v2562 = vadd.f32 %v526, %v2561
    %v2563 = vpop.f32.mrb[0].mxu0
    %v2564 = vadd.f32 %v530, %v2563
    %v2565 = vpop.f32.mrb[0].mxu0
    %v2566 = vpop.f32.mrb[0].mxu0
    %2567 = vdwg.mxu0
    %2568 = vmatprep.subr.bf16.mxu0 %v1868
    %2569 = vmatpush1.bf16.msra.mxu0 %v1867
    %2570 = vmatprep.subr.bf16.mxu0 %v1876
    %2571 = vmatpush1.bf16.msra.mxu0 %v1875
    %2572 = vmatprep.subr.bf16.mxu0 %v1884
    %2573 = vmatpush1.bf16.msra.mxu0 %v1883
    %2574 = vmatprep.subr.bf16.mxu0 %v1892
    %2575 = vmatpush1.bf16.msra.mxu0 %v1891
    %2576 = vmatprep.subr.bf16.mxu0 %v1900
    %2577 = vmatpush1.bf16.msra.mxu0 %v1899
    %2578 = vmatprep.subr.bf16.mxu0 %v1908
    %2579 = vmatpush1.bf16.msra.mxu0 %v1907
    %2580 = vmatprep.subr.bf16.mxu0 %v1916
    %2581 = vmatpush1.bf16.msra.mxu0 %v1915
    %2582 = vmatprep.subr.bf16.mxu0 %v1924
    %2583 = vmatpush1.bf16.msra.mxu0 %v1923
    %2584 = vmatprep.subr.bf16.mxu0 %v1932
    %2585 = vmatpush1.bf16.msra.mxu0 %v1931
    %2586 = vmatprep.subr.bf16.mxu0 %v1940
    %2587 = vmatpush1.bf16.msra.mxu0 %v1939
    %2588 = vmatprep.subr.bf16.mxu0 %v1948
    %2589 = vmatpush1.bf16.msra.mxu0 %v1947
    %2590 = vmatprep.subr.bf16.mxu0 %v1956
    %2591 = vmatpush1.bf16.msra.mxu0 %v1955
    %2592 = vmatprep.subr.bf16.mxu0 %v1964
    %2593 = vmatpush1.bf16.msra.mxu0 %v1963
    %2594 = vmatprep.subr.bf16.mxu0 %v1972
    %2595 = vmatpush1.bf16.msra.mxu0 %v1971
    %2596 = vmatprep.subr.bf16.mxu0 %v1980
    %2597 = vmatpush1.bf16.msra.mxu0 %v1979
    %2598 = vmatprep.subr.bf16.mxu0 %v1988
    %2599 = vmatpush1.bf16.msra.mxu0 %v1987
    %2600 = vmatprep.mubr.bf16.mxu0 %v125
    %2601 = vmatmul.mubr.bf16.gmra.mrb[0].mxu0 %v124
    %v2602 = vpop.f32.mrb[0].mxu0
    %v2603 = vadd.f32 %v2562, %v2602
    %v2604 = vpop.f32.mrb[0].mxu0
    %v2605 = vadd.f32 %v2564, %v2604
    %v2606 = vpop.f32.mrb[0].mxu0
    %v2607 = vpop.f32.mrb[0].mxu0
    %2608 = vdwg.mxu0
    %2609 = vmatprep.subr.bf16.mxu0 %v1996
    %2610 = vmatpush1.bf16.msra.mxu0 %v1995
    %2611 = vmatprep.subr.bf16.mxu0 %v2004
    %2612 = vmatpush1.bf16.msra.mxu0 %v2003
    %2613 = vmatprep.subr.bf16.mxu0 %v2012
    %2614 = vmatpush1.bf16.msra.mxu0 %v2011
    %2615 = vmatprep.subr.bf16.mxu0 %v2020
    %2616 = vmatpush1.bf16.msra.mxu0 %v2019
    %2617 = vmatprep.subr.bf16.mxu0 %v2028
    %2618 = vmatpush1.bf16.msra.mxu0 %v2027
    %2619 = vmatprep.subr.bf16.mxu0 %v2036
    %2620 = vmatpush1.bf16.msra.mxu0 %v2035
    %2621 = vmatprep.subr.bf16.mxu0 %v2044
    %2622 = vmatpush1.bf16.msra.mxu0 %v2043
    %2623 = vmatprep.subr.bf16.mxu0 %v2052
    %2624 = vmatpush1.bf16.msra.mxu0 %v2051
    %2625 = vmatprep.subr.bf16.mxu0 %v2060
    %2626 = vmatpush1.bf16.msra.mxu0 %v2059
    %2627 = vmatprep.subr.bf16.mxu0 %v2068
    %2628 = vmatpush1.bf16.msra.mxu0 %v2067
    %2629 = vmatprep.subr.bf16.mxu0 %v2076
    %2630 = vmatpush1.bf16.msra.mxu0 %v2075
    %2631 = vmatprep.subr.bf16.mxu0 %v2084
    %2632 = vmatpush1.bf16.msra.mxu0 %v2083
    %2633 = vmatprep.subr.bf16.mxu0 %v2092
    %2634 = vmatpush1.bf16.msra.mxu0 %v2091
    %2635 = vmatprep.subr.bf16.mxu0 %v2100
    %2636 = vmatpush1.bf16.msra.mxu0 %v2099
    %2637 = vmatprep.subr.bf16.mxu0 %v2108
    %2638 = vmatpush1.bf16.msra.mxu0 %v2107
    %2639 = vmatprep.subr.bf16.mxu0 %v2116
    %2640 = vmatpush1.bf16.msra.mxu0 %v2115
    %2641 = vmatprep.mubr.bf16.mxu0 %v127
    %2642 = vmatmul.mubr.bf16.gmra.mrb[0].mxu0 %v126
    %v2643 = vpop.f32.mrb[0].mxu0
    %v2644 = vadd.f32 %v2603, %v2643
    %v2645 = vpop.f32.mrb[0].mxu0
    %v2646 = vadd.f32 %v2605, %v2645
    %v2647 = vpop.f32.mrb[0].mxu0
    %v2648 = vpop.f32.mrb[0].mxu0
    %2649 = vdwg.mxu0
    %2650 = vmatprep.subr.bf16.mxu0 %v2124
    %2651 = vmatpush1.bf16.msra.mxu0 %v2123
    %2652 = vmatprep.subr.bf16.mxu0 0
    %2653 = vmatpush1.bf16.msra.mxu0 0
    %2654 = vmatprep.subr.bf16.mxu0 0
    %2655 = vmatpush1.bf16.msra.mxu0 0
    %2656 = vmatprep.subr.bf16.mxu0 0
    %2657 = vmatpush1.bf16.msra.mxu0 0
    %2658 = vmatprep.subr.bf16.mxu0 0
    %2659 = vmatpush1.bf16.msra.mxu0 0
    %2660 = vmatprep.subr.bf16.mxu0 0
    %2661 = vmatpush1.bf16.msra.mxu0 0
    %2662 = vmatprep.subr.bf16.mxu0 0
    %2663 = vmatpush1.bf16.msra.mxu0 0
    %2664 = vmatprep.subr.bf16.mxu0 0
    %2665 = vmatpush1.bf16.msra.mxu0 0
    %2666 = vmatprep.subr.bf16.mxu0 0
    %2667 = vmatpush1.bf16.msra.mxu0 0
    %2668 = vmatprep.subr.bf16.mxu0 0
    %2669 = vmatpush1.bf16.msra.mxu0 0
    %2670 = vmatprep.subr.bf16.mxu0 0
    %2671 = vmatpush1.bf16.msra.mxu0 0
    %2672 = vmatprep.subr.bf16.mxu0 0
    %2673 = vmatpush1.bf16.msra.mxu0 0
    %2674 = vmatprep.subr.bf16.mxu0 0
    %2675 = vmatpush1.bf16.msra.mxu0 0
    %2676 = vmatprep.subr.bf16.mxu0 0
    %2677 = vmatpush1.bf16.msra.mxu0 0
    %2678 = vmatprep.subr.bf16.mxu0 0
    %2679 = vmatpush1.bf16.msra.mxu0 0
    %2680 = vmatprep.subr.bf16.mxu0 0
    %2681 = vmatpush1.bf16.msra.mxu0 0
    %2682 = vmatprep.mubr.bf16.mxu0 0
    %2683 = vmatmul.mubr.bf16.gmra.mrb[0].mxu0 %v2525
    %v2684 = vpop.f32.mrb[0].mxu0
    %v2685 = vadd.f32 %v2644, %v2684
    %v2686 = vpop.f32.mrb[0].mxu0
    %v2687 = vadd.f32 %v2646, %v2686
    %v2688 = vpop.f32.mrb[0].mxu0
    %v2689 = vpop.f32.mrb[0].mxu0
    %2690 = vdwg.mxu0
    %2691 = vmatprep.subr.bf16.mxu0 %v1742
    %2692 = vmatpush1.bf16.msra.mxu0 %v1741
    %2693 = vmatprep.subr.bf16.mxu0 %v1750
    %2694 = vmatpush1.bf16.msra.mxu0 %v1749
    %2695 = vmatprep.subr.bf16.mxu0 %v1758
    %2696 = vmatpush1.bf16.msra.mxu0 %v1757
    %2697 = vmatprep.subr.bf16.mxu0 %v1766
    %2698 = vmatpush1.bf16.msra.mxu0 %v1765
    %2699 = vmatprep.subr.bf16.mxu0 %v1774
    %2700 = vmatpush1.bf16.msra.mxu0 %v1773
    %2701 = vmatprep.subr.bf16.mxu0 %v1782
    %2702 = vmatpush1.bf16.msra.mxu0 %v1781
    %2703 = vmatprep.subr.bf16.mxu0 %v1790
    %2704 = vmatpush1.bf16.msra.mxu0 %v1789
    %2705 = vmatprep.subr.bf16.mxu0 %v1798
    %2706 = vmatpush1.bf16.msra.mxu0 %v1797
    %2707 = vmatprep.subr.bf16.mxu0 %v1806
    %2708 = vmatpush1.bf16.msra.mxu0 %v1805
    %2709 = vmatprep.subr.bf16.mxu0 %v1814
    %2710 = vmatpush1.bf16.msra.mxu0 %v1813
    %2711 = vmatprep.subr.bf16.mxu0 %v1822
    %2712 = vmatpush1.bf16.msra.mxu0 %v1821
    %2713 = vmatprep.subr.bf16.mxu0 %v1830
    %2714 = vmatpush1.bf16.msra.mxu0 %v1829
    %2715 = vmatprep.subr.bf16.mxu0 %v1838
    %2716 = vmatpush1.bf16.msra.mxu0 %v1837
    %2717 = vmatprep.subr.bf16.mxu0 %v1846
    %2718 = vmatpush1.bf16.msra.mxu0 %v1845
    %2719 = vmatprep.subr.bf16.mxu0 %v1854
    %2720 = vmatpush1.bf16.msra.mxu0 %v1853
    %2721 = vmatprep.subr.bf16.mxu0 %v1862
    %2722 = vmatpush1.bf16.msra.mxu0 %v1861
    %2723 = vmatprep.mubr.bf16.mxu0 %v123
    %2724 = vmatmul.mubr.bf16.gmra.mrb[0].mxu0 %v122
    %v2725 = vpop.f32.mrb[0].mxu0
    %v2726 = vadd.f32 %v534, %v2725
    %v2727 = vpop.f32.mrb[0].mxu0
    %v2728 = vadd.f32 %v538, %v2727
    %v2729 = vpop.f32.mrb[0].mxu0
    %v2730 = vpop.f32.mrb[0].mxu0
    %2731 = vdwg.mxu0
    %2732 = vmatprep.subr.bf16.mxu0 %v1870
    %2733 = vmatpush1.bf16.msra.mxu0 %v1869
    %2734 = vmatprep.subr.bf16.mxu0 %v1878
    %2735 = vmatpush1.bf16.msra.mxu0 %v1877
    %2736 = vmatprep.subr.bf16.mxu0 %v1886
    %2737 = vmatpush1.bf16.msra.mxu0 %v1885
    %2738 = vmatprep.subr.bf16.mxu0 %v1894
    %2739 = vmatpush1.bf16.msra.mxu0 %v1893
    %2740 = vmatprep.subr.bf16.mxu0 %v1902
    %2741 = vmatpush1.bf16.msra.mxu0 %v1901
    %2742 = vmatprep.subr.bf16.mxu0 %v1910
    %2743 = vmatpush1.bf16.msra.mxu0 %v1909
    %2744 = vmatprep.subr.bf16.mxu0 %v1918
    %2745 = vmatpush1.bf16.msra.mxu0 %v1917
    %2746 = vmatprep.subr.bf16.mxu0 %v1926
    %2747 = vmatpush1.bf16.msra.mxu0 %v1925
    %2748 = vmatprep.subr.bf16.mxu0 %v1934
    %2749 = vmatpush1.bf16.msra.mxu0 %v1933
    %2750 = vmatprep.subr.bf16.mxu0 %v1942
    %2751 = vmatpush1.bf16.msra.mxu0 %v1941
    %2752 = vmatprep.subr.bf16.mxu0 %v1950
    %2753 = vmatpush1.bf16.msra.mxu0 %v1949
    %2754 = vmatprep.subr.bf16.mxu0 %v1958
    %2755 = vmatpush1.bf16.msra.mxu0 %v1957
    %2756 = vmatprep.subr.bf16.mxu0 %v1966
    %2757 = vmatpush1.bf16.msra.mxu0 %v1965
    %2758 = vmatprep.subr.bf16.mxu0 %v1974
    %2759 = vmatpush1.bf16.msra.mxu0 %v1973
    %2760 = vmatprep.subr.bf16.mxu0 %v1982
    %2761 = vmatpush1.bf16.msra.mxu0 %v1981
    %2762 = vmatprep.subr.bf16.mxu0 %v1990
    %2763 = vmatpush1.bf16.msra.mxu0 %v1989
    %2764 = vmatprep.mubr.bf16.mxu0 %v125
    %2765 = vmatmul.mubr.bf16.gmra.mrb[0].mxu0 %v124
    %v2766 = vpop.f32.mrb[0].mxu0
    %v2767 = vadd.f32 %v2726, %v2766
    %v2768 = vpop.f32.mrb[0].mxu0
    %v2769 = vadd.f32 %v2728, %v2768
    %v2770 = vpop.f32.mrb[0].mxu0
    %v2771 = vpop.f32.mrb[0].mxu0
    %2772 = vdwg.mxu0
    %2773 = vmatprep.subr.bf16.mxu0 %v1998
    %2774 = vmatpush1.bf16.msra.mxu0 %v1997
    %2775 = vmatprep.subr.bf16.mxu0 %v2006
    %2776 = vmatpush1.bf16.msra.mxu0 %v2005
    %2777 = vmatprep.subr.bf16.mxu0 %v2014
    %2778 = vmatpush1.bf16.msra.mxu0 %v2013
    %2779 = vmatprep.subr.bf16.mxu0 %v2022
    %2780 = vmatpush1.bf16.msra.mxu0 %v2021
    %2781 = vmatprep.subr.bf16.mxu0 %v2030
    %2782 = vmatpush1.bf16.msra.mxu0 %v2029
    %2783 = vmatprep.subr.bf16.mxu0 %v2038
    %2784 = vmatpush1.bf16.msra.mxu0 %v2037
    %2785 = vmatprep.subr.bf16.mxu0 %v2046
    %2786 = vmatpush1.bf16.msra.mxu0 %v2045
    %2787 = vmatprep.subr.bf16.mxu0 %v2054
    %2788 = vmatpush1.bf16.msra.mxu0 %v2053
    %2789 = vmatprep.subr.bf16.mxu0 %v2062
    %2790 = vmatpush1.bf16.msra.mxu0 %v2061
    %2791 = vmatprep.subr.bf16.mxu0 %v2070
    %2792 = vmatpush1.bf16.msra.mxu0 %v2069
    %2793 = vmatprep.subr.bf16.mxu0 %v2078
    %2794 = vmatpush1.bf16.msra.mxu0 %v2077
    %2795 = vmatprep.subr.bf16.mxu0 %v2086
    %2796 = vmatpush1.bf16.msra.mxu0 %v2085
    %2797 = vmatprep.subr.bf16.mxu0 %v2094
    %2798 = vmatpush1.bf16.msra.mxu0 %v2093
    %2799 = vmatprep.subr.bf16.mxu0 %v2102
    %2800 = vmatpush1.bf16.msra.mxu0 %v2101
    %2801 = vmatprep.subr.bf16.mxu0 %v2110
    %2802 = vmatpush1.bf16.msra.mxu0 %v2109
    %2803 = vmatprep.subr.bf16.mxu0 %v2118
    %2804 = vmatpush1.bf16.msra.mxu0 %v2117
    %2805 = vmatprep.mubr.bf16.mxu0 %v127
    %2806 = vmatmul.mubr.bf16.gmra.mrb[0].mxu0 %v126
    %v2807 = vpop.f32.mrb[0].mxu0
    %v2808 = vadd.f32 %v2767, %v2807
    %v2809 = vpop.f32.mrb[0].mxu0
    %v2810 = vadd.f32 %v2769, %v2809
    %v2811 = vpop.f32.mrb[0].mxu0
    %v2812 = vpop.f32.mrb[0].mxu0
    %2813 = vdwg.mxu0
    %2814 = vmatprep.subr.bf16.mxu0 %v2126
    %2815 = vmatpush1.bf16.msra.mxu0 %v2125
    %2816 = vmatprep.subr.bf16.mxu0 0
    %2817 = vmatpush1.bf16.msra.mxu0 0
    %2818 = vmatprep.subr.bf16.mxu0 0
    %2819 = vmatpush1.bf16.msra.mxu0 0
    %2820 = vmatprep.subr.bf16.mxu0 0
    %2821 = vmatpush1.bf16.msra.mxu0 0
    %2822 = vmatprep.subr.bf16.mxu0 0
    %2823 = vmatpush1.bf16.msra.mxu0 0
    %2824 = vmatprep.subr.bf16.mxu0 0
    %2825 = vmatpush1.bf16.msra.mxu0 0
    %2826 = vmatprep.subr.bf16.mxu0 0
    %2827 = vmatpush1.bf16.msra.mxu0 0
    %2828 = vmatprep.subr.bf16.mxu0 0
    %2829 = vmatpush1.bf16.msra.mxu0 0
    %2830 = vmatprep.subr.bf16.mxu0 0
    %2831 = vmatpush1.bf16.msra.mxu0 0
    %2832 = vmatprep.subr.bf16.mxu0 0
    %2833 = vmatpush1.bf16.msra.mxu0 0
    %2834 = vmatprep.subr.bf16.mxu0 0
    %2835 = vmatpush1.bf16.msra.mxu0 0
    %2836 = vmatprep.subr.bf16.mxu0 0
    %2837 = vmatpush1.bf16.msra.mxu0 0
    %2838 = vmatprep.subr.bf16.mxu0 0
    %2839 = vmatpush1.bf16.msra.mxu0 0
    %2840 = vmatprep.subr.bf16.mxu0 0
    %2841 = vmatpush1.bf16.msra.mxu0 0
    %2842 = vmatprep.subr.bf16.mxu0 0
    %2843 = vmatpush1.bf16.msra.mxu0 0
    %2844 = vmatprep.subr.bf16.mxu0 0
    %2845 = vmatpush1.bf16.msra.mxu0 0
    %2846 = vmatprep.mubr.bf16.mxu0 0
    %2847 = vmatmul.mubr.bf16.gmra.mrb[0].mxu0 %v2525
    %v2848 = vpop.f32.mrb[0].mxu0
    %v2849 = vadd.f32 %v2808, %v2848
    %v2850 = vpop.f32.mrb[0].mxu0
    %v2851 = vadd.f32 %v2810, %v2850
    %v2852 = vpop.f32.mrb[0].mxu0
    %v2853 = vpop.f32.mrb[0].mxu0
    %2854 = vdwg.mxu0
    %2855 = vmatprep.subr.bf16.mxu0 %v1744
    %2856 = vmatpush1.bf16.msra.mxu0 %v1743
    %2857 = vmatprep.subr.bf16.mxu0 %v1752
    %2858 = vmatpush1.bf16.msra.mxu0 %v1751
    %2859 = vmatprep.subr.bf16.mxu0 %v1760
    %2860 = vmatpush1.bf16.msra.mxu0 %v1759
    %2861 = vmatprep.subr.bf16.mxu0 %v1768
    %2862 = vmatpush1.bf16.msra.mxu0 %v1767
    %2863 = vmatprep.subr.bf16.mxu0 %v1776
    %2864 = vmatpush1.bf16.msra.mxu0 %v1775
    %2865 = vmatprep.subr.bf16.mxu0 %v1784
    %2866 = vmatpush1.bf16.msra.mxu0 %v1783
    %2867 = vmatprep.subr.bf16.mxu0 %v1792
    %2868 = vmatpush1.bf16.msra.mxu0 %v1791
    %2869 = vmatprep.subr.bf16.mxu0 %v1800
    %2870 = vmatpush1.bf16.msra.mxu0 %v1799
    %2871 = vmatprep.subr.bf16.mxu0 %v1808
    %2872 = vmatpush1.bf16.msra.mxu0 %v1807
    %2873 = vmatprep.subr.bf16.mxu0 %v1816
    %2874 = vmatpush1.bf16.msra.mxu0 %v1815
    %2875 = vmatprep.subr.bf16.mxu0 %v1824
    %2876 = vmatpush1.bf16.msra.mxu0 %v1823
    %2877 = vmatprep.subr.bf16.mxu0 %v1832
    %2878 = vmatpush1.bf16.msra.mxu0 %v1831
    %2879 = vmatprep.subr.bf16.mxu0 %v1840
    %2880 = vmatpush1.bf16.msra.mxu0 %v1839
    %2881 = vmatprep.subr.bf16.mxu0 %v1848
    %2882 = vmatpush1.bf16.msra.mxu0 %v1847
    %2883 = vmatprep.subr.bf16.mxu0 %v1856
    %2884 = vmatpush1.bf16.msra.mxu0 %v1855
    %2885 = vmatprep.subr.bf16.mxu0 %v1864
    %2886 = vmatpush1.bf16.msra.mxu0 %v1863
    %2887 = vmatprep.mubr.bf16.mxu0 %v123
    %2888 = vmatmul.mubr.bf16.gmra.mrb[0].mxu0 %v122
    %v2889 = vpop.f32.mrb[0].mxu0
    %v2890 = vadd.f32 %v542, %v2889
    %v2891 = vpop.f32.mrb[0].mxu0
    %v2892 = vadd.f32 %v546, %v2891
    %v2893 = vpop.f32.mrb[0].mxu0
    %v2894 = vpop.f32.mrb[0].mxu0
    %2895 = vdwg.mxu0
    %2896 = vmatprep.subr.bf16.mxu0 %v1872
    %2897 = vmatpush1.bf16.msra.mxu0 %v1871
    %2898 = vmatprep.subr.bf16.mxu0 %v1880
    %2899 = vmatpush1.bf16.msra.mxu0 %v1879
    %2900 = vmatprep.subr.bf16.mxu0 %v1888
    %2901 = vmatpush1.bf16.msra.mxu0 %v1887
    %2902 = vmatprep.subr.bf16.mxu0 %v1896
    %2903 = vmatpush1.bf16.msra.mxu0 %v1895
    %2904 = vmatprep.subr.bf16.mxu0 %v1904
    %2905 = vmatpush1.bf16.msra.mxu0 %v1903
    %2906 = vmatprep.subr.bf16.mxu0 %v1912
    %2907 = vmatpush1.bf16.msra.mxu0 %v1911
    %2908 = vmatprep.subr.bf16.mxu0 %v1920
    %2909 = vmatpush1.bf16.msra.mxu0 %v1919
    %2910 = vmatprep.subr.bf16.mxu0 %v1928
    %2911 = vmatpush1.bf16.msra.mxu0 %v1927
    %2912 = vmatprep.subr.bf16.mxu0 %v1936
    %2913 = vmatpush1.bf16.msra.mxu0 %v1935
    %2914 = vmatprep.subr.bf16.mxu0 %v1944
    %2915 = vmatpush1.bf16.msra.mxu0 %v1943
    %2916 = vmatprep.subr.bf16.mxu0 %v1952
    %2917 = vmatpush1.bf16.msra.mxu0 %v1951
    %2918 = vmatprep.subr.bf16.mxu0 %v1960
    %2919 = vmatpush1.bf16.msra.mxu0 %v1959
    %2920 = vmatprep.subr.bf16.mxu0 %v1968
    %2921 = vmatpush1.bf16.msra.mxu0 %v1967
    %2922 = vmatprep.subr.bf16.mxu0 %v1976
    %2923 = vmatpush1.bf16.msra.mxu0 %v1975
    %2924 = vmatprep.subr.bf16.mxu0 %v1984
    %2925 = vmatpush1.bf16.msra.mxu0 %v1983
    %2926 = vmatprep.subr.bf16.mxu0 %v1992
    %2927 = vmatpush1.bf16.msra.mxu0 %v1991
    %2928 = vmatprep.mubr.bf16.mxu0 %v125
    %2929 = vmatmul.mubr.bf16.gmra.mrb[0].mxu0 %v124
    %v2930 = vpop.f32.mrb[0].mxu0
    %v2931 = vadd.f32 %v2890, %v2930
    %v2932 = vpop.f32.mrb[0].mxu0
    %v2933 = vadd.f32 %v2892, %v2932
    %v2934 = vpop.f32.mrb[0].mxu0
    %v2935 = vpop.f32.mrb[0].mxu0
    %2936 = vdwg.mxu0
    %2937 = vmatprep.subr.bf16.mxu0 %v2000
    %2938 = vmatpush1.bf16.msra.mxu0 %v1999
    %2939 = vmatprep.subr.bf16.mxu0 %v2008
    %2940 = vmatpush1.bf16.msra.mxu0 %v2007
    %2941 = vmatprep.subr.bf16.mxu0 %v2016
    %2942 = vmatpush1.bf16.msra.mxu0 %v2015
    %2943 = vmatprep.subr.bf16.mxu0 %v2024
    %2944 = vmatpush1.bf16.msra.mxu0 %v2023
    %2945 = vmatprep.subr.bf16.mxu0 %v2032
    %2946 = vmatpush1.bf16.msra.mxu0 %v2031
    %2947 = vmatprep.subr.bf16.mxu0 %v2040
    %2948 = vmatpush1.bf16.msra.mxu0 %v2039
    %2949 = vmatprep.subr.bf16.mxu0 %v2048
    %2950 = vmatpush1.bf16.msra.mxu0 %v2047
    %2951 = vmatprep.subr.bf16.mxu0 %v2056
    %2952 = vmatpush1.bf16.msra.mxu0 %v2055
    %2953 = vmatprep.subr.bf16.mxu0 %v2064
    %2954 = vmatpush1.bf16.msra.mxu0 %v2063
    %2955 = vmatprep.subr.bf16.mxu0 %v2072
    %2956 = vmatpush1.bf16.msra.mxu0 %v2071
    %2957 = vmatprep.subr.bf16.mxu0 %v2080
    %2958 = vmatpush1.bf16.msra.mxu0 %v2079
    %2959 = vmatprep.subr.bf16.mxu0 %v2088
    %2960 = vmatpush1.bf16.msra.mxu0 %v2087
    %2961 = vmatprep.subr.bf16.mxu0 %v2096
    %2962 = vmatpush1.bf16.msra.mxu0 %v2095
    %2963 = vmatprep.subr.bf16.mxu0 %v2104
    %2964 = vmatpush1.bf16.msra.mxu0 %v2103
    %2965 = vmatprep.subr.bf16.mxu0 %v2112
    %2966 = vmatpush1.bf16.msra.mxu0 %v2111
    %2967 = vmatprep.subr.bf16.mxu0 %v2120
    %2968 = vmatpush1.bf16.msra.mxu0 %v2119
    %2969 = vmatprep.mubr.bf16.mxu0 %v127
    %2970 = vmatmul.mubr.bf16.gmra.mrb[0].mxu0 %v126
    %v2971 = vpop.f32.mrb[0].mxu0
    %v2972 = vadd.f32 %v2931, %v2971
    %v2973 = vpop.f32.mrb[0].mxu0
    %v2974 = vadd.f32 %v2933, %v2973
    %v2975 = vpop.f32.mrb[0].mxu0
    %v2976 = vpop.f32.mrb[0].mxu0
    %2977 = vdwg.mxu0
    %2978 = vmatprep.subr.bf16.mxu0 %v2128
    %2979 = vmatpush1.bf16.msra.mxu0 %v2127
    %2980 = vmatprep.subr.bf16.mxu0 0
    %2981 = vmatpush1.bf16.msra.mxu0 0
    %2982 = vmatprep.subr.bf16.mxu0 0
    %2983 = vmatpush1.bf16.msra.mxu0 0
    %2984 = vmatprep.subr.bf16.mxu0 0
    %2985 = vmatpush1.bf16.msra.mxu0 0
    %2986 = vmatprep.subr.bf16.mxu0 0
    %2987 = vmatpush1.bf16.msra.mxu0 0
    %2988 = vmatprep.subr.bf16.mxu0 0
    %2989 = vmatpush1.bf16.msra.mxu0 0
    %2990 = vmatprep.subr.bf16.mxu0 0
    %2991 = vmatpush1.bf16.msra.mxu0 0
    %2992 = vmatprep.subr.bf16.mxu0 0
    %2993 = vmatpush1.bf16.msra.mxu0 0
    %2994 = vmatprep.subr.bf16.mxu0 0
    %2995 = vmatpush1.bf16.msra.mxu0 0
    %2996 = vmatprep.subr.bf16.mxu0 0
    %2997 = vmatpush1.bf16.msra.mxu0 0
    %2998 = vmatprep.subr.bf16.mxu0 0
    %2999 = vmatpush1.bf16.msra.mxu0 0
    %3000 = vmatprep.subr.bf16.mxu0 0
    %3001 = vmatpush1.bf16.msra.mxu0 0
    %3002 = vmatprep.subr.bf16.mxu0 0
    %3003 = vmatpush1.bf16.msra.mxu0 0
    %3004 = vmatprep.subr.bf16.mxu0 0
    %3005 = vmatpush1.bf16.msra.mxu0 0
    %3006 = vmatprep.subr.bf16.mxu0 0
    %3007 = vmatpush1.bf16.msra.mxu0 0
    %3008 = vmatprep.subr.bf16.mxu0 0
    %3009 = vmatpush1.bf16.msra.mxu0 0
    %3010 = vmatprep.mubr.bf16.mxu0 0
    %3011 = vmatmul.mubr.bf16.gmra.mrb[0].mxu0 %v2525
    %v3012 = vpop.f32.mrb[0].mxu0
    %v3013 = vadd.f32 %v2972, %v3012
    %v3014 = vpop.f32.mrb[0].mxu0
    %v3015 = vadd.f32 %v2974, %v3014
    %v3016 = vpop.f32.mrb[0].mxu0
    %v3017 = vpop.f32.mrb[0].mxu0
    %3018 = vdwg.mxu0
    %3019 = vmatprep.subr.bf16.mxu0 %v1746
    %3020 = vmatpush1.bf16.msra.mxu0 %v1745
    %3021 = vmatprep.subr.bf16.mxu0 %v1754
    %3022 = vmatpush1.bf16.msra.mxu0 %v1753
    %3023 = vmatprep.subr.bf16.mxu0 %v1762
    %3024 = vmatpush1.bf16.msra.mxu0 %v1761
    %3025 = vmatprep.subr.bf16.mxu0 %v1770
    %3026 = vmatpush1.bf16.msra.mxu0 %v1769
    %3027 = vmatprep.subr.bf16.mxu0 %v1778
    %3028 = vmatpush1.bf16.msra.mxu0 %v1777
    %3029 = vmatprep.subr.bf16.mxu0 %v1786
    %3030 = vmatpush1.bf16.msra.mxu0 %v1785
    %3031 = vmatprep.subr.bf16.mxu0 %v1794
    %3032 = vmatpush1.bf16.msra.mxu0 %v1793
    %3033 = vmatprep.subr.bf16.mxu0 %v1802
    %3034 = vmatpush1.bf16.msra.mxu0 %v1801
    %3035 = vmatprep.subr.bf16.mxu0 %v1810
    %3036 = vmatpush1.bf16.msra.mxu0 %v1809
    %3037 = vmatprep.subr.bf16.mxu0 %v1818
    %3038 = vmatpush1.bf16.msra.mxu0 %v1817
    %3039 = vmatprep.subr.bf16.mxu0 %v1826
    %3040 = vmatpush1.bf16.msra.mxu0 %v1825
    %3041 = vmatprep.subr.bf16.mxu0 %v1834
    %3042 = vmatpush1.bf16.msra.mxu0 %v1833
    %3043 = vmatprep.subr.bf16.mxu0 %v1842
    %3044 = vmatpush1.bf16.msra.mxu0 %v1841
    %3045 = vmatprep.subr.bf16.mxu0 %v1850
    %3046 = vmatpush1.bf16.msra.mxu0 %v1849
    %3047 = vmatprep.subr.bf16.mxu0 %v1858
    %3048 = vmatpush1.bf16.msra.mxu0 %v1857
    %3049 = vmatprep.subr.bf16.mxu0 %v1866
    %3050 = vmatpush1.bf16.msra.mxu0 %v1865
    %3051 = vmatprep.mubr.bf16.mxu0 %v123
    %3052 = vmatmul.mubr.bf16.gmra.mrb[0].mxu0 %v122
    %v3053 = vpop.f32.mrb[0].mxu0
    %v3054 = vadd.f32 %v550, %v3053
    %v3055 = vpop.f32.mrb[0].mxu0
    %v3056 = vadd.f32 %v554, %v3055
    %v3057 = vpop.f32.mrb[0].mxu0
    %v3058 = vpop.f32.mrb[0].mxu0
    %3059 = vdwg.mxu0
    %3060 = vmatprep.subr.bf16.mxu0 %v1874
    %3061 = vmatpush1.bf16.msra.mxu0 %v1873
    %3062 = vmatprep.subr.bf16.mxu0 %v1882
    %3063 = vmatpush1.bf16.msra.mxu0 %v1881
    %3064 = vmatprep.subr.bf16.mxu0 %v1890
    %3065 = vmatpush1.bf16.msra.mxu0 %v1889
    %3066 = vmatprep.subr.bf16.mxu0 %v1898
    %3067 = vmatpush1.bf16.msra.mxu0 %v1897
    %3068 = vmatprep.subr.bf16.mxu0 %v1906
    %3069 = vmatpush1.bf16.msra.mxu0 %v1905
    %3070 = vmatprep.subr.bf16.mxu0 %v1914
    %3071 = vmatpush1.bf16.msra.mxu0 %v1913
    %3072 = vmatprep.subr.bf16.mxu0 %v1922
    %3073 = vmatpush1.bf16.msra.mxu0 %v1921
    %3074 = vmatprep.subr.bf16.mxu0 %v1930
    %3075 = vmatpush1.bf16.msra.mxu0 %v1929
    %3076 = vmatprep.subr.bf16.mxu0 %v1938
    %3077 = vmatpush1.bf16.msra.mxu0 %v1937
    %3078 = vmatprep.subr.bf16.mxu0 %v1946
    %3079 = vmatpush1.bf16.msra.mxu0 %v1945
    %3080 = vmatprep.subr.bf16.mxu0 %v1954
    %3081 = vmatpush1.bf16.msra.mxu0 %v1953
    %3082 = vmatprep.subr.bf16.mxu0 %v1962
    %3083 = vmatpush1.bf16.msra.mxu0 %v1961
    %3084 = vmatprep.subr.bf16.mxu0 %v1970
    %3085 = vmatpush1.bf16.msra.mxu0 %v1969
    %3086 = vmatprep.subr.bf16.mxu0 %v1978
    %3087 = vmatpush1.bf16.msra.mxu0 %v1977
    %3088 = vmatprep.subr.bf16.mxu0 %v1986
    %3089 = vmatpush1.bf16.msra.mxu0 %v1985
    %3090 = vmatprep.subr.bf16.mxu0 %v1994
    %3091 = vmatpush1.bf16.msra.mxu0 %v1993
    %3092 = vmatprep.mubr.bf16.mxu0 %v125
    %3093 = vmatmul.mubr.bf16.gmra.mrb[0].mxu0 %v124
    %v3094 = vpop.f32.mrb[0].mxu0
    %v3095 = vadd.f32 %v3054, %v3094
    %v3096 = vpop.f32.mrb[0].mxu0
    %v3097 = vadd.f32 %v3056, %v3096
    %v3098 = vpop.f32.mrb[0].mxu0
    %v3099 = vpop.f32.mrb[0].mxu0
    %3100 = vdwg.mxu0
    %3101 = vmatprep.subr.bf16.mxu0 %v2002
    %3102 = vmatpush1.bf16.msra.mxu0 %v2001
    %3103 = vmatprep.subr.bf16.mxu0 %v2010
    %3104 = vmatpush1.bf16.msra.mxu0 %v2009
    %3105 = vmatprep.subr.bf16.mxu0 %v2018
    %3106 = vmatpush1.bf16.msra.mxu0 %v2017
    %3107 = vmatprep.subr.bf16.mxu0 %v2026
    %3108 = vmatpush1.bf16.msra.mxu0 %v2025
    %3109 = vmatprep.subr.bf16.mxu0 %v2034
    %3110 = vmatpush1.bf16.msra.mxu0 %v2033
    %3111 = vmatprep.subr.bf16.mxu0 %v2042
    %3112 = vmatpush1.bf16.msra.mxu0 %v2041
    %3113 = vmatprep.subr.bf16.mxu0 %v2050
    %3114 = vmatpush1.bf16.msra.mxu0 %v2049
    %3115 = vmatprep.subr.bf16.mxu0 %v2058
    %3116 = vmatpush1.bf16.msra.mxu0 %v2057
    %3117 = vmatprep.subr.bf16.mxu0 %v2066
    %3118 = vmatpush1.bf16.msra.mxu0 %v2065
    %3119 = vmatprep.subr.bf16.mxu0 %v2074
    %3120 = vmatpush1.bf16.msra.mxu0 %v2073
    %3121 = vmatprep.subr.bf16.mxu0 %v2082
    %3122 = vmatpush1.bf16.msra.mxu0 %v2081
    %3123 = vmatprep.subr.bf16.mxu0 %v2090
    %3124 = vmatpush1.bf16.msra.mxu0 %v2089
    %3125 = vmatprep.subr.bf16.mxu0 %v2098
    %3126 = vmatpush1.bf16.msra.mxu0 %v2097
    %3127 = vmatprep.subr.bf16.mxu0 %v2106
    %3128 = vmatpush1.bf16.msra.mxu0 %v2105
    %3129 = vmatprep.subr.bf16.mxu0 %v2114
    %3130 = vmatpush1.bf16.msra.mxu0 %v2113
    %3131 = vmatprep.subr.bf16.mxu0 %v2122
    %3132 = vmatpush1.bf16.msra.mxu0 %v2121
    %3133 = vmatprep.mubr.bf16.mxu0 %v127
    %3134 = vmatmul.mubr.bf16.gmra.mrb[0].mxu0 %v126
    %v3135 = vpop.f32.mrb[0].mxu0
    %v3136 = vadd.f32 %v3095, %v3135
    %v3137 = vpop.f32.mrb[0].mxu0
    %v3138 = vadd.f32 %v3097, %v3137
    %v3139 = vpop.f32.mrb[0].mxu0
    %v3140 = vpop.f32.mrb[0].mxu0
    %3141 = vdwg.mxu0
    %3142 = vmatprep.subr.bf16.mxu0 %v2130
    %3143 = vmatpush1.bf16.msra.mxu0 %v2129
    %3144 = vmatprep.subr.bf16.mxu0 0
    %3145 = vmatpush1.bf16.msra.mxu0 0
    %3146 = vmatprep.subr.bf16.mxu0 0
    %3147 = vmatpush1.bf16.msra.mxu0 0
    %3148 = vmatprep.subr.bf16.mxu0 0
    %3149 = vmatpush1.bf16.msra.mxu0 0
    %3150 = vmatprep.subr.bf16.mxu0 0
    %3151 = vmatpush1.bf16.msra.mxu0 0
    %3152 = vmatprep.subr.bf16.mxu0 0
    %3153 = vmatpush1.bf16.msra.mxu0 0
    %3154 = vmatprep.subr.bf16.mxu0 0
    %3155 = vmatpush1.bf16.msra.mxu0 0
    %3156 = vmatprep.subr.bf16.mxu0 0
    %3157 = vmatpush1.bf16.msra.mxu0 0
    %3158 = vmatprep.subr.bf16.mxu0 0
    %3159 = vmatpush1.bf16.msra.mxu0 0
    %3160 = vmatprep.subr.bf16.mxu0 0
    %3161 = vmatpush1.bf16.msra.mxu0 0
    %3162 = vmatprep.subr.bf16.mxu0 0
    %3163 = vmatpush1.bf16.msra.mxu0 0
    %3164 = vmatprep.subr.bf16.mxu0 0
    %3165 = vmatpush1.bf16.msra.mxu0 0
    %3166 = vmatprep.subr.bf16.mxu0 0
    %3167 = vmatpush1.bf16.msra.mxu0 0
    %3168 = vmatprep.subr.bf16.mxu0 0
    %3169 = vmatpush1.bf16.msra.mxu0 0
    %3170 = vmatprep.subr.bf16.mxu0 0
    %3171 = vmatpush1.bf16.msra.mxu0 0
    %3172 = vmatprep.subr.bf16.mxu0 0
    %3173 = vmatpush1.bf16.msra.mxu0 0
    %3174 = vmatprep.mubr.bf16.mxu0 0
    %3175 = vmatmul.mubr.bf16.gmra.mrb[0].mxu0 %v2525
    %v3176 = vpop.f32.mrb[0].mxu0
    %v3177 = vadd.f32 %v3136, %v3176
    %v3178 = vpop.f32.mrb[0].mxu0
    %v3179 = vadd.f32 %v3138, %v3178
    %v3180 = vpop.f32.mrb[0].mxu0
    %v3181 = vpop.f32.mrb[0].mxu0
    %3182 = vdwg.mxu0
    %v3183 = vmax.f32 %v2685, 0.0
    %v3184 = vmax.f32 %v2687, 0.0
    %v3185 = vmax.f32 %v2849, 0.0
    %v3186 = vmax.f32 %v2851, 0.0
    %v3187 = vmax.f32 %v3013, 0.0
    %v3188 = vmax.f32 %v3015, 0.0
    %v3189 = vmax.f32 %v3177, 0.0
    %v3190 = vmax.f32 %v3179, 0.0
    %v3191 = vpack.c.bf16 %v3183, %v3183
    %v3192 = vpack.c.bf16 %v3184, %v3184
    %v3193 = vpack.c.bf16 %v3185, %v3185
    %v3194 = vpack.c.bf16 %v3186, %v3186
    %v3195 = vpack.c.bf16 %v3187, %v3187
    %v3196 = vpack.c.bf16 %v3188, %v3188
    %v3197 = vpack.c.bf16 %v3189, %v3189
    %v3198 = vpack.c.bf16 %v3190, %v3190
    %v3199 = vld [vmem:[#allocation8] sm:$0xff]
    %v3200 = vld [vmem:[#allocation8 + $0x8] sm:$0xff]
    %v3201 = vld [vmem:[#allocation8 + $0x10] sm:$0xff]
    %v3202 = vld [vmem:[#allocation8 + $0x18] sm:$0xff]
    %v3203 = vld [vmem:[#allocation8 + $0x20] sm:$0xff]
    %v3204 = vld [vmem:[#allocation8 + $0x28] sm:$0xff]
    %v3205 = vld [vmem:[#allocation8 + $0x30] sm:$0xff]
    %v3206 = vld [vmem:[#allocation8 + $0x38] sm:$0xff]
    %v3207 = vld [vmem:[#allocation8 + $0x40] sm:$0xff]
    %v3208 = vld [vmem:[#allocation8 + $0x48] sm:$0xff]
    %v3209 = vld [vmem:[#allocation8 + $0x50] sm:$0xff]
    %v3210 = vld [vmem:[#allocation8 + $0x58] sm:$0xff]
    %v3211 = vld [vmem:[#allocation8 + $0x60] sm:$0xff]
    %v3212 = vld [vmem:[#allocation8 + $0x68] sm:$0xff]
    %v3213 = vld [vmem:[#allocation8 + $0x70] sm:$0xff]
    %v3214 = vld [vmem:[#allocation8 + $0x78] sm:$0xff]
    %v3215 = vld [vmem:[#allocation8 + $0x80] sm:$0xff]
    %v3216 = vld [vmem:[#allocation8 + $0x88] sm:$0xff]
    %v3217 = vld [vmem:[#allocation8 + $0x90] sm:$0xff]
    %v3218 = vld [vmem:[#allocation8 + $0x98] sm:$0xff]
    %v3219 = vld [vmem:[#allocation8 + $0xa0] sm:$0xff]
    %v3220 = vld [vmem:[#allocation8 + $0xa8] sm:$0xff]
    %v3221 = vld [vmem:[#allocation8 + $0xb0] sm:$0xff]
    %v3222 = vld [vmem:[#allocation8 + $0xb8] sm:$0xff]
    %v3223 = vld [vmem:[#allocation8 + $0xc0] sm:$0xff]
    %v3224 = vld [vmem:[#allocation8 + $0xc8] sm:$0xff]
    %v3225 = vld [vmem:[#allocation8 + $0xd0] sm:$0xff]
    %v3226 = vld [vmem:[#allocation8 + $0xd8] sm:$0xff]
    %v3227 = vld [vmem:[#allocation8 + $0xe0] sm:$0xff]
    %v3228 = vld [vmem:[#allocation8 + $0xe8] sm:$0xff]
    %v3229 = vld [vmem:[#allocation8 + $0xf0] sm:$0xff]
    %v3230 = vld [vmem:[#allocation8 + $0xf8] sm:$0xff]
    %v3231 = vld [vmem:[#allocation8 + $0x100] sm:$0xff]
    %v3232 = vld [vmem:[#allocation8 + $0x108] sm:$0xff]
    %v3233 = vld [vmem:[#allocation8 + $0x110] sm:$0xff]
    %v3234 = vld [vmem:[#allocation8 + $0x118] sm:$0xff]
    %v3235 = vld [vmem:[#allocation8 + $0x120] sm:$0xff]
    %v3236 = vld [vmem:[#allocation8 + $0x128] sm:$0xff]
    %v3237 = vld [vmem:[#allocation8 + $0x130] sm:$0xff]
    %v3238 = vld [vmem:[#allocation8 + $0x138] sm:$0xff]
    %v3239 = vld [vmem:[#allocation8 + $0x140] sm:$0xff]
    %v3240 = vld [vmem:[#allocation8 + $0x148] sm:$0xff]
    %v3241 = vld [vmem:[#allocation8 + $0x150] sm:$0xff]
    %v3242 = vld [vmem:[#allocation8 + $0x158] sm:$0xff]
    %v3243 = vld [vmem:[#allocation8 + $0x160] sm:$0xff]
    %v3244 = vld [vmem:[#allocation8 + $0x168] sm:$0xff]
    %v3245 = vld [vmem:[#allocation8 + $0x170] sm:$0xff]
    %v3246 = vld [vmem:[#allocation8 + $0x178] sm:$0xff]
    %v3247 = vld [vmem:[#allocation8 + $0x180] sm:$0xff]
    %v3248 = vld [vmem:[#allocation8 + $0x188] sm:$0xff]
    %v3249 = vld [vmem:[#allocation8 + $0x190] sm:$0xff]
    %v3250 = vld [vmem:[#allocation8 + $0x198] sm:$0xff]
    %v3251 = vld [vmem:[#allocation8 + $0x1a0] sm:$0xff]
    %v3252 = vld [vmem:[#allocation8 + $0x1a8] sm:$0xff]
    %v3253 = vld [vmem:[#allocation8 + $0x1b0] sm:$0xff]
    %v3254 = vld [vmem:[#allocation8 + $0x1b8] sm:$0xff]
    %v3255 = vld [vmem:[#allocation8 + $0x1c0] sm:$0xff]
    %v3256 = vld [vmem:[#allocation8 + $0x1c8] sm:$0xff]
    %v3257 = vld [vmem:[#allocation8 + $0x1d0] sm:$0xff]
    %v3258 = vld [vmem:[#allocation8 + $0x1d8] sm:$0xff]
    %v3259 = vld [vmem:[#allocation8 + $0x1e0] sm:$0xff]
    %v3260 = vld [vmem:[#allocation8 + $0x1e8] sm:$0xff]
    %v3261 = vld [vmem:[#allocation8 + $0x1f0] sm:$0xff]
    %v3262 = vld [vmem:[#allocation8 + $0x1f8] sm:$0xff]
    %v3263 = vld [vmem:[#allocation8 + $0x200] sm:$0xff]
    %v3264 = vld [vmem:[#allocation8 + $0x208] sm:$0xff]
    %v3265 = vld [vmem:[#allocation8 + $0x210] sm:$0xff]
    %v3266 = vld [vmem:[#allocation8 + $0x218] sm:$0xff]
    %v3267 = vld [vmem:[#allocation8 + $0x220] sm:$0xff]
    %v3268 = vld [vmem:[#allocation8 + $0x228] sm:$0xff]
    %v3269 = vld [vmem:[#allocation8 + $0x230] sm:$0xff]
    %v3270 = vld [vmem:[#allocation8 + $0x238] sm:$0xff]
    %v3271 = vld [vmem:[#allocation8 + $0x240] sm:$0xff]
    %v3272 = vld [vmem:[#allocation8 + $0x248] sm:$0xff]
    %v3273 = vld [vmem:[#allocation8 + $0x250] sm:$0xff]
    %v3274 = vld [vmem:[#allocation8 + $0x258] sm:$0xff]
    %v3275 = vld [vmem:[#allocation8 + $0x260] sm:$0xff]
    %v3276 = vld [vmem:[#allocation8 + $0x268] sm:$0xff]
    %v3277 = vld [vmem:[#allocation8 + $0x270] sm:$0xff]
    %v3278 = vld [vmem:[#allocation8 + $0x278] sm:$0xff]
    %v3279 = vld [vmem:[#allocation8 + $0x280] sm:$0xff]
    %v3280 = vld [vmem:[#allocation8 + $0x288] sm:$0xff]
    %v3281 = vld [vmem:[#allocation8 + $0x290] sm:$0xff]
    %v3282 = vld [vmem:[#allocation8 + $0x298] sm:$0xff]
    %v3283 = vld [vmem:[#allocation8 + $0x2a0] sm:$0xff]
    %v3284 = vld [vmem:[#allocation8 + $0x2a8] sm:$0xff]
    %v3285 = vld [vmem:[#allocation8 + $0x2b0] sm:$0xff]
    %v3286 = vld [vmem:[#allocation8 + $0x2b8] sm:$0xff]
    %v3287 = vld [vmem:[#allocation8 + $0x2c0] sm:$0xff]
    %v3288 = vld [vmem:[#allocation8 + $0x2c8] sm:$0xff]
    %v3289 = vld [vmem:[#allocation8 + $0x2d0] sm:$0xff]
    %v3290 = vld [vmem:[#allocation8 + $0x2d8] sm:$0xff]
    %v3291 = vld [vmem:[#allocation8 + $0x2e0] sm:$0xff]
    %v3292 = vld [vmem:[#allocation8 + $0x2e8] sm:$0xff]
    %v3293 = vld [vmem:[#allocation8 + $0x2f0] sm:$0xff]
    %v3294 = vld [vmem:[#allocation8 + $0x2f8] sm:$0xff]
    %v3295 = vld [vmem:[#allocation8 + $0x300] sm:$0xff]
    %v3296 = vld [vmem:[#allocation8 + $0x308] sm:$0xff]
    %v3297 = vld [vmem:[#allocation8 + $0x310] sm:$0xff]
    %v3298 = vld [vmem:[#allocation8 + $0x318] sm:$0xff]
    %v3299 = vld [vmem:[#allocation8 + $0x320] sm:$0xff]
    %v3300 = vld [vmem:[#allocation8 + $0x328] sm:$0xff]
    %v3301 = vld [vmem:[#allocation8 + $0x330] sm:$0xff]
    %v3302 = vld [vmem:[#allocation8 + $0x338] sm:$0xff]
    %v3303 = vld [vmem:[#allocation8 + $0x340] sm:$0xff]
    %v3304 = vld [vmem:[#allocation8 + $0x348] sm:$0xff]
    %v3305 = vld [vmem:[#allocation8 + $0x350] sm:$0xff]
    %v3306 = vld [vmem:[#allocation8 + $0x358] sm:$0xff]
    %v3307 = vld [vmem:[#allocation8 + $0x360] sm:$0xff]
    %v3308 = vld [vmem:[#allocation8 + $0x368] sm:$0xff]
    %v3309 = vld [vmem:[#allocation8 + $0x370] sm:$0xff]
    %v3310 = vld [vmem:[#allocation8 + $0x378] sm:$0xff]
    %v3311 = vld [vmem:[#allocation8 + $0x380] sm:$0xff]
    %v3312 = vld [vmem:[#allocation8 + $0x388] sm:$0xff]
    %v3313 = vld [vmem:[#allocation8 + $0x390] sm:$0xff]
    %v3314 = vld [vmem:[#allocation8 + $0x398] sm:$0xff]
    %v3315 = vld [vmem:[#allocation8 + $0x3a0] sm:$0xff]
    %v3316 = vld [vmem:[#allocation8 + $0x3a8] sm:$0xff]
    %v3317 = vld [vmem:[#allocation8 + $0x3b0] sm:$0xff]
    %v3318 = vld [vmem:[#allocation8 + $0x3b8] sm:$0xff]
    %v3319 = vld [vmem:[#allocation8 + $0x3c0] sm:$0xff]
    %v3320 = vld [vmem:[#allocation8 + $0x3c8] sm:$0xff]
    %v3321 = vld [vmem:[#allocation8 + $0x3d0] sm:$0xff]
    %v3322 = vld [vmem:[#allocation8 + $0x3d8] sm:$0xff]
    %v3323 = vld [vmem:[#allocation8 + $0x3e0] sm:$0xff]
    %v3324 = vld [vmem:[#allocation8 + $0x3e8] sm:$0xff]
    %v3325 = vld [vmem:[#allocation8 + $0x3f0] sm:$0xff]
    %v3326 = vld [vmem:[#allocation8 + $0x3f8] sm:$0xff]
    %v3327 = vld [vmem:[#allocation8 + $0x400] sm:$0xff]
    %v3328 = vld [vmem:[#allocation8 + $0x408] sm:$0xff]
    %v3329 = vld [vmem:[#allocation8 + $0x410] sm:$0xff]
    %v3330 = vld [vmem:[#allocation8 + $0x418] sm:$0xff]
    %v3331 = vld [vmem:[#allocation8 + $0x420] sm:$0xff]
    %v3332 = vld [vmem:[#allocation8 + $0x428] sm:$0xff]
    %v3333 = vld [vmem:[#allocation8 + $0x430] sm:$0xff]
    %v3334 = vld [vmem:[#allocation8 + $0x438] sm:$0xff]
    %v3335 = vld [vmem:[#allocation8 + $0x440] sm:$0xff]
    %v3336 = vld [vmem:[#allocation8 + $0x448] sm:$0xff]
    %v3337 = vld [vmem:[#allocation8 + $0x450] sm:$0xff]
    %v3338 = vld [vmem:[#allocation8 + $0x458] sm:$0xff]
    %v3339 = vld [vmem:[#allocation8 + $0x460] sm:$0xff]
    %v3340 = vld [vmem:[#allocation8 + $0x468] sm:$0xff]
    %v3341 = vld [vmem:[#allocation8 + $0x470] sm:$0xff]
    %v3342 = vld [vmem:[#allocation8 + $0x478] sm:$0xff]
    %v3343 = vld [vmem:[#allocation8 + $0x480] sm:$0xff]
    %v3344 = vld [vmem:[#allocation8 + $0x488] sm:$0xff]
    %v3345 = vld [vmem:[#allocation8 + $0x490] sm:$0xff]
    %v3346 = vld [vmem:[#allocation8 + $0x498] sm:$0xff]
    %v3347 = vld [vmem:[#allocation8 + $0x4a0] sm:$0xff]
    %v3348 = vld [vmem:[#allocation8 + $0x4a8] sm:$0xff]
    %v3349 = vld [vmem:[#allocation8 + $0x4b0] sm:$0xff]
    %v3350 = vld [vmem:[#allocation8 + $0x4b8] sm:$0xff]
    %v3351 = vld [vmem:[#allocation8 + $0x4c0] sm:$0xff]
    %v3352 = vld [vmem:[#allocation8 + $0x4c8] sm:$0xff]
    %v3353 = vld [vmem:[#allocation8 + $0x4d0] sm:$0xff]
    %v3354 = vld [vmem:[#allocation8 + $0x4d8] sm:$0xff]
    %v3355 = vld [vmem:[#allocation8 + $0x4e0] sm:$0xff]
    %v3356 = vld [vmem:[#allocation8 + $0x4e8] sm:$0xff]
    %v3357 = vld [vmem:[#allocation8 + $0x4f0] sm:$0xff]
    %v3358 = vld [vmem:[#allocation8 + $0x4f8] sm:$0xff]
    %v3359 = vld [vmem:[#allocation8 + $0x500] sm:$0xff]
    %v3360 = vld [vmem:[#allocation8 + $0x508] sm:$0xff]
    %v3361 = vld [vmem:[#allocation8 + $0x510] sm:$0xff]
    %v3362 = vld [vmem:[#allocation8 + $0x518] sm:$0xff]
    %v3363 = vld [vmem:[#allocation8 + $0x520] sm:$0xff]
    %v3364 = vld [vmem:[#allocation8 + $0x528] sm:$0xff]
    %v3365 = vld [vmem:[#allocation8 + $0x530] sm:$0xff]
    %v3366 = vld [vmem:[#allocation8 + $0x538] sm:$0xff]
    %v3367 = vld [vmem:[#allocation8 + $0x540] sm:$0xff]
    %v3368 = vld [vmem:[#allocation8 + $0x548] sm:$0xff]
    %v3369 = vld [vmem:[#allocation8 + $0x550] sm:$0xff]
    %v3370 = vld [vmem:[#allocation8 + $0x558] sm:$0xff]
    %v3371 = vld [vmem:[#allocation8 + $0x560] sm:$0xff]
    %v3372 = vld [vmem:[#allocation8 + $0x568] sm:$0xff]
    %v3373 = vld [vmem:[#allocation8 + $0x570] sm:$0xff]
    %v3374 = vld [vmem:[#allocation8 + $0x578] sm:$0xff]
    %v3375 = vld [vmem:[#allocation8 + $0x580] sm:$0xff]
    %v3376 = vld [vmem:[#allocation8 + $0x588] sm:$0xff]
    %v3377 = vld [vmem:[#allocation8 + $0x590] sm:$0xff]
    %v3378 = vld [vmem:[#allocation8 + $0x598] sm:$0xff]
    %v3379 = vld [vmem:[#allocation8 + $0x5a0] sm:$0xff]
    %v3380 = vld [vmem:[#allocation8 + $0x5a8] sm:$0xff]
    %v3381 = vld [vmem:[#allocation8 + $0x5b0] sm:$0xff]
    %v3382 = vld [vmem:[#allocation8 + $0x5b8] sm:$0xff]
    %v3383 = vld [vmem:[#allocation8 + $0x5c0] sm:$0xff]
    %v3384 = vld [vmem:[#allocation8 + $0x5c8] sm:$0xff]
    %v3385 = vld [vmem:[#allocation8 + $0x5d0] sm:$0xff]
    %v3386 = vld [vmem:[#allocation8 + $0x5d8] sm:$0xff]
    %v3387 = vld [vmem:[#allocation8 + $0x5e0] sm:$0xff]
    %v3388 = vld [vmem:[#allocation8 + $0x5e8] sm:$0xff]
    %v3389 = vld [vmem:[#allocation8 + $0x5f0] sm:$0xff]
    %v3390 = vld [vmem:[#allocation8 + $0x5f8] sm:$0xff]
    %v3391 = vld [vmem:[#allocation8 + $0x600] sm:$0xff]
    %v3392 = vld [vmem:[#allocation8 + $0x608] sm:$0xff]
    %v3393 = vld [vmem:[#allocation8 + $0x610] sm:$0xff]
    %v3394 = vld [vmem:[#allocation8 + $0x618] sm:$0xff]
    %v3395 = vld [vmem:[#allocation8 + $0x620] sm:$0xff]
    %v3396 = vld [vmem:[#allocation8 + $0x628] sm:$0xff]
    %v3397 = vld [vmem:[#allocation8 + $0x630] sm:$0xff]
    %v3398 = vld [vmem:[#allocation8 + $0x638] sm:$0xff]
    %v3399 = vld [vmem:[#allocation8 + $0x640] sm:$0xff]
    %v3400 = vld [vmem:[#allocation8 + $0x648] sm:$0xff]
    %v3401 = vld [vmem:[#allocation8 + $0x650] sm:$0xff]
    %v3402 = vld [vmem:[#allocation8 + $0x658] sm:$0xff]
    %v3403 = vld [vmem:[#allocation8 + $0x660] sm:$0xff]
    %v3404 = vld [vmem:[#allocation8 + $0x668] sm:$0xff]
    %v3405 = vld [vmem:[#allocation8 + $0x670] sm:$0xff]
    %v3406 = vld [vmem:[#allocation8 + $0x678] sm:$0xff]
    %v3407 = vld [vmem:[#allocation8 + $0x680] sm:$0xff]
    %v3408 = vld [vmem:[#allocation8 + $0x688] sm:$0xff]
    %v3409 = vld [vmem:[#allocation8 + $0x690] sm:$0xff]
    %v3410 = vld [vmem:[#allocation8 + $0x698] sm:$0xff]
    %v3411 = vld [vmem:[#allocation8 + $0x6a0] sm:$0xff]
    %v3412 = vld [vmem:[#allocation8 + $0x6a8] sm:$0xff]
    %v3413 = vld [vmem:[#allocation8 + $0x6b0] sm:$0xff]
    %v3414 = vld [vmem:[#allocation8 + $0x6b8] sm:$0xff]
    %v3415 = vld [vmem:[#allocation8 + $0x6c0] sm:$0xff]
    %v3416 = vld [vmem:[#allocation8 + $0x6c8] sm:$0xff]
    %v3417 = vld [vmem:[#allocation8 + $0x6d0] sm:$0xff]
    %v3418 = vld [vmem:[#allocation8 + $0x6d8] sm:$0xff]
    %v3419 = vld [vmem:[#allocation8 + $0x6e0] sm:$0xff]
    %v3420 = vld [vmem:[#allocation8 + $0x6e8] sm:$0xff]
    %v3421 = vld [vmem:[#allocation8 + $0x6f0] sm:$0xff]
    %v3422 = vld [vmem:[#allocation8 + $0x6f8] sm:$0xff]
    %v3423 = vld [vmem:[#allocation8 + $0x700] sm:$0xff]
    %v3424 = vld [vmem:[#allocation8 + $0x708] sm:$0xff]
    %v3425 = vld [vmem:[#allocation8 + $0x710] sm:$0xff]
    %v3426 = vld [vmem:[#allocation8 + $0x718] sm:$0xff]
    %v3427 = vld [vmem:[#allocation8 + $0x720] sm:$0xff]
    %v3428 = vld [vmem:[#allocation8 + $0x728] sm:$0xff]
    %v3429 = vld [vmem:[#allocation8 + $0x730] sm:$0xff]
    %v3430 = vld [vmem:[#allocation8 + $0x738] sm:$0xff]
    %v3431 = vld [vmem:[#allocation8 + $0x740] sm:$0xff]
    %v3432 = vld [vmem:[#allocation8 + $0x748] sm:$0xff]
    %v3433 = vld [vmem:[#allocation8 + $0x750] sm:$0xff]
    %v3434 = vld [vmem:[#allocation8 + $0x758] sm:$0xff]
    %v3435 = vld [vmem:[#allocation8 + $0x760] sm:$0xff]
    %v3436 = vld [vmem:[#allocation8 + $0x768] sm:$0xff]
    %v3437 = vld [vmem:[#allocation8 + $0x770] sm:$0xff]
    %v3438 = vld [vmem:[#allocation8 + $0x778] sm:$0xff]
    %v3439 = vld [vmem:[#allocation8 + $0x780] sm:$0xff]
    %v3440 = vld [vmem:[#allocation8 + $0x788] sm:$0xff]
    %v3441 = vld [vmem:[#allocation8 + $0x790] sm:$0xff]
    %v3442 = vld [vmem:[#allocation8 + $0x798] sm:$0xff]
    %v3443 = vld [vmem:[#allocation8 + $0x7a0] sm:$0xff]
    %v3444 = vld [vmem:[#allocation8 + $0x7a8] sm:$0xff]
    %v3445 = vld [vmem:[#allocation8 + $0x7b0] sm:$0xff]
    %v3446 = vld [vmem:[#allocation8 + $0x7b8] sm:$0xff]
    %v3447 = vld [vmem:[#allocation8 + $0x7c0] sm:$0xff]
    %v3448 = vld [vmem:[#allocation8 + $0x7c8] sm:$0xff]
    %v3449 = vld [vmem:[#allocation8 + $0x7d0] sm:$0xff]
    %v3450 = vld [vmem:[#allocation8 + $0x7d8] sm:$0xff]
    %v3451 = vld [vmem:[#allocation8 + $0x7e0] sm:$0xff]
    %v3452 = vld [vmem:[#allocation8 + $0x7e8] sm:$0xff]
    %v3453 = vld [vmem:[#allocation8 + $0x7f0] sm:$0xff]
    %v3454 = vld [vmem:[#allocation8 + $0x7f8] sm:$0xff]
    %v3455 = vld [vmem:[#allocation10] sm:$0xf]
    %v3457 = vlaneseq
    %v3458 = vshrl.u32 %v3457, 7
    %v3459 = vsub.s32 0, %v3458
    %v3460 = vrot.slane %v3455, %v3459
    %v3461 = vlaneseq
    %v3462 = vshrl.u32 %v3461, 7
    %v3463 = vsub.s32 1, %v3462
    %v3464 = vrot.slane %v3455, %v3463
    %v3465 = vlaneseq
    %v3466 = vshrl.u32 %v3465, 7
    %v3467 = vsub.s32 2, %v3466
    %v3468 = vrot.slane %v3455, %v3467
    %v3469 = vlaneseq
    %v3470 = vshrl.u32 %v3469, 7
    %v3471 = vsub.s32 3, %v3470
    %v3472 = vrot.slane %v3455, %v3471
    %v3733 = vunpack.c.l.b16 %v3199
    %v3734 = vunpack.c.h.b16 %v3199
    %v3735 = vunpack.c.l.b16 %v3200
    %v3736 = vunpack.c.h.b16 %v3200
    %v3737 = vunpack.c.l.b16 %v3201
    %v3738 = vunpack.c.h.b16 %v3201
    %v3739 = vunpack.c.l.b16 %v3202
    %v3740 = vunpack.c.h.b16 %v3202
    %v3741 = vunpack.c.l.b16 %v3203
    %v3742 = vunpack.c.h.b16 %v3203
    %v3743 = vunpack.c.l.b16 %v3204
    %v3744 = vunpack.c.h.b16 %v3204
    %v3745 = vunpack.c.l.b16 %v3205
    %v3746 = vunpack.c.h.b16 %v3205
    %v3747 = vunpack.c.l.b16 %v3206
    %v3748 = vunpack.c.h.b16 %v3206
    %v3749 = vunpack.c.l.b16 %v3207
    %v3750 = vunpack.c.h.b16 %v3207
    %v3751 = vunpack.c.l.b16 %v3208
    %v3752 = vunpack.c.h.b16 %v3208
    %v3753 = vunpack.c.l.b16 %v3209
    %v3754 = vunpack.c.h.b16 %v3209
    %v3755 = vunpack.c.l.b16 %v3210
    %v3756 = vunpack.c.h.b16 %v3210
    %v3757 = vunpack.c.l.b16 %v3211
    %v3758 = vunpack.c.h.b16 %v3211
    %v3759 = vunpack.c.l.b16 %v3212
    %v3760 = vunpack.c.h.b16 %v3212
    %v3761 = vunpack.c.l.b16 %v3213
    %v3762 = vunpack.c.h.b16 %v3213
    %v3763 = vunpack.c.l.b16 %v3214
    %v3764 = vunpack.c.h.b16 %v3214
    %v3765 = vunpack.c.l.b16 %v3215
    %v3766 = vunpack.c.h.b16 %v3215
    %v3767 = vunpack.c.l.b16 %v3216
    %v3768 = vunpack.c.h.b16 %v3216
    %v3769 = vunpack.c.l.b16 %v3217
    %v3770 = vunpack.c.h.b16 %v3217
    %v3771 = vunpack.c.l.b16 %v3218
    %v3772 = vunpack.c.h.b16 %v3218
    %v3773 = vunpack.c.l.b16 %v3219
    %v3774 = vunpack.c.h.b16 %v3219
    %v3775 = vunpack.c.l.b16 %v3220
    %v3776 = vunpack.c.h.b16 %v3220
    %v3777 = vunpack.c.l.b16 %v3221
    %v3778 = vunpack.c.h.b16 %v3221
    %v3779 = vunpack.c.l.b16 %v3222
    %v3780 = vunpack.c.h.b16 %v3222
    %v3781 = vunpack.c.l.b16 %v3223
    %v3782 = vunpack.c.h.b16 %v3223
    %v3783 = vunpack.c.l.b16 %v3224
    %v3784 = vunpack.c.h.b16 %v3224
    %v3785 = vunpack.c.l.b16 %v3225
    %v3786 = vunpack.c.h.b16 %v3225
    %v3787 = vunpack.c.l.b16 %v3226
    %v3788 = vunpack.c.h.b16 %v3226
    %v3789 = vunpack.c.l.b16 %v3227
    %v3790 = vunpack.c.h.b16 %v3227
    %v3791 = vunpack.c.l.b16 %v3228
    %v3792 = vunpack.c.h.b16 %v3228
    %v3793 = vunpack.c.l.b16 %v3229
    %v3794 = vunpack.c.h.b16 %v3229
    %v3795 = vunpack.c.l.b16 %v3230
    %v3796 = vunpack.c.h.b16 %v3230
    %v3797 = vunpack.c.l.b16 %v3231
    %v3798 = vunpack.c.h.b16 %v3231
    %v3799 = vunpack.c.l.b16 %v3232
    %v3800 = vunpack.c.h.b16 %v3232
    %v3801 = vunpack.c.l.b16 %v3233
    %v3802 = vunpack.c.h.b16 %v3233
    %v3803 = vunpack.c.l.b16 %v3234
    %v3804 = vunpack.c.h.b16 %v3234
    %v3805 = vunpack.c.l.b16 %v3235
    %v3806 = vunpack.c.h.b16 %v3235
    %v3807 = vunpack.c.l.b16 %v3236
    %v3808 = vunpack.c.h.b16 %v3236
    %v3809 = vunpack.c.l.b16 %v3237
    %v3810 = vunpack.c.h.b16 %v3237
    %v3811 = vunpack.c.l.b16 %v3238
    %v3812 = vunpack.c.h.b16 %v3238
    %v3813 = vunpack.c.l.b16 %v3239
    %v3814 = vunpack.c.h.b16 %v3239
    %v3815 = vunpack.c.l.b16 %v3240
    %v3816 = vunpack.c.h.b16 %v3240
    %v3817 = vunpack.c.l.b16 %v3241
    %v3818 = vunpack.c.h.b16 %v3241
    %v3819 = vunpack.c.l.b16 %v3242
    %v3820 = vunpack.c.h.b16 %v3242
    %v3821 = vunpack.c.l.b16 %v3243
    %v3822 = vunpack.c.h.b16 %v3243
    %v3823 = vunpack.c.l.b16 %v3244
    %v3824 = vunpack.c.h.b16 %v3244
    %v3825 = vunpack.c.l.b16 %v3245
    %v3826 = vunpack.c.h.b16 %v3245
    %v3827 = vunpack.c.l.b16 %v3246
    %v3828 = vunpack.c.h.b16 %v3246
    %v3829 = vunpack.c.l.b16 %v3247
    %v3830 = vunpack.c.h.b16 %v3247
    %v3831 = vunpack.c.l.b16 %v3248
    %v3832 = vunpack.c.h.b16 %v3248
    %v3833 = vunpack.c.l.b16 %v3249
    %v3834 = vunpack.c.h.b16 %v3249
    %v3835 = vunpack.c.l.b16 %v3250
    %v3836 = vunpack.c.h.b16 %v3250
    %v3837 = vunpack.c.l.b16 %v3251
    %v3838 = vunpack.c.h.b16 %v3251
    %v3839 = vunpack.c.l.b16 %v3252
    %v3840 = vunpack.c.h.b16 %v3252
    %v3841 = vunpack.c.l.b16 %v3253
    %v3842 = vunpack.c.h.b16 %v3253
    %v3843 = vunpack.c.l.b16 %v3254
    %v3844 = vunpack.c.h.b16 %v3254
    %v3845 = vunpack.c.l.b16 %v3255
    %v3846 = vunpack.c.h.b16 %v3255
    %v3847 = vunpack.c.l.b16 %v3256
    %v3848 = vunpack.c.h.b16 %v3256
    %v3849 = vunpack.c.l.b16 %v3257
    %v3850 = vunpack.c.h.b16 %v3257
    %v3851 = vunpack.c.l.b16 %v3258
    %v3852 = vunpack.c.h.b16 %v3258
    %v3853 = vunpack.c.l.b16 %v3259
    %v3854 = vunpack.c.h.b16 %v3259
    %v3855 = vunpack.c.l.b16 %v3260
    %v3856 = vunpack.c.h.b16 %v3260
    %v3857 = vunpack.c.l.b16 %v3261
    %v3858 = vunpack.c.h.b16 %v3261
    %v3859 = vunpack.c.l.b16 %v3262
    %v3860 = vunpack.c.h.b16 %v3262
    %v3861 = vunpack.c.l.b16 %v3263
    %v3862 = vunpack.c.h.b16 %v3263
    %v3863 = vunpack.c.l.b16 %v3264
    %v3864 = vunpack.c.h.b16 %v3264
    %v3865 = vunpack.c.l.b16 %v3265
    %v3866 = vunpack.c.h.b16 %v3265
    %v3867 = vunpack.c.l.b16 %v3266
    %v3868 = vunpack.c.h.b16 %v3266
    %v3869 = vunpack.c.l.b16 %v3267
    %v3870 = vunpack.c.h.b16 %v3267
    %v3871 = vunpack.c.l.b16 %v3268
    %v3872 = vunpack.c.h.b16 %v3268
    %v3873 = vunpack.c.l.b16 %v3269
    %v3874 = vunpack.c.h.b16 %v3269
    %v3875 = vunpack.c.l.b16 %v3270
    %v3876 = vunpack.c.h.b16 %v3270
    %v3877 = vunpack.c.l.b16 %v3271
    %v3878 = vunpack.c.h.b16 %v3271
    %v3879 = vunpack.c.l.b16 %v3272
    %v3880 = vunpack.c.h.b16 %v3272
    %v3881 = vunpack.c.l.b16 %v3273
    %v3882 = vunpack.c.h.b16 %v3273
    %v3883 = vunpack.c.l.b16 %v3274
    %v3884 = vunpack.c.h.b16 %v3274
    %v3885 = vunpack.c.l.b16 %v3275
    %v3886 = vunpack.c.h.b16 %v3275
    %v3887 = vunpack.c.l.b16 %v3276
    %v3888 = vunpack.c.h.b16 %v3276
    %v3889 = vunpack.c.l.b16 %v3277
    %v3890 = vunpack.c.h.b16 %v3277
    %v3891 = vunpack.c.l.b16 %v3278
    %v3892 = vunpack.c.h.b16 %v3278
    %v3893 = vunpack.c.l.b16 %v3279
    %v3894 = vunpack.c.h.b16 %v3279
    %v3895 = vunpack.c.l.b16 %v3280
    %v3896 = vunpack.c.h.b16 %v3280
    %v3897 = vunpack.c.l.b16 %v3281
    %v3898 = vunpack.c.h.b16 %v3281
    %v3899 = vunpack.c.l.b16 %v3282
    %v3900 = vunpack.c.h.b16 %v3282
    %v3901 = vunpack.c.l.b16 %v3283
    %v3902 = vunpack.c.h.b16 %v3283
    %v3903 = vunpack.c.l.b16 %v3284
    %v3904 = vunpack.c.h.b16 %v3284
    %v3905 = vunpack.c.l.b16 %v3285
    %v3906 = vunpack.c.h.b16 %v3285
    %v3907 = vunpack.c.l.b16 %v3286
    %v3908 = vunpack.c.h.b16 %v3286
    %v3909 = vunpack.c.l.b16 %v3287
    %v3910 = vunpack.c.h.b16 %v3287
    %v3911 = vunpack.c.l.b16 %v3288
    %v3912 = vunpack.c.h.b16 %v3288
    %v3913 = vunpack.c.l.b16 %v3289
    %v3914 = vunpack.c.h.b16 %v3289
    %v3915 = vunpack.c.l.b16 %v3290
    %v3916 = vunpack.c.h.b16 %v3290
    %v3917 = vunpack.c.l.b16 %v3291
    %v3918 = vunpack.c.h.b16 %v3291
    %v3919 = vunpack.c.l.b16 %v3292
    %v3920 = vunpack.c.h.b16 %v3292
    %v3921 = vunpack.c.l.b16 %v3293
    %v3922 = vunpack.c.h.b16 %v3293
    %v3923 = vunpack.c.l.b16 %v3294
    %v3924 = vunpack.c.h.b16 %v3294
    %v3925 = vunpack.c.l.b16 %v3295
    %v3926 = vunpack.c.h.b16 %v3295
    %v3927 = vunpack.c.l.b16 %v3296
    %v3928 = vunpack.c.h.b16 %v3296
    %v3929 = vunpack.c.l.b16 %v3297
    %v3930 = vunpack.c.h.b16 %v3297
    %v3931 = vunpack.c.l.b16 %v3298
    %v3932 = vunpack.c.h.b16 %v3298
    %v3933 = vunpack.c.l.b16 %v3299
    %v3934 = vunpack.c.h.b16 %v3299
    %v3935 = vunpack.c.l.b16 %v3300
    %v3936 = vunpack.c.h.b16 %v3300
    %v3937 = vunpack.c.l.b16 %v3301
    %v3938 = vunpack.c.h.b16 %v3301
    %v3939 = vunpack.c.l.b16 %v3302
    %v3940 = vunpack.c.h.b16 %v3302
    %v3941 = vunpack.c.l.b16 %v3303
    %v3942 = vunpack.c.h.b16 %v3303
    %v3943 = vunpack.c.l.b16 %v3304
    %v3944 = vunpack.c.h.b16 %v3304
    %v3945 = vunpack.c.l.b16 %v3305
    %v3946 = vunpack.c.h.b16 %v3305
    %v3947 = vunpack.c.l.b16 %v3306
    %v3948 = vunpack.c.h.b16 %v3306
    %v3949 = vunpack.c.l.b16 %v3307
    %v3950 = vunpack.c.h.b16 %v3307
    %v3951 = vunpack.c.l.b16 %v3308
    %v3952 = vunpack.c.h.b16 %v3308
    %v3953 = vunpack.c.l.b16 %v3309
    %v3954 = vunpack.c.h.b16 %v3309
    %v3955 = vunpack.c.l.b16 %v3310
    %v3956 = vunpack.c.h.b16 %v3310
    %v3957 = vunpack.c.l.b16 %v3311
    %v3958 = vunpack.c.h.b16 %v3311
    %v3959 = vunpack.c.l.b16 %v3312
    %v3960 = vunpack.c.h.b16 %v3312
    %v3961 = vunpack.c.l.b16 %v3313
    %v3962 = vunpack.c.h.b16 %v3313
    %v3963 = vunpack.c.l.b16 %v3314
    %v3964 = vunpack.c.h.b16 %v3314
    %v3965 = vunpack.c.l.b16 %v3315
    %v3966 = vunpack.c.h.b16 %v3315
    %v3967 = vunpack.c.l.b16 %v3316
    %v3968 = vunpack.c.h.b16 %v3316
    %v3969 = vunpack.c.l.b16 %v3317
    %v3970 = vunpack.c.h.b16 %v3317
    %v3971 = vunpack.c.l.b16 %v3318
    %v3972 = vunpack.c.h.b16 %v3318
    %v3973 = vunpack.c.l.b16 %v3319
    %v3974 = vunpack.c.h.b16 %v3319
    %v3975 = vunpack.c.l.b16 %v3320
    %v3976 = vunpack.c.h.b16 %v3320
    %v3977 = vunpack.c.l.b16 %v3321
    %v3978 = vunpack.c.h.b16 %v3321
    %v3979 = vunpack.c.l.b16 %v3322
    %v3980 = vunpack.c.h.b16 %v3322
    %v3981 = vunpack.c.l.b16 %v3323
    %v3982 = vunpack.c.h.b16 %v3323
    %v3983 = vunpack.c.l.b16 %v3324
    %v3984 = vunpack.c.h.b16 %v3324
    %v3985 = vunpack.c.l.b16 %v3325
    %v3986 = vunpack.c.h.b16 %v3325
    %v3987 = vunpack.c.l.b16 %v3326
    %v3988 = vunpack.c.h.b16 %v3326
    %v3989 = vunpack.c.l.b16 %v3327
    %v3990 = vunpack.c.h.b16 %v3327
    %v3991 = vunpack.c.l.b16 %v3328
    %v3992 = vunpack.c.h.b16 %v3328
    %v3993 = vunpack.c.l.b16 %v3329
    %v3994 = vunpack.c.h.b16 %v3329
    %v3995 = vunpack.c.l.b16 %v3330
    %v3996 = vunpack.c.h.b16 %v3330
    %v3997 = vunpack.c.l.b16 %v3331
    %v3998 = vunpack.c.h.b16 %v3331
    %v3999 = vunpack.c.l.b16 %v3332
    %v4000 = vunpack.c.h.b16 %v3332
    %v4001 = vunpack.c.l.b16 %v3333
    %v4002 = vunpack.c.h.b16 %v3333
    %v4003 = vunpack.c.l.b16 %v3334
    %v4004 = vunpack.c.h.b16 %v3334
    %v4005 = vunpack.c.l.b16 %v3335
    %v4006 = vunpack.c.h.b16 %v3335
    %v4007 = vunpack.c.l.b16 %v3336
    %v4008 = vunpack.c.h.b16 %v3336
    %v4009 = vunpack.c.l.b16 %v3337
    %v4010 = vunpack.c.h.b16 %v3337
    %v4011 = vunpack.c.l.b16 %v3338
    %v4012 = vunpack.c.h.b16 %v3338
    %v4013 = vunpack.c.l.b16 %v3339
    %v4014 = vunpack.c.h.b16 %v3339
    %v4015 = vunpack.c.l.b16 %v3340
    %v4016 = vunpack.c.h.b16 %v3340
    %v4017 = vunpack.c.l.b16 %v3341
    %v4018 = vunpack.c.h.b16 %v3341
    %v4019 = vunpack.c.l.b16 %v3342
    %v4020 = vunpack.c.h.b16 %v3342
    %v4021 = vunpack.c.l.b16 %v3343
    %v4022 = vunpack.c.h.b16 %v3343
    %v4023 = vunpack.c.l.b16 %v3344
    %v4024 = vunpack.c.h.b16 %v3344
    %v4025 = vunpack.c.l.b16 %v3345
    %v4026 = vunpack.c.h.b16 %v3345
    %v4027 = vunpack.c.l.b16 %v3346
    %v4028 = vunpack.c.h.b16 %v3346
    %v4029 = vunpack.c.l.b16 %v3347
    %v4030 = vunpack.c.h.b16 %v3347
    %v4031 = vunpack.c.l.b16 %v3348
    %v4032 = vunpack.c.h.b16 %v3348
    %v4033 = vunpack.c.l.b16 %v3349
    %v4034 = vunpack.c.h.b16 %v3349
    %v4035 = vunpack.c.l.b16 %v3350
    %v4036 = vunpack.c.h.b16 %v3350
    %v4037 = vunpack.c.l.b16 %v3351
    %v4038 = vunpack.c.h.b16 %v3351
    %v4039 = vunpack.c.l.b16 %v3352
    %v4040 = vunpack.c.h.b16 %v3352
    %v4041 = vunpack.c.l.b16 %v3353
    %v4042 = vunpack.c.h.b16 %v3353
    %v4043 = vunpack.c.l.b16 %v3354
    %v4044 = vunpack.c.h.b16 %v3354
    %v4045 = vunpack.c.l.b16 %v3355
    %v4046 = vunpack.c.h.b16 %v3355
    %v4047 = vunpack.c.l.b16 %v3356
    %v4048 = vunpack.c.h.b16 %v3356
    %v4049 = vunpack.c.l.b16 %v3357
    %v4050 = vunpack.c.h.b16 %v3357
    %v4051 = vunpack.c.l.b16 %v3358
    %v4052 = vunpack.c.h.b16 %v3358
    %v4053 = vunpack.c.l.b16 %v3359
    %v4054 = vunpack.c.h.b16 %v3359
    %v4055 = vunpack.c.l.b16 %v3360
    %v4056 = vunpack.c.h.b16 %v3360
    %v4057 = vunpack.c.l.b16 %v3361
    %v4058 = vunpack.c.h.b16 %v3361
    %v4059 = vunpack.c.l.b16 %v3362
    %v4060 = vunpack.c.h.b16 %v3362
    %v4061 = vunpack.c.l.b16 %v3363
    %v4062 = vunpack.c.h.b16 %v3363
    %v4063 = vunpack.c.l.b16 %v3364
    %v4064 = vunpack.c.h.b16 %v3364
    %v4065 = vunpack.c.l.b16 %v3365
    %v4066 = vunpack.c.h.b16 %v3365
    %v4067 = vunpack.c.l.b16 %v3366
    %v4068 = vunpack.c.h.b16 %v3366
    %v4069 = vunpack.c.l.b16 %v3367
    %v4070 = vunpack.c.h.b16 %v3367
    %v4071 = vunpack.c.l.b16 %v3368
    %v4072 = vunpack.c.h.b16 %v3368
    %v4073 = vunpack.c.l.b16 %v3369
    %v4074 = vunpack.c.h.b16 %v3369
    %v4075 = vunpack.c.l.b16 %v3370
    %v4076 = vunpack.c.h.b16 %v3370
    %v4077 = vunpack.c.l.b16 %v3371
    %v4078 = vunpack.c.h.b16 %v3371
    %v4079 = vunpack.c.l.b16 %v3372
    %v4080 = vunpack.c.h.b16 %v3372
    %v4081 = vunpack.c.l.b16 %v3373
    %v4082 = vunpack.c.h.b16 %v3373
    %v4083 = vunpack.c.l.b16 %v3374
    %v4084 = vunpack.c.h.b16 %v3374
    %v4085 = vunpack.c.l.b16 %v3375
    %v4086 = vunpack.c.h.b16 %v3375
    %v4087 = vunpack.c.l.b16 %v3376
    %v4088 = vunpack.c.h.b16 %v3376
    %v4089 = vunpack.c.l.b16 %v3377
    %v4090 = vunpack.c.h.b16 %v3377
    %v4091 = vunpack.c.l.b16 %v3378
    %v4092 = vunpack.c.h.b16 %v3378
    %v4093 = vunpack.c.l.b16 %v3379
    %v4094 = vunpack.c.h.b16 %v3379
    %v4095 = vunpack.c.l.b16 %v3380
    %v4096 = vunpack.c.h.b16 %v3380
    %v4097 = vunpack.c.l.b16 %v3381
    %v4098 = vunpack.c.h.b16 %v3381
    %v4099 = vunpack.c.l.b16 %v3382
    %v4100 = vunpack.c.h.b16 %v3382
    %v4101 = vunpack.c.l.b16 %v3383
    %v4102 = vunpack.c.h.b16 %v3383
    %v4103 = vunpack.c.l.b16 %v3384
    %v4104 = vunpack.c.h.b16 %v3384
    %v4105 = vunpack.c.l.b16 %v3385
    %v4106 = vunpack.c.h.b16 %v3385
    %v4107 = vunpack.c.l.b16 %v3386
    %v4108 = vunpack.c.h.b16 %v3386
    %v4109 = vunpack.c.l.b16 %v3387
    %v4110 = vunpack.c.h.b16 %v3387
    %v4111 = vunpack.c.l.b16 %v3388
    %v4112 = vunpack.c.h.b16 %v3388
    %v4113 = vunpack.c.l.b16 %v3389
    %v4114 = vunpack.c.h.b16 %v3389
    %v4115 = vunpack.c.l.b16 %v3390
    %v4116 = vunpack.c.h.b16 %v3390
    %v4117 = vunpack.c.l.b16 %v3391
    %v4118 = vunpack.c.h.b16 %v3391
    %v4119 = vunpack.c.l.b16 %v3392
    %v4120 = vunpack.c.h.b16 %v3392
    %v4121 = vunpack.c.l.b16 %v3393
    %v4122 = vunpack.c.h.b16 %v3393
    %v4123 = vunpack.c.l.b16 %v3394
    %v4124 = vunpack.c.h.b16 %v3394
    %v4125 = vunpack.c.l.b16 %v3395
    %v4126 = vunpack.c.h.b16 %v3395
    %v4127 = vunpack.c.l.b16 %v3396
    %v4128 = vunpack.c.h.b16 %v3396
    %v4129 = vunpack.c.l.b16 %v3397
    %v4130 = vunpack.c.h.b16 %v3397
    %v4131 = vunpack.c.l.b16 %v3398
    %v4132 = vunpack.c.h.b16 %v3398
    %v4133 = vunpack.c.l.b16 %v3399
    %v4134 = vunpack.c.h.b16 %v3399
    %v4135 = vunpack.c.l.b16 %v3400
    %v4136 = vunpack.c.h.b16 %v3400
    %v4137 = vunpack.c.l.b16 %v3401
    %v4138 = vunpack.c.h.b16 %v3401
    %v4139 = vunpack.c.l.b16 %v3402
    %v4140 = vunpack.c.h.b16 %v3402
    %v4141 = vunpack.c.l.b16 %v3403
    %v4142 = vunpack.c.h.b16 %v3403
    %v4143 = vunpack.c.l.b16 %v3404
    %v4144 = vunpack.c.h.b16 %v3404
    %v4145 = vunpack.c.l.b16 %v3405
    %v4146 = vunpack.c.h.b16 %v3405
    %v4147 = vunpack.c.l.b16 %v3406
    %v4148 = vunpack.c.h.b16 %v3406
    %v4149 = vunpack.c.l.b16 %v3407
    %v4150 = vunpack.c.h.b16 %v3407
    %v4151 = vunpack.c.l.b16 %v3408
    %v4152 = vunpack.c.h.b16 %v3408
    %v4153 = vunpack.c.l.b16 %v3409
    %v4154 = vunpack.c.h.b16 %v3409
    %v4155 = vunpack.c.l.b16 %v3410
    %v4156 = vunpack.c.h.b16 %v3410
    %v4157 = vunpack.c.l.b16 %v3411
    %v4158 = vunpack.c.h.b16 %v3411
    %v4159 = vunpack.c.l.b16 %v3412
    %v4160 = vunpack.c.h.b16 %v3412
    %v4161 = vunpack.c.l.b16 %v3413
    %v4162 = vunpack.c.h.b16 %v3413
    %v4163 = vunpack.c.l.b16 %v3414
    %v4164 = vunpack.c.h.b16 %v3414
    %v4165 = vunpack.c.l.b16 %v3415
    %v4166 = vunpack.c.h.b16 %v3415
    %v4167 = vunpack.c.l.b16 %v3416
    %v4168 = vunpack.c.h.b16 %v3416
    %v4169 = vunpack.c.l.b16 %v3417
    %v4170 = vunpack.c.h.b16 %v3417
    %v4171 = vunpack.c.l.b16 %v3418
    %v4172 = vunpack.c.h.b16 %v3418
    %v4173 = vunpack.c.l.b16 %v3419
    %v4174 = vunpack.c.h.b16 %v3419
    %v4175 = vunpack.c.l.b16 %v3420
    %v4176 = vunpack.c.h.b16 %v3420
    %v4177 = vunpack.c.l.b16 %v3421
    %v4178 = vunpack.c.h.b16 %v3421
    %v4179 = vunpack.c.l.b16 %v3422
    %v4180 = vunpack.c.h.b16 %v3422
    %v4181 = vunpack.c.l.b16 %v3423
    %v4182 = vunpack.c.h.b16 %v3423
    %v4183 = vunpack.c.l.b16 %v3424
    %v4184 = vunpack.c.h.b16 %v3424
    %v4185 = vunpack.c.l.b16 %v3425
    %v4186 = vunpack.c.h.b16 %v3425
    %v4187 = vunpack.c.l.b16 %v3426
    %v4188 = vunpack.c.h.b16 %v3426
    %v4189 = vunpack.c.l.b16 %v3427
    %v4190 = vunpack.c.h.b16 %v3427
    %v4191 = vunpack.c.l.b16 %v3428
    %v4192 = vunpack.c.h.b16 %v3428
    %v4193 = vunpack.c.l.b16 %v3429
    %v4194 = vunpack.c.h.b16 %v3429
    %v4195 = vunpack.c.l.b16 %v3430
    %v4196 = vunpack.c.h.b16 %v3430
    %v4197 = vunpack.c.l.b16 %v3431
    %v4198 = vunpack.c.h.b16 %v3431
    %v4199 = vunpack.c.l.b16 %v3432
    %v4200 = vunpack.c.h.b16 %v3432
    %v4201 = vunpack.c.l.b16 %v3433
    %v4202 = vunpack.c.h.b16 %v3433
    %v4203 = vunpack.c.l.b16 %v3434
    %v4204 = vunpack.c.h.b16 %v3434
    %v4205 = vunpack.c.l.b16 %v3435
    %v4206 = vunpack.c.h.b16 %v3435
    %v4207 = vunpack.c.l.b16 %v3436
    %v4208 = vunpack.c.h.b16 %v3436
    %v4209 = vunpack.c.l.b16 %v3437
    %v4210 = vunpack.c.h.b16 %v3437
    %v4211 = vunpack.c.l.b16 %v3438
    %v4212 = vunpack.c.h.b16 %v3438
    %v4213 = vunpack.c.l.b16 %v3439
    %v4214 = vunpack.c.h.b16 %v3439
    %v4215 = vunpack.c.l.b16 %v3440
    %v4216 = vunpack.c.h.b16 %v3440
    %v4217 = vunpack.c.l.b16 %v3441
    %v4218 = vunpack.c.h.b16 %v3441
    %v4219 = vunpack.c.l.b16 %v3442
    %v4220 = vunpack.c.h.b16 %v3442
    %v4221 = vunpack.c.l.b16 %v3443
    %v4222 = vunpack.c.h.b16 %v3443
    %v4223 = vunpack.c.l.b16 %v3444
    %v4224 = vunpack.c.h.b16 %v3444
    %v4225 = vunpack.c.l.b16 %v3445
    %v4226 = vunpack.c.h.b16 %v3445
    %v4227 = vunpack.c.l.b16 %v3446
    %v4228 = vunpack.c.h.b16 %v3446
    %v4229 = vunpack.c.l.b16 %v3447
    %v4230 = vunpack.c.h.b16 %v3447
    %v4231 = vunpack.c.l.b16 %v3448
    %v4232 = vunpack.c.h.b16 %v3448
    %v4233 = vunpack.c.l.b16 %v3449
    %v4234 = vunpack.c.h.b16 %v3449
    %v4235 = vunpack.c.l.b16 %v3450
    %v4236 = vunpack.c.h.b16 %v3450
    %v4237 = vunpack.c.l.b16 %v3451
    %v4238 = vunpack.c.h.b16 %v3451
    %v4239 = vunpack.c.l.b16 %v3452
    %v4240 = vunpack.c.h.b16 %v3452
    %v4241 = vunpack.c.l.b16 %v3453
    %v4242 = vunpack.c.h.b16 %v3453
    %v4243 = vunpack.c.l.b16 %v3454
    %v4244 = vunpack.c.h.b16 %v3454
    %v4245 = vpack.c.b16 %v3737, %v3733
    %v4246 = vpack.c.b16 %v3738, %v3734
    %v4247 = vpack.c.b16 %v3739, %v3735
    %v4248 = vpack.c.b16 %v3740, %v3736
    %v4249 = vpack.c.b16 %v3745, %v3741
    %v4250 = vpack.c.b16 %v3746, %v3742
    %v4251 = vpack.c.b16 %v3747, %v3743
    %v4252 = vpack.c.b16 %v3748, %v3744
    %v4253 = vpack.c.b16 %v3753, %v3749
    %v4254 = vpack.c.b16 %v3754, %v3750
    %v4255 = vpack.c.b16 %v3755, %v3751
    %v4256 = vpack.c.b16 %v3756, %v3752
    %v4257 = vpack.c.b16 %v3761, %v3757
    %v4258 = vpack.c.b16 %v3762, %v3758
    %v4259 = vpack.c.b16 %v3763, %v3759
    %v4260 = vpack.c.b16 %v3764, %v3760
    %v4261 = vpack.c.b16 %v3769, %v3765
    %v4262 = vpack.c.b16 %v3770, %v3766
    %v4263 = vpack.c.b16 %v3771, %v3767
    %v4264 = vpack.c.b16 %v3772, %v3768
    %v4265 = vpack.c.b16 %v3777, %v3773
    %v4266 = vpack.c.b16 %v3778, %v3774
    %v4267 = vpack.c.b16 %v3779, %v3775
    %v4268 = vpack.c.b16 %v3780, %v3776
    %v4269 = vpack.c.b16 %v3785, %v3781
    %v4270 = vpack.c.b16 %v3786, %v3782
    %v4271 = vpack.c.b16 %v3787, %v3783
    %v4272 = vpack.c.b16 %v3788, %v3784
    %v4273 = vpack.c.b16 %v3793, %v3789
    %v4274 = vpack.c.b16 %v3794, %v3790
    %v4275 = vpack.c.b16 %v3795, %v3791
    %v4276 = vpack.c.b16 %v3796, %v3792
    %v4277 = vpack.c.b16 %v3801, %v3797
    %v4278 = vpack.c.b16 %v3802, %v3798
    %v4279 = vpack.c.b16 %v3803, %v3799
    %v4280 = vpack.c.b16 %v3804, %v3800
    %v4281 = vpack.c.b16 %v3809, %v3805
    %v4282 = vpack.c.b16 %v3810, %v3806
    %v4283 = vpack.c.b16 %v3811, %v3807
    %v4284 = vpack.c.b16 %v3812, %v3808
    %v4285 = vpack.c.b16 %v3817, %v3813
    %v4286 = vpack.c.b16 %v3818, %v3814
    %v4287 = vpack.c.b16 %v3819, %v3815
    %v4288 = vpack.c.b16 %v3820, %v3816
    %v4289 = vpack.c.b16 %v3825, %v3821
    %v4290 = vpack.c.b16 %v3826, %v3822
    %v4291 = vpack.c.b16 %v3827, %v3823
    %v4292 = vpack.c.b16 %v3828, %v3824
    %v4293 = vpack.c.b16 %v3833, %v3829
    %v4294 = vpack.c.b16 %v3834, %v3830
    %v4295 = vpack.c.b16 %v3835, %v3831
    %v4296 = vpack.c.b16 %v3836, %v3832
    %v4297 = vpack.c.b16 %v3841, %v3837
    %v4298 = vpack.c.b16 %v3842, %v3838
    %v4299 = vpack.c.b16 %v3843, %v3839
    %v4300 = vpack.c.b16 %v3844, %v3840
    %v4301 = vpack.c.b16 %v3849, %v3845
    %v4302 = vpack.c.b16 %v3850, %v3846
    %v4303 = vpack.c.b16 %v3851, %v3847
    %v4304 = vpack.c.b16 %v3852, %v3848
    %v4305 = vpack.c.b16 %v3857, %v3853
    %v4306 = vpack.c.b16 %v3858, %v3854
    %v4307 = vpack.c.b16 %v3859, %v3855
    %v4308 = vpack.c.b16 %v3860, %v3856
    %v4309 = vpack.c.b16 %v3865, %v3861
    %v4310 = vpack.c.b16 %v3866, %v3862
    %v4311 = vpack.c.b16 %v3867, %v3863
    %v4312 = vpack.c.b16 %v3868, %v3864
    %v4313 = vpack.c.b16 %v3873, %v3869
    %v4314 = vpack.c.b16 %v3874, %v3870
    %v4315 = vpack.c.b16 %v3875, %v3871
    %v4316 = vpack.c.b16 %v3876, %v3872
    %v4317 = vpack.c.b16 %v3881, %v3877
    %v4318 = vpack.c.b16 %v3882, %v3878
    %v4319 = vpack.c.b16 %v3883, %v3879
    %v4320 = vpack.c.b16 %v3884, %v3880
    %v4321 = vpack.c.b16 %v3889, %v3885
    %v4322 = vpack.c.b16 %v3890, %v3886
    %v4323 = vpack.c.b16 %v3891, %v3887
    %v4324 = vpack.c.b16 %v3892, %v3888
    %v4325 = vpack.c.b16 %v3897, %v3893
    %v4326 = vpack.c.b16 %v3898, %v3894
    %v4327 = vpack.c.b16 %v3899, %v3895
    %v4328 = vpack.c.b16 %v3900, %v3896
    %v4329 = vpack.c.b16 %v3905, %v3901
    %v4330 = vpack.c.b16 %v3906, %v3902
    %v4331 = vpack.c.b16 %v3907, %v3903
    %v4332 = vpack.c.b16 %v3908, %v3904
    %v4333 = vpack.c.b16 %v3913, %v3909
    %v4334 = vpack.c.b16 %v3914, %v3910
    %v4335 = vpack.c.b16 %v3915, %v3911
    %v4336 = vpack.c.b16 %v3916, %v3912
    %v4337 = vpack.c.b16 %v3921, %v3917
    %v4338 = vpack.c.b16 %v3922, %v3918
    %v4339 = vpack.c.b16 %v3923, %v3919
    %v4340 = vpack.c.b16 %v3924, %v3920
    %v4341 = vpack.c.b16 %v3929, %v3925
    %v4342 = vpack.c.b16 %v3930, %v3926
    %v4343 = vpack.c.b16 %v3931, %v3927
    %v4344 = vpack.c.b16 %v3932, %v3928
    %v4345 = vpack.c.b16 %v3937, %v3933
    %v4346 = vpack.c.b16 %v3938, %v3934
    %v4347 = vpack.c.b16 %v3939, %v3935
    %v4348 = vpack.c.b16 %v3940, %v3936
    %v4349 = vpack.c.b16 %v3945, %v3941
    %v4350 = vpack.c.b16 %v3946, %v3942
    %v4351 = vpack.c.b16 %v3947, %v3943
    %v4352 = vpack.c.b16 %v3948, %v3944
    %v4353 = vpack.c.b16 %v3953, %v3949
    %v4354 = vpack.c.b16 %v3954, %v3950
    %v4355 = vpack.c.b16 %v3955, %v3951
    %v4356 = vpack.c.b16 %v3956, %v3952
    %v4357 = vpack.c.b16 %v3961, %v3957
    %v4358 = vpack.c.b16 %v3962, %v3958
    %v4359 = vpack.c.b16 %v3963, %v3959
    %v4360 = vpack.c.b16 %v3964, %v3960
    %v4361 = vpack.c.b16 %v3969, %v3965
    %v4362 = vpack.c.b16 %v3970, %v3966
    %v4363 = vpack.c.b16 %v3971, %v3967
    %v4364 = vpack.c.b16 %v3972, %v3968
    %v4365 = vpack.c.b16 %v3977, %v3973
    %v4366 = vpack.c.b16 %v3978, %v3974
    %v4367 = vpack.c.b16 %v3979, %v3975
    %v4368 = vpack.c.b16 %v3980, %v3976
    %v4369 = vpack.c.b16 %v3985, %v3981
    %v4370 = vpack.c.b16 %v3986, %v3982
    %v4371 = vpack.c.b16 %v3987, %v3983
    %v4372 = vpack.c.b16 %v3988, %v3984
    %v4373 = vpack.c.b16 %v3993, %v3989
    %v4374 = vpack.c.b16 %v3994, %v3990
    %v4375 = vpack.c.b16 %v3995, %v3991
    %v4376 = vpack.c.b16 %v3996, %v3992
    %v4377 = vpack.c.b16 %v4001, %v3997
    %v4378 = vpack.c.b16 %v4002, %v3998
    %v4379 = vpack.c.b16 %v4003, %v3999
    %v4380 = vpack.c.b16 %v4004, %v4000
    %v4381 = vpack.c.b16 %v4009, %v4005
    %v4382 = vpack.c.b16 %v4010, %v4006
    %v4383 = vpack.c.b16 %v4011, %v4007
    %v4384 = vpack.c.b16 %v4012, %v4008
    %v4385 = vpack.c.b16 %v4017, %v4013
    %v4386 = vpack.c.b16 %v4018, %v4014
    %v4387 = vpack.c.b16 %v4019, %v4015
    %v4388 = vpack.c.b16 %v4020, %v4016
    %v4389 = vpack.c.b16 %v4025, %v4021
    %v4390 = vpack.c.b16 %v4026, %v4022
    %v4391 = vpack.c.b16 %v4027, %v4023
    %v4392 = vpack.c.b16 %v4028, %v4024
    %v4393 = vpack.c.b16 %v4033, %v4029
    %v4394 = vpack.c.b16 %v4034, %v4030
    %v4395 = vpack.c.b16 %v4035, %v4031
    %v4396 = vpack.c.b16 %v4036, %v4032
    %v4397 = vpack.c.b16 %v4041, %v4037
    %v4398 = vpack.c.b16 %v4042, %v4038
    %v4399 = vpack.c.b16 %v4043, %v4039
    %v4400 = vpack.c.b16 %v4044, %v4040
    %v4401 = vpack.c.b16 %v4049, %v4045
    %v4402 = vpack.c.b16 %v4050, %v4046
    %v4403 = vpack.c.b16 %v4051, %v4047
    %v4404 = vpack.c.b16 %v4052, %v4048
    %v4405 = vpack.c.b16 %v4057, %v4053
    %v4406 = vpack.c.b16 %v4058, %v4054
    %v4407 = vpack.c.b16 %v4059, %v4055
    %v4408 = vpack.c.b16 %v4060, %v4056
    %v4409 = vpack.c.b16 %v4065, %v4061
    %v4410 = vpack.c.b16 %v4066, %v4062
    %v4411 = vpack.c.b16 %v4067, %v4063
    %v4412 = vpack.c.b16 %v4068, %v4064
    %v4413 = vpack.c.b16 %v4073, %v4069
    %v4414 = vpack.c.b16 %v4074, %v4070
    %v4415 = vpack.c.b16 %v4075, %v4071
    %v4416 = vpack.c.b16 %v4076, %v4072
    %v4417 = vpack.c.b16 %v4081, %v4077
    %v4418 = vpack.c.b16 %v4082, %v4078
    %v4419 = vpack.c.b16 %v4083, %v4079
    %v4420 = vpack.c.b16 %v4084, %v4080
    %v4421 = vpack.c.b16 %v4089, %v4085
    %v4422 = vpack.c.b16 %v4090, %v4086
    %v4423 = vpack.c.b16 %v4091, %v4087
    %v4424 = vpack.c.b16 %v4092, %v4088
    %v4425 = vpack.c.b16 %v4097, %v4093
    %v4426 = vpack.c.b16 %v4098, %v4094
    %v4427 = vpack.c.b16 %v4099, %v4095
    %v4428 = vpack.c.b16 %v4100, %v4096
    %v4429 = vpack.c.b16 %v4105, %v4101
    %v4430 = vpack.c.b16 %v4106, %v4102
    %v4431 = vpack.c.b16 %v4107, %v4103
    %v4432 = vpack.c.b16 %v4108, %v4104
    %v4433 = vpack.c.b16 %v4113, %v4109
    %v4434 = vpack.c.b16 %v4114, %v4110
    %v4435 = vpack.c.b16 %v4115, %v4111
    %v4436 = vpack.c.b16 %v4116, %v4112
    %v4437 = vpack.c.b16 %v4121, %v4117
    %v4438 = vpack.c.b16 %v4122, %v4118
    %v4439 = vpack.c.b16 %v4123, %v4119
    %v4440 = vpack.c.b16 %v4124, %v4120
    %v4441 = vpack.c.b16 %v4129, %v4125
    %v4442 = vpack.c.b16 %v4130, %v4126
    %v4443 = vpack.c.b16 %v4131, %v4127
    %v4444 = vpack.c.b16 %v4132, %v4128
    %v4445 = vpack.c.b16 %v4137, %v4133
    %v4446 = vpack.c.b16 %v4138, %v4134
    %v4447 = vpack.c.b16 %v4139, %v4135
    %v4448 = vpack.c.b16 %v4140, %v4136
    %v4449 = vpack.c.b16 %v4145, %v4141
    %v4450 = vpack.c.b16 %v4146, %v4142
    %v4451 = vpack.c.b16 %v4147, %v4143
    %v4452 = vpack.c.b16 %v4148, %v4144
    %v4453 = vpack.c.b16 %v4153, %v4149
    %v4454 = vpack.c.b16 %v4154, %v4150
    %v4455 = vpack.c.b16 %v4155, %v4151
    %v4456 = vpack.c.b16 %v4156, %v4152
    %v4457 = vpack.c.b16 %v4161, %v4157
    %v4458 = vpack.c.b16 %v4162, %v4158
    %v4459 = vpack.c.b16 %v4163, %v4159
    %v4460 = vpack.c.b16 %v4164, %v4160
    %v4461 = vpack.c.b16 %v4169, %v4165
    %v4462 = vpack.c.b16 %v4170, %v4166
    %v4463 = vpack.c.b16 %v4171, %v4167
    %v4464 = vpack.c.b16 %v4172, %v4168
    %v4465 = vpack.c.b16 %v4177, %v4173
    %v4466 = vpack.c.b16 %v4178, %v4174
    %v4467 = vpack.c.b16 %v4179, %v4175
    %v4468 = vpack.c.b16 %v4180, %v4176
    %v4469 = vpack.c.b16 %v4185, %v4181
    %v4470 = vpack.c.b16 %v4186, %v4182
    %v4471 = vpack.c.b16 %v4187, %v4183
    %v4472 = vpack.c.b16 %v4188, %v4184
    %v4473 = vpack.c.b16 %v4193, %v4189
    %v4474 = vpack.c.b16 %v4194, %v4190
    %v4475 = vpack.c.b16 %v4195, %v4191
    %v4476 = vpack.c.b16 %v4196, %v4192
    %v4477 = vpack.c.b16 %v4201, %v4197
    %v4478 = vpack.c.b16 %v4202, %v4198
    %v4479 = vpack.c.b16 %v4203, %v4199
    %v4480 = vpack.c.b16 %v4204, %v4200
    %v4481 = vpack.c.b16 %v4209, %v4205
    %v4482 = vpack.c.b16 %v4210, %v4206
    %v4483 = vpack.c.b16 %v4211, %v4207
    %v4484 = vpack.c.b16 %v4212, %v4208
    %v4485 = vpack.c.b16 %v4217, %v4213
    %v4486 = vpack.c.b16 %v4218, %v4214
    %v4487 = vpack.c.b16 %v4219, %v4215
    %v4488 = vpack.c.b16 %v4220, %v4216
    %v4489 = vpack.c.b16 %v4225, %v4221
    %v4490 = vpack.c.b16 %v4226, %v4222
    %v4491 = vpack.c.b16 %v4227, %v4223
    %v4492 = vpack.c.b16 %v4228, %v4224
    %v4493 = vpack.c.b16 %v4233, %v4229
    %v4494 = vpack.c.b16 %v4234, %v4230
    %v4495 = vpack.c.b16 %v4235, %v4231
    %v4496 = vpack.c.b16 %v4236, %v4232
    %v4497 = vpack.c.b16 %v4241, %v4237
    %v4498 = vpack.c.b16 %v4242, %v4238
    %v4499 = vpack.c.b16 %v4243, %v4239
    %v4500 = vpack.c.b16 %v4244, %v4240
    %4757 = vmatprep.subr.bf16.mxu0 %v4246
    %4758 = vmatpush1.bf16.msra.mxu0 %v4245
    %4759 = vmatprep.subr.bf16.mxu0 %v4250
    %4760 = vmatpush1.bf16.msra.mxu0 %v4249
    %4761 = vmatprep.subr.bf16.mxu0 %v4254
    %4762 = vmatpush1.bf16.msra.mxu0 %v4253
    %4763 = vmatprep.subr.bf16.mxu0 %v4258
    %4764 = vmatpush1.bf16.msra.mxu0 %v4257
    %4765 = vmatprep.subr.bf16.mxu0 %v4262
    %4766 = vmatpush1.bf16.msra.mxu0 %v4261
    %4767 = vmatprep.subr.bf16.mxu0 %v4266
    %4768 = vmatpush1.bf16.msra.mxu0 %v4265
    %4769 = vmatprep.subr.bf16.mxu0 %v4270
    %4770 = vmatpush1.bf16.msra.mxu0 %v4269
    %4771 = vmatprep.subr.bf16.mxu0 %v4274
    %4772 = vmatpush1.bf16.msra.mxu0 %v4273
    %4773 = vmatprep.subr.bf16.mxu0 %v4278
    %4774 = vmatpush1.bf16.msra.mxu0 %v4277
    %4775 = vmatprep.subr.bf16.mxu0 %v4282
    %4776 = vmatpush1.bf16.msra.mxu0 %v4281
    %4777 = vmatprep.subr.bf16.mxu0 %v4286
    %4778 = vmatpush1.bf16.msra.mxu0 %v4285
    %4779 = vmatprep.subr.bf16.mxu0 %v4290
    %4780 = vmatpush1.bf16.msra.mxu0 %v4289
    %4781 = vmatprep.subr.bf16.mxu0 %v4294
    %4782 = vmatpush1.bf16.msra.mxu0 %v4293
    %4783 = vmatprep.subr.bf16.mxu0 %v4298
    %4784 = vmatpush1.bf16.msra.mxu0 %v4297
    %4785 = vmatprep.subr.bf16.mxu0 %v4302
    %4786 = vmatpush1.bf16.msra.mxu0 %v4301
    %4787 = vmatprep.subr.bf16.mxu0 %v4306
    %4788 = vmatpush1.bf16.msra.mxu0 %v4305
    %4789 = vmatprep.mubr.bf16.mxu0 %v3192
    %4790 = vmatmul.mubr.bf16.gmra.mrb[0].mxu0 %v3191
    %v4791 = vpop.f32.mrb[0].mxu0
    %v4792 = vadd.f32 %v3460, %v4791
    %v4793 = vpop.f32.mrb[0].mxu0
    %v4794 = vadd.f32 %v3464, %v4793
    %v4795 = vpop.f32.mrb[0].mxu0
    %v4796 = vpop.f32.mrb[0].mxu0
    %4797 = vdwg.mxu0
    %4798 = vmatprep.subr.bf16.mxu0 %v4310
    %4799 = vmatpush1.bf16.msra.mxu0 %v4309
    %4800 = vmatprep.subr.bf16.mxu0 %v4314
    %4801 = vmatpush1.bf16.msra.mxu0 %v4313
    %4802 = vmatprep.subr.bf16.mxu0 %v4318
    %4803 = vmatpush1.bf16.msra.mxu0 %v4317
    %4804 = vmatprep.subr.bf16.mxu0 %v4322
    %4805 = vmatpush1.bf16.msra.mxu0 %v4321
    %4806 = vmatprep.subr.bf16.mxu0 %v4326
    %4807 = vmatpush1.bf16.msra.mxu0 %v4325
    %4808 = vmatprep.subr.bf16.mxu0 %v4330
    %4809 = vmatpush1.bf16.msra.mxu0 %v4329
    %4810 = vmatprep.subr.bf16.mxu0 %v4334
    %4811 = vmatpush1.bf16.msra.mxu0 %v4333
    %4812 = vmatprep.subr.bf16.mxu0 %v4338
    %4813 = vmatpush1.bf16.msra.mxu0 %v4337
    %4814 = vmatprep.subr.bf16.mxu0 %v4342
    %4815 = vmatpush1.bf16.msra.mxu0 %v4341
    %4816 = vmatprep.subr.bf16.mxu0 %v4346
    %4817 = vmatpush1.bf16.msra.mxu0 %v4345
    %4818 = vmatprep.subr.bf16.mxu0 %v4350
    %4819 = vmatpush1.bf16.msra.mxu0 %v4349
    %4820 = vmatprep.subr.bf16.mxu0 %v4354
    %4821 = vmatpush1.bf16.msra.mxu0 %v4353
    %4822 = vmatprep.subr.bf16.mxu0 %v4358
    %4823 = vmatpush1.bf16.msra.mxu0 %v4357
    %4824 = vmatprep.subr.bf16.mxu0 %v4362
    %4825 = vmatpush1.bf16.msra.mxu0 %v4361
    %4826 = vmatprep.subr.bf16.mxu0 %v4366
    %4827 = vmatpush1.bf16.msra.mxu0 %v4365
    %4828 = vmatprep.subr.bf16.mxu0 %v4370
    %4829 = vmatpush1.bf16.msra.mxu0 %v4369
    %4830 = vmatprep.mubr.bf16.mxu0 %v3194
    %4831 = vmatmul.mubr.bf16.gmra.mrb[0].mxu0 %v3193
    %v4832 = vpop.f32.mrb[0].mxu0
    %v4833 = vadd.f32 %v4792, %v4832
    %v4834 = vpop.f32.mrb[0].mxu0
    %v4835 = vadd.f32 %v4794, %v4834
    %v4836 = vpop.f32.mrb[0].mxu0
    %v4837 = vpop.f32.mrb[0].mxu0
    %4838 = vdwg.mxu0
    %4839 = vmatprep.subr.bf16.mxu0 %v4374
    %4840 = vmatpush1.bf16.msra.mxu0 %v4373
    %4841 = vmatprep.subr.bf16.mxu0 %v4378
    %4842 = vmatpush1.bf16.msra.mxu0 %v4377
    %4843 = vmatprep.subr.bf16.mxu0 %v4382
    %4844 = vmatpush1.bf16.msra.mxu0 %v4381
    %4845 = vmatprep.subr.bf16.mxu0 %v4386
    %4846 = vmatpush1.bf16.msra.mxu0 %v4385
    %4847 = vmatprep.subr.bf16.mxu0 %v4390
    %4848 = vmatpush1.bf16.msra.mxu0 %v4389
    %4849 = vmatprep.subr.bf16.mxu0 %v4394
    %4850 = vmatpush1.bf16.msra.mxu0 %v4393
    %4851 = vmatprep.subr.bf16.mxu0 %v4398
    %4852 = vmatpush1.bf16.msra.mxu0 %v4397
    %4853 = vmatprep.subr.bf16.mxu0 %v4402
    %4854 = vmatpush1.bf16.msra.mxu0 %v4401
    %4855 = vmatprep.subr.bf16.mxu0 %v4406
    %4856 = vmatpush1.bf16.msra.mxu0 %v4405
    %4857 = vmatprep.subr.bf16.mxu0 %v4410
    %4858 = vmatpush1.bf16.msra.mxu0 %v4409
    %4859 = vmatprep.subr.bf16.mxu0 %v4414
    %4860 = vmatpush1.bf16.msra.mxu0 %v4413
    %4861 = vmatprep.subr.bf16.mxu0 %v4418
    %4862 = vmatpush1.bf16.msra.mxu0 %v4417
    %4863 = vmatprep.subr.bf16.mxu0 %v4422
    %4864 = vmatpush1.bf16.msra.mxu0 %v4421
    %4865 = vmatprep.subr.bf16.mxu0 %v4426
    %4866 = vmatpush1.bf16.msra.mxu0 %v4425
    %4867 = vmatprep.subr.bf16.mxu0 %v4430
    %4868 = vmatpush1.bf16.msra.mxu0 %v4429
    %4869 = vmatprep.subr.bf16.mxu0 %v4434
    %4870 = vmatpush1.bf16.msra.mxu0 %v4433
    %4871 = vmatprep.mubr.bf16.mxu0 %v3196
    %4872 = vmatmul.mubr.bf16.gmra.mrb[0].mxu0 %v3195
    %v4873 = vpop.f32.mrb[0].mxu0
    %v4874 = vadd.f32 %v4833, %v4873
    %v4875 = vpop.f32.mrb[0].mxu0
    %v4876 = vadd.f32 %v4835, %v4875
    %v4877 = vpop.f32.mrb[0].mxu0
    %v4878 = vpop.f32.mrb[0].mxu0
    %4879 = vdwg.mxu0
    %4880 = vmatprep.subr.bf16.mxu0 %v4438
    %4881 = vmatpush1.bf16.msra.mxu0 %v4437
    %4882 = vmatprep.subr.bf16.mxu0 %v4442
    %4883 = vmatpush1.bf16.msra.mxu0 %v4441
    %4884 = vmatprep.subr.bf16.mxu0 %v4446
    %4885 = vmatpush1.bf16.msra.mxu0 %v4445
    %4886 = vmatprep.subr.bf16.mxu0 %v4450
    %4887 = vmatpush1.bf16.msra.mxu0 %v4449
    %4888 = vmatprep.subr.bf16.mxu0 %v4454
    %4889 = vmatpush1.bf16.msra.mxu0 %v4453
    %4890 = vmatprep.subr.bf16.mxu0 %v4458
    %4891 = vmatpush1.bf16.msra.mxu0 %v4457
    %4892 = vmatprep.subr.bf16.mxu0 %v4462
    %4893 = vmatpush1.bf16.msra.mxu0 %v4461
    %4894 = vmatprep.subr.bf16.mxu0 %v4466
    %4895 = vmatpush1.bf16.msra.mxu0 %v4465
    %4896 = vmatprep.subr.bf16.mxu0 %v4470
    %4897 = vmatpush1.bf16.msra.mxu0 %v4469
    %4898 = vmatprep.subr.bf16.mxu0 %v4474
    %4899 = vmatpush1.bf16.msra.mxu0 %v4473
    %4900 = vmatprep.subr.bf16.mxu0 %v4478
    %4901 = vmatpush1.bf16.msra.mxu0 %v4477
    %4902 = vmatprep.subr.bf16.mxu0 %v4482
    %4903 = vmatpush1.bf16.msra.mxu0 %v4481
    %4904 = vmatprep.subr.bf16.mxu0 %v4486
    %4905 = vmatpush1.bf16.msra.mxu0 %v4485
    %4906 = vmatprep.subr.bf16.mxu0 %v4490
    %4907 = vmatpush1.bf16.msra.mxu0 %v4489
    %4908 = vmatprep.subr.bf16.mxu0 %v4494
    %4909 = vmatpush1.bf16.msra.mxu0 %v4493
    %4910 = vmatprep.subr.bf16.mxu0 %v4498
    %4911 = vmatpush1.bf16.msra.mxu0 %v4497
    %4912 = vmatprep.mubr.bf16.mxu0 %v3198
    %4913 = vmatmul.mubr.bf16.gmra.mrb[0].mxu0 %v3197
    %v4914 = vpop.f32.mrb[0].mxu0
    %v4915 = vadd.f32 %v4874, %v4914
    %v4916 = vpop.f32.mrb[0].mxu0
    %v4917 = vadd.f32 %v4876, %v4916
    %v4918 = vpop.f32.mrb[0].mxu0
    %v4919 = vpop.f32.mrb[0].mxu0
    %4920 = vdwg.mxu0
    %4921 = vmatprep.subr.bf16.mxu0 %v4248
    %4922 = vmatpush1.bf16.msra.mxu0 %v4247
    %4923 = vmatprep.subr.bf16.mxu0 %v4252
    %4924 = vmatpush1.bf16.msra.mxu0 %v4251
    %4925 = vmatprep.subr.bf16.mxu0 %v4256
    %4926 = vmatpush1.bf16.msra.mxu0 %v4255
    %4927 = vmatprep.subr.bf16.mxu0 %v4260
    %4928 = vmatpush1.bf16.msra.mxu0 %v4259
    %4929 = vmatprep.subr.bf16.mxu0 %v4264
    %4930 = vmatpush1.bf16.msra.mxu0 %v4263
    %4931 = vmatprep.subr.bf16.mxu0 %v4268
    %4932 = vmatpush1.bf16.msra.mxu0 %v4267
    %4933 = vmatprep.subr.bf16.mxu0 %v4272
    %4934 = vmatpush1.bf16.msra.mxu0 %v4271
    %4935 = vmatprep.subr.bf16.mxu0 %v4276
    %4936 = vmatpush1.bf16.msra.mxu0 %v4275
    %4937 = vmatprep.subr.bf16.mxu0 %v4280
    %4938 = vmatpush1.bf16.msra.mxu0 %v4279
    %4939 = vmatprep.subr.bf16.mxu0 %v4284
    %4940 = vmatpush1.bf16.msra.mxu0 %v4283
    %4941 = vmatprep.subr.bf16.mxu0 %v4288
    %4942 = vmatpush1.bf16.msra.mxu0 %v4287
    %4943 = vmatprep.subr.bf16.mxu0 %v4292
    %4944 = vmatpush1.bf16.msra.mxu0 %v4291
    %4945 = vmatprep.subr.bf16.mxu0 %v4296
    %4946 = vmatpush1.bf16.msra.mxu0 %v4295
    %4947 = vmatprep.subr.bf16.mxu0 %v4300
    %4948 = vmatpush1.bf16.msra.mxu0 %v4299
    %4949 = vmatprep.subr.bf16.mxu0 %v4304
    %4950 = vmatpush1.bf16.msra.mxu0 %v4303
    %4951 = vmatprep.subr.bf16.mxu0 %v4308
    %4952 = vmatpush1.bf16.msra.mxu0 %v4307
    %4953 = vmatprep.mubr.bf16.mxu0 %v3192
    %4954 = vmatmul.mubr.bf16.gmra.mrb[0].mxu0 %v3191
    %v4955 = vpop.f32.mrb[0].mxu0
    %v4956 = vadd.f32 %v3468, %v4955
    %v4957 = vpop.f32.mrb[0].mxu0
    %v4958 = vadd.f32 %v3472, %v4957
    %v4959 = vpop.f32.mrb[0].mxu0
    %v4960 = vpop.f32.mrb[0].mxu0
    %4961 = vdwg.mxu0
    %4962 = vmatprep.subr.bf16.mxu0 %v4312
    %4963 = vmatpush1.bf16.msra.mxu0 %v4311
    %4964 = vmatprep.subr.bf16.mxu0 %v4316
    %4965 = vmatpush1.bf16.msra.mxu0 %v4315
    %4966 = vmatprep.subr.bf16.mxu0 %v4320
    %4967 = vmatpush1.bf16.msra.mxu0 %v4319
    %4968 = vmatprep.subr.bf16.mxu0 %v4324
    %4969 = vmatpush1.bf16.msra.mxu0 %v4323
    %4970 = vmatprep.subr.bf16.mxu0 %v4328
    %4971 = vmatpush1.bf16.msra.mxu0 %v4327
    %4972 = vmatprep.subr.bf16.mxu0 %v4332
    %4973 = vmatpush1.bf16.msra.mxu0 %v4331
    %4974 = vmatprep.subr.bf16.mxu0 %v4336
    %4975 = vmatpush1.bf16.msra.mxu0 %v4335
    %4976 = vmatprep.subr.bf16.mxu0 %v4340
    %4977 = vmatpush1.bf16.msra.mxu0 %v4339
    %4978 = vmatprep.subr.bf16.mxu0 %v4344
    %4979 = vmatpush1.bf16.msra.mxu0 %v4343
    %4980 = vmatprep.subr.bf16.mxu0 %v4348
    %4981 = vmatpush1.bf16.msra.mxu0 %v4347
    %4982 = vmatprep.subr.bf16.mxu0 %v4352
    %4983 = vmatpush1.bf16.msra.mxu0 %v4351
    %4984 = vmatprep.subr.bf16.mxu0 %v4356
    %4985 = vmatpush1.bf16.msra.mxu0 %v4355
    %4986 = vmatprep.subr.bf16.mxu0 %v4360
    %4987 = vmatpush1.bf16.msra.mxu0 %v4359
    %4988 = vmatprep.subr.bf16.mxu0 %v4364
    %4989 = vmatpush1.bf16.msra.mxu0 %v4363
    %4990 = vmatprep.subr.bf16.mxu0 %v4368
    %4991 = vmatpush1.bf16.msra.mxu0 %v4367
    %4992 = vmatprep.subr.bf16.mxu0 %v4372
    %4993 = vmatpush1.bf16.msra.mxu0 %v4371
    %4994 = vmatprep.mubr.bf16.mxu0 %v3194
    %4995 = vmatmul.mubr.bf16.gmra.mrb[0].mxu0 %v3193
    %v4996 = vpop.f32.mrb[0].mxu0
    %v4997 = vadd.f32 %v4956, %v4996
    %v4998 = vpop.f32.mrb[0].mxu0
    %v4999 = vadd.f32 %v4958, %v4998
    %v5000 = vpop.f32.mrb[0].mxu0
    %v5001 = vpop.f32.mrb[0].mxu0
    %5002 = vdwg.mxu0
    %5003 = vmatprep.subr.bf16.mxu0 %v4376
    %5004 = vmatpush1.bf16.msra.mxu0 %v4375
    %5005 = vmatprep.subr.bf16.mxu0 %v4380
    %5006 = vmatpush1.bf16.msra.mxu0 %v4379
    %5007 = vmatprep.subr.bf16.mxu0 %v4384
    %5008 = vmatpush1.bf16.msra.mxu0 %v4383
    %5009 = vmatprep.subr.bf16.mxu0 %v4388
    %5010 = vmatpush1.bf16.msra.mxu0 %v4387
    %5011 = vmatprep.subr.bf16.mxu0 %v4392
    %5012 = vmatpush1.bf16.msra.mxu0 %v4391
    %5013 = vmatprep.subr.bf16.mxu0 %v4396
    %5014 = vmatpush1.bf16.msra.mxu0 %v4395
    %5015 = vmatprep.subr.bf16.mxu0 %v4400
    %5016 = vmatpush1.bf16.msra.mxu0 %v4399
    %5017 = vmatprep.subr.bf16.mxu0 %v4404
    %5018 = vmatpush1.bf16.msra.mxu0 %v4403
    %5019 = vmatprep.subr.bf16.mxu0 %v4408
    %5020 = vmatpush1.bf16.msra.mxu0 %v4407
    %5021 = vmatprep.subr.bf16.mxu0 %v4412
    %5022 = vmatpush1.bf16.msra.mxu0 %v4411
    %5023 = vmatprep.subr.bf16.mxu0 %v4416
    %5024 = vmatpush1.bf16.msra.mxu0 %v4415
    %5025 = vmatprep.subr.bf16.mxu0 %v4420
    %5026 = vmatpush1.bf16.msra.mxu0 %v4419
    %5027 = vmatprep.subr.bf16.mxu0 %v4424
    %5028 = vmatpush1.bf16.msra.mxu0 %v4423
    %5029 = vmatprep.subr.bf16.mxu0 %v4428
    %5030 = vmatpush1.bf16.msra.mxu0 %v4427
    %5031 = vmatprep.subr.bf16.mxu0 %v4432
    %5032 = vmatpush1.bf16.msra.mxu0 %v4431
    %5033 = vmatprep.subr.bf16.mxu0 %v4436
    %5034 = vmatpush1.bf16.msra.mxu0 %v4435
    %5035 = vmatprep.mubr.bf16.mxu0 %v3196
    %5036 = vmatmul.mubr.bf16.gmra.mrb[0].mxu0 %v3195
    %v5037 = vpop.f32.mrb[0].mxu0
    %v5038 = vadd.f32 %v4997, %v5037
    %v5039 = vpop.f32.mrb[0].mxu0
    %v5040 = vadd.f32 %v4999, %v5039
    %v5041 = vpop.f32.mrb[0].mxu0
    %v5042 = vpop.f32.mrb[0].mxu0
    %5043 = vdwg.mxu0
    %5044 = vmatprep.subr.bf16.mxu0 %v4440
    %5045 = vmatpush1.bf16.msra.mxu0 %v4439
    %5046 = vmatprep.subr.bf16.mxu0 %v4444
    %5047 = vmatpush1.bf16.msra.mxu0 %v4443
    %5048 = vmatprep.subr.bf16.mxu0 %v4448
    %5049 = vmatpush1.bf16.msra.mxu0 %v4447
    %5050 = vmatprep.subr.bf16.mxu0 %v4452
    %5051 = vmatpush1.bf16.msra.mxu0 %v4451
    %5052 = vmatprep.subr.bf16.mxu0 %v4456
    %5053 = vmatpush1.bf16.msra.mxu0 %v4455
    %5054 = vmatprep.subr.bf16.mxu0 %v4460
    %5055 = vmatpush1.bf16.msra.mxu0 %v4459
    %5056 = vmatprep.subr.bf16.mxu0 %v4464
    %5057 = vmatpush1.bf16.msra.mxu0 %v4463
    %5058 = vmatprep.subr.bf16.mxu0 %v4468
    %5059 = vmatpush1.bf16.msra.mxu0 %v4467
    %5060 = vmatprep.subr.bf16.mxu0 %v4472
    %5061 = vmatpush1.bf16.msra.mxu0 %v4471
    %5062 = vmatprep.subr.bf16.mxu0 %v4476
    %5063 = vmatpush1.bf16.msra.mxu0 %v4475
    %5064 = vmatprep.subr.bf16.mxu0 %v4480
    %5065 = vmatpush1.bf16.msra.mxu0 %v4479
    %5066 = vmatprep.subr.bf16.mxu0 %v4484
    %5067 = vmatpush1.bf16.msra.mxu0 %v4483
    %5068 = vmatprep.subr.bf16.mxu0 %v4488
    %5069 = vmatpush1.bf16.msra.mxu0 %v4487
    %5070 = vmatprep.subr.bf16.mxu0 %v4492
    %5071 = vmatpush1.bf16.msra.mxu0 %v4491
    %5072 = vmatprep.subr.bf16.mxu0 %v4496
    %5073 = vmatpush1.bf16.msra.mxu0 %v4495
    %5074 = vmatprep.subr.bf16.mxu0 %v4500
    %5075 = vmatpush1.bf16.msra.mxu0 %v4499
    %5076 = vmatprep.mubr.bf16.mxu0 %v3198
    %5077 = vmatmul.mubr.bf16.gmra.mrb[0].mxu0 %v3197
    %v5078 = vpop.f32.mrb[0].mxu0
    %v5079 = vadd.f32 %v5038, %v5078
    %v5080 = vpop.f32.mrb[0].mxu0
    %v5081 = vadd.f32 %v5040, %v5080
    %v5082 = vpop.f32.mrb[0].mxu0
    %v5083 = vpop.f32.mrb[0].mxu0
    %5084 = vdwg.mxu0
    %v5085 = vmax.f32 %v4915, 0.0
    %v5086 = vmax.f32 %v4917, 0.0
    %v5087 = vmax.f32 %v5079, 0.0
    %v5088 = vmax.f32 %v5081, 0.0
    %v5089 = vpack.c.bf16 %v5085, %v5085
    %v5090 = vpack.c.bf16 %v5086, %v5086
    %v5091 = vpack.c.bf16 %v5087, %v5087
    %v5092 = vpack.c.bf16 %v5088, %v5088
    %v5093 = vld [vmem:[#allocation11] sm:$0xf]
    %v5094 = vld [vmem:[#allocation11 + $0x4] sm:$0xf]
    %v5095 = vld [vmem:[#allocation11 + $0x8] sm:$0xf]
    %v5096 = vld [vmem:[#allocation11 + $0xc] sm:$0xf]
    %v5097 = vld [vmem:[#allocation11 + $0x10] sm:$0xf]
    %v5098 = vld [vmem:[#allocation11 + $0x14] sm:$0xf]
    %v5099 = vld [vmem:[#allocation11 + $0x18] sm:$0xf]
    %v5100 = vld [vmem:[#allocation11 + $0x1c] sm:$0xf]
    %v5101 = vld [vmem:[#allocation11 + $0x20] sm:$0xf]
    %v5102 = vld [vmem:[#allocation11 + $0x24] sm:$0xf]
    %v5103 = vld [vmem:[#allocation11 + $0x28] sm:$0xf]
    %v5104 = vld [vmem:[#allocation11 + $0x2c] sm:$0xf]
    %v5105 = vld [vmem:[#allocation11 + $0x30] sm:$0xf]
    %v5106 = vld [vmem:[#allocation11 + $0x34] sm:$0xf]
    %v5107 = vld [vmem:[#allocation11 + $0x38] sm:$0xf]
    %v5108 = vld [vmem:[#allocation11 + $0x3c] sm:$0xf]
    %v5109 = vld [vmem:[#allocation11 + $0x40] sm:$0xf]
    %v5110 = vld [vmem:[#allocation11 + $0x44] sm:$0xf]
    %v5111 = vld [vmem:[#allocation11 + $0x48] sm:$0xf]
    %v5112 = vld [vmem:[#allocation11 + $0x4c] sm:$0xf]
    %v5113 = vld [vmem:[#allocation11 + $0x50] sm:$0xf]
    %v5114 = vld [vmem:[#allocation11 + $0x54] sm:$0xf]
    %v5115 = vld [vmem:[#allocation11 + $0x58] sm:$0xf]
    %v5116 = vld [vmem:[#allocation11 + $0x5c] sm:$0xf]
    %v5117 = vld [vmem:[#allocation11 + $0x60] sm:$0xf]
    %v5118 = vld [vmem:[#allocation11 + $0x64] sm:$0xf]
    %v5119 = vld [vmem:[#allocation11 + $0x68] sm:$0xf]
    %v5120 = vld [vmem:[#allocation11 + $0x6c] sm:$0xf]
    %v5121 = vld [vmem:[#allocation11 + $0x70] sm:$0xf]
    %v5122 = vld [vmem:[#allocation11 + $0x74] sm:$0xf]
    %v5123 = vld [vmem:[#allocation11 + $0x78] sm:$0xf]
    %v5124 = vld [vmem:[#allocation11 + $0x7c] sm:$0xf]
    %v5125 = vld [vmem:[#allocation11 + $0x80] sm:$0xf]
    %v5126 = vld [vmem:[#allocation11 + $0x84] sm:$0xf]
    %v5127 = vld [vmem:[#allocation11 + $0x88] sm:$0xf]
    %v5128 = vld [vmem:[#allocation11 + $0x8c] sm:$0xf]
    %v5129 = vld [vmem:[#allocation11 + $0x90] sm:$0xf]
    %v5130 = vld [vmem:[#allocation11 + $0x94] sm:$0xf]
    %v5131 = vld [vmem:[#allocation11 + $0x98] sm:$0xf]
    %v5132 = vld [vmem:[#allocation11 + $0x9c] sm:$0xf]
    %v5133 = vld [vmem:[#allocation11 + $0xa0] sm:$0xf]
    %v5134 = vld [vmem:[#allocation11 + $0xa4] sm:$0xf]
    %v5135 = vld [vmem:[#allocation11 + $0xa8] sm:$0xf]
    %v5136 = vld [vmem:[#allocation11 + $0xac] sm:$0xf]
    %v5137 = vld [vmem:[#allocation11 + $0xb0] sm:$0xf]
    %v5138 = vld [vmem:[#allocation11 + $0xb4] sm:$0xf]
    %v5139 = vld [vmem:[#allocation11 + $0xb8] sm:$0xf]
    %v5140 = vld [vmem:[#allocation11 + $0xbc] sm:$0xf]
    %v5141 = vld [vmem:[#allocation11 + $0xc0] sm:$0xf]
    %v5142 = vld [vmem:[#allocation11 + $0xc4] sm:$0xf]
    %v5143 = vld [vmem:[#allocation11 + $0xc8] sm:$0xf]
    %v5144 = vld [vmem:[#allocation11 + $0xcc] sm:$0xf]
    %v5145 = vld [vmem:[#allocation11 + $0xd0] sm:$0xf]
    %v5146 = vld [vmem:[#allocation11 + $0xd4] sm:$0xf]
    %v5147 = vld [vmem:[#allocation11 + $0xd8] sm:$0xf]
    %v5148 = vld [vmem:[#allocation11 + $0xdc] sm:$0xf]
    %v5149 = vld [vmem:[#allocation11 + $0xe0] sm:$0xf]
    %v5150 = vld [vmem:[#allocation11 + $0xe4] sm:$0xf]
    %v5151 = vld [vmem:[#allocation11 + $0xe8] sm:$0xf]
    %v5152 = vld [vmem:[#allocation11 + $0xec] sm:$0xf]
    %v5153 = vld [vmem:[#allocation11 + $0xf0] sm:$0xf]
    %v5154 = vld [vmem:[#allocation11 + $0xf4] sm:$0xf]
    %v5155 = vld [vmem:[#allocation11 + $0xf8] sm:$0xf]
    %v5156 = vld [vmem:[#allocation11 + $0xfc] sm:$0xf]
    %v5157 = vld [vmem:[#allocation13] sm:$0x1]
    %v5159 = vlaneseq
    %v5160 = vshrl.u32 %v5159, 7
    %v5161 = vsub.s32 0, %v5160
    %v5162 = vrot.slane %v5157, %v5161
    %v5228 = vunpack.c.l.b16 %v5093
    %v5229 = vunpack.c.l.b16 %v5094
    %v5230 = vunpack.c.l.b16 %v5095
    %v5231 = vunpack.c.l.b16 %v5096
    %v5232 = vunpack.c.l.b16 %v5097
    %v5233 = vunpack.c.l.b16 %v5098
    %v5234 = vunpack.c.l.b16 %v5099
    %v5235 = vunpack.c.l.b16 %v5100
    %v5236 = vunpack.c.l.b16 %v5101
    %v5237 = vunpack.c.l.b16 %v5102
    %v5238 = vunpack.c.l.b16 %v5103
    %v5239 = vunpack.c.l.b16 %v5104
    %v5240 = vunpack.c.l.b16 %v5105
    %v5241 = vunpack.c.l.b16 %v5106
    %v5242 = vunpack.c.l.b16 %v5107
    %v5243 = vunpack.c.l.b16 %v5108
    %v5244 = vunpack.c.l.b16 %v5109
    %v5245 = vunpack.c.l.b16 %v5110
    %v5246 = vunpack.c.l.b16 %v5111
    %v5247 = vunpack.c.l.b16 %v5112
    %v5248 = vunpack.c.l.b16 %v5113
    %v5249 = vunpack.c.l.b16 %v5114
    %v5250 = vunpack.c.l.b16 %v5115
    %v5251 = vunpack.c.l.b16 %v5116
    %v5252 = vunpack.c.l.b16 %v5117
    %v5253 = vunpack.c.l.b16 %v5118
    %v5254 = vunpack.c.l.b16 %v5119
    %v5255 = vunpack.c.l.b16 %v5120
    %v5256 = vunpack.c.l.b16 %v5121
    %v5257 = vunpack.c.l.b16 %v5122
    %v5258 = vunpack.c.l.b16 %v5123
    %v5259 = vunpack.c.l.b16 %v5124
    %v5260 = vunpack.c.l.b16 %v5125
    %v5261 = vunpack.c.l.b16 %v5126
    %v5262 = vunpack.c.l.b16 %v5127
    %v5263 = vunpack.c.l.b16 %v5128
    %v5264 = vunpack.c.l.b16 %v5129
    %v5265 = vunpack.c.l.b16 %v5130
    %v5266 = vunpack.c.l.b16 %v5131
    %v5267 = vunpack.c.l.b16 %v5132
    %v5268 = vunpack.c.l.b16 %v5133
    %v5269 = vunpack.c.l.b16 %v5134
    %v5270 = vunpack.c.l.b16 %v5135
    %v5271 = vunpack.c.l.b16 %v5136
    %v5272 = vunpack.c.l.b16 %v5137
    %v5273 = vunpack.c.l.b16 %v5138
    %v5274 = vunpack.c.l.b16 %v5139
    %v5275 = vunpack.c.l.b16 %v5140
    %v5276 = vunpack.c.l.b16 %v5141
    %v5277 = vunpack.c.l.b16 %v5142
    %v5278 = vunpack.c.l.b16 %v5143
    %v5279 = vunpack.c.l.b16 %v5144
    %v5280 = vunpack.c.l.b16 %v5145
    %v5281 = vunpack.c.l.b16 %v5146
    %v5282 = vunpack.c.l.b16 %v5147
    %v5283 = vunpack.c.l.b16 %v5148
    %v5284 = vunpack.c.l.b16 %v5149
    %v5285 = vunpack.c.l.b16 %v5150
    %v5286 = vunpack.c.l.b16 %v5151
    %v5287 = vunpack.c.l.b16 %v5152
    %v5288 = vunpack.c.l.b16 %v5153
    %v5289 = vunpack.c.l.b16 %v5154
    %v5290 = vunpack.c.l.b16 %v5155
    %v5291 = vunpack.c.l.b16 %v5156
    %v5292 = vpack.c.b16 %v5229, %v5228
    %v5293 = vpack.c.b16 %v5231, %v5230
    %v5294 = vpack.c.b16 %v5233, %v5232
    %v5295 = vpack.c.b16 %v5235, %v5234
    %v5296 = vpack.c.b16 %v5237, %v5236
    %v5297 = vpack.c.b16 %v5239, %v5238
    %v5298 = vpack.c.b16 %v5241, %v5240
    %v5299 = vpack.c.b16 %v5243, %v5242
    %v5300 = vpack.c.b16 %v5245, %v5244
    %v5301 = vpack.c.b16 %v5247, %v5246
    %v5302 = vpack.c.b16 %v5249, %v5248
    %v5303 = vpack.c.b16 %v5251, %v5250
    %v5304 = vpack.c.b16 %v5253, %v5252
    %v5305 = vpack.c.b16 %v5255, %v5254
    %v5306 = vpack.c.b16 %v5257, %v5256
    %v5307 = vpack.c.b16 %v5259, %v5258
    %v5308 = vpack.c.b16 %v5261, %v5260
    %v5309 = vpack.c.b16 %v5263, %v5262
    %v5310 = vpack.c.b16 %v5265, %v5264
    %v5311 = vpack.c.b16 %v5267, %v5266
    %v5312 = vpack.c.b16 %v5269, %v5268
    %v5313 = vpack.c.b16 %v5271, %v5270
    %v5314 = vpack.c.b16 %v5273, %v5272
    %v5315 = vpack.c.b16 %v5275, %v5274
    %v5316 = vpack.c.b16 %v5277, %v5276
    %v5317 = vpack.c.b16 %v5279, %v5278
    %v5318 = vpack.c.b16 %v5281, %v5280
    %v5319 = vpack.c.b16 %v5283, %v5282
    %v5320 = vpack.c.b16 %v5285, %v5284
    %v5321 = vpack.c.b16 %v5287, %v5286
    %v5322 = vpack.c.b16 %v5289, %v5288
    %v5323 = vpack.c.b16 %v5291, %v5290
    %5356 = vmatprep.subr.bf16.mxu0 0
    %5357 = vmatpush1.bf16.msra.mxu0 %v5292
    %5358 = vmatprep.subr.bf16.mxu0 0
    %5359 = vmatpush1.bf16.msra.mxu0 %v5293
    %5360 = vmatprep.subr.bf16.mxu0 0
    %5361 = vmatpush1.bf16.msra.mxu0 %v5294
    %5362 = vmatprep.subr.bf16.mxu0 0
    %5363 = vmatpush1.bf16.msra.mxu0 %v5295
    %5364 = vmatprep.subr.bf16.mxu0 0
    %5365 = vmatpush1.bf16.msra.mxu0 %v5296
    %5366 = vmatprep.subr.bf16.mxu0 0
    %5367 = vmatpush1.bf16.msra.mxu0 %v5297
    %5368 = vmatprep.subr.bf16.mxu0 0
    %5369 = vmatpush1.bf16.msra.mxu0 %v5298
    %5370 = vmatprep.subr.bf16.mxu0 0
    %5371 = vmatpush1.bf16.msra.mxu0 %v5299
    %5372 = vmatprep.subr.bf16.mxu0 0
    %5373 = vmatpush1.bf16.msra.mxu0 %v5300
    %5374 = vmatprep.subr.bf16.mxu0 0
    %5375 = vmatpush1.bf16.msra.mxu0 %v5301
    %5376 = vmatprep.subr.bf16.mxu0 0
    %5377 = vmatpush1.bf16.msra.mxu0 %v5302
    %5378 = vmatprep.subr.bf16.mxu0 0
    %5379 = vmatpush1.bf16.msra.mxu0 %v5303
    %5380 = vmatprep.subr.bf16.mxu0 0
    %5381 = vmatpush1.bf16.msra.mxu0 %v5304
    %5382 = vmatprep.subr.bf16.mxu0 0
    %5383 = vmatpush1.bf16.msra.mxu0 %v5305
    %5384 = vmatprep.subr.bf16.mxu0 0
    %5385 = vmatpush1.bf16.msra.mxu0 %v5306
    %5386 = vmatprep.subr.bf16.mxu0 0
    %5387 = vmatpush1.bf16.msra.mxu0 %v5307
    %5388 = vmatprep.mubr.bf16.mxu0 %v5090
    %5389 = vmatmul.mubr.bf16.gmra.mrb[0].mxu0 %v5089
    %v5390 = vpop.f32.mrb[0].mxu0
    %v5391 = vadd.f32 %v5162, %v5390
    %v5392 = vpop.f32.mrb[0].mxu0
    %v5393 = vpop.f32.mrb[0].mxu0
    %v5394 = vpop.f32.mrb[0].mxu0
    %5395 = vdwg.mxu0
    %5396 = vmatprep.subr.bf16.mxu0 0
    %5397 = vmatpush1.bf16.msra.mxu0 %v5308
    %5398 = vmatprep.subr.bf16.mxu0 0
    %5399 = vmatpush1.bf16.msra.mxu0 %v5309
    %5400 = vmatprep.subr.bf16.mxu0 0
    %5401 = vmatpush1.bf16.msra.mxu0 %v5310
    %5402 = vmatprep.subr.bf16.mxu0 0
    %5403 = vmatpush1.bf16.msra.mxu0 %v5311
    %5404 = vmatprep.subr.bf16.mxu0 0
    %5405 = vmatpush1.bf16.msra.mxu0 %v5312
    %5406 = vmatprep.subr.bf16.mxu0 0
    %5407 = vmatpush1.bf16.msra.mxu0 %v5313
    %5408 = vmatprep.subr.bf16.mxu0 0
    %5409 = vmatpush1.bf16.msra.mxu0 %v5314
    %5410 = vmatprep.subr.bf16.mxu0 0
    %5411 = vmatpush1.bf16.msra.mxu0 %v5315
    %5412 = vmatprep.subr.bf16.mxu0 0
    %5413 = vmatpush1.bf16.msra.mxu0 %v5316
    %5414 = vmatprep.subr.bf16.mxu0 0
    %5415 = vmatpush1.bf16.msra.mxu0 %v5317
    %5416 = vmatprep.subr.bf16.mxu0 0
    %5417 = vmatpush1.bf16.msra.mxu0 %v5318
    %5418 = vmatprep.subr.bf16.mxu0 0
    %5419 = vmatpush1.bf16.msra.mxu0 %v5319
    %5420 = vmatprep.subr.bf16.mxu0 0
    %5421 = vmatpush1.bf16.msra.mxu0 %v5320
    %5422 = vmatprep.subr.bf16.mxu0 0
    %5423 = vmatpush1.bf16.msra.mxu0 %v5321
    %5424 = vmatprep.subr.bf16.mxu0 0
    %5425 = vmatpush1.bf16.msra.mxu0 %v5322
    %5426 = vmatprep.subr.bf16.mxu0 0
    %5427 = vmatpush1.bf16.msra.mxu0 %v5323
    %5428 = vmatprep.mubr.bf16.mxu0 %v5092
    %5429 = vmatmul.mubr.bf16.gmra.mrb[0].mxu0 %v5091
    %v5430 = vpop.f32.mrb[0].mxu0
    %v5431 = vadd.f32 %v5391, %v5430
    %v5432 = vpop.f32.mrb[0].mxu0
    %v5433 = vpop.f32.mrb[0].mxu0
    %v5434 = vpop.f32.mrb[0].mxu0
    %5435 = vdwg.mxu0
    %5436 = vst [vmem:[#allocation14] sm:$0xff] %v5431
    // Predicated region
    $region58: #{tpu_custom_call.1} parent=1 // pred_check
      _
    $region59: #{tpu_custom_call.1} parent=1 // pred_check_branch
      %5438 = sbr.rel (0) target = $region61
    $region60: #{tpu_custom_call.1} parent=1 // pred_region
      %s5440 = ssub.s32 128, 128
      %5441 = vsyncadd [#allocation4], %s5440
      %s5443 = sshll.u32 [#allocation14], 4
      %s5444 = int_to_ptr.vmem [resolvable:$true] %s5443
      %5446 = dma.vmem_to_hbm [thread:$0]  %s5444, 128, %s7, [#allocation4]
    $region61: #{tpu_custom_call.1} parent=1 // pred_fallthru
      _
    // Predicated region
    $region62: #{tpu_custom_call.1} parent=1 // pred_check
      _
    $region63: #{tpu_custom_call.1} parent=1 // pred_check_branch
      %5448 = sbr.rel (0) target = $region65
    $region64: #{tpu_custom_call.1} parent=1 // pred_region
      %5449 = dma.done [#allocation4], 128
    $region65: #{tpu_custom_call.1} parent=1 // pred_fallthru
      _
    %5450 = vsyncpa [#allocation3], 1
    %5451 = vsyncpa [#allocation6], 1
    %5452 = vsyncpa [#allocation9], 1
    %5453 = vsyncpa [#allocation12], 1
    %5454 = vsyncpa [#allocation4], 1

</llo_original>
